<compile_context>
chip_gen: v7x
topology: tpu7x:2x2x1
jax: 0.10.0
libtpu: 0.0.40
codegen_flags: <defaults>
</compile_context>

<pallas_src>
import math

import jax
import jax.numpy as jnp
from jax import lax
from jax.experimental import pallas as pl
from jax.experimental.pallas import tpu as pltpu


def _vmem_capacity_bytes():
    """Physical VMEM of the local chip (fallback: 128 MiB, the v5e/v6e value)."""
    try:
        return int(pltpu.get_tpu_info().vmem_capacity_bytes)
    except Exception:
        return 128 * 1024 * 1024


def _pick_tq(t1, vmem_cap):
    """time1 tile: full T1 for small sequences, else a generation-aware tile.

    128-MiB-VMEM parts (v5e/v6e) prefer bigger tiles to amortize the ~0.35 us
    per-grid-step overhead; 64-MiB parts (v7x) stay at 128."""
    if t1 <= 128:
        return t1
    prefs = (256, 128, 64, 32, 16, 8) if vmem_cap >= (100 << 20) else (128, 64, 32, 16, 8)
    for tq in prefs:
        if t1 % tq == 0:
            return tq
    # TODO(synk): ragged T1 (no nice divisor) falls back to a single giant tile.
    return t1


def _vmem_limit_bytes(TQ, T2, F, Tm_blk, use_mask, single_buffer, cap):
    """Estimate the kernel's VMEM need and derive a safe scoped-VMEM limit."""
    bf, f32 = 2, 4
    dyn = 1 if single_buffer else 2
    req = 0
    req += 2 * TQ * F * bf            # query tile (double-buffered)
    req += 2 * TQ * F * bf            # out tile (double-buffered)
    req += 2 * dyn * T2 * F * bf      # key + value inputs
    req += 2 * dyn * T2 * F * bf      # K/V cache output slabs
    req += 4 * dyn * F * F * bf       # four weight matrices
    req += 4 * dyn * F * f32          # four biases
    if use_mask:
        req += 2 * 2 * Tm_blk * T2 * f32
    req += TQ * F * bf                # bf16 head-output scratch
    # compiler-managed temporaries: q_proj f32, k/v projections at t==0,
    # per-head (TQ, T2) f32 scores / exp / attn.
    req += TQ * F * f32 + 2 * T2 * F * f32 + 4 * TQ * T2 * f32
    limit = max(2 * req, 32 * 1024 * 1024)
    return int(min(limit, int(0.9 * cap)))


def _make_mha_kernel(n_head, d_k, use_mask):
    scale = 1.0 / math.sqrt(d_k)

    def kernel(*refs):
        if use_mask:
            (q_ref, k_ref, v_ref, bias_ref, keep_ref,
             wq_ref, bq_ref, wk_ref, bk_ref, wv_ref, bv_ref,
             wo_ref, bo_ref, out_ref, kc_ref, vc_ref, x_sc) = refs
        else:
            (q_ref, k_ref, v_ref,
             wq_ref, bq_ref, wk_ref, bk_ref, wv_ref, bv_ref,
             wo_ref, bo_ref, out_ref, kc_ref, vc_ref, x_sc) = refs

        t = pl.program_id(1)

        # ---- K/V projections: once per batch element (t == 0).  Written straight
        # into the lane-dense cache output blocks.  Their out_specs return the same
        # block index for every t, so the blocks stay resident in VMEM across the
        # whole time1 sweep and double as the K/V slabs for the head loop.
        @pl.when(t == 0)
        def _():
            k_proj = jnp.dot(k_ref[0], wk_ref[...],
                             preferred_element_type=jnp.float32) + bk_ref[0]
            v_proj = jnp.dot(v_ref[0], wv_ref[...],
                             preferred_element_type=jnp.float32) + bv_ref[0]
            kc_ref[0] = k_proj.astype(kc_ref.dtype)
            vc_ref[0] = v_proj.astype(vc_ref.dtype)

        # ---- Q projection for this time1 tile (bf16 MXU path, f32 accumulation);
        # fold 1/sqrt(d_k) once before the bf16 cast.
        q_proj = jnp.dot(q_ref[0], wq_ref[...],
                         preferred_element_type=jnp.float32) + bq_ref[0]
        q_bf = (q_proj * scale).astype(jnp.bfloat16)

        if use_mask:
            # Precomputed once in the wrapper (hoisted out of the per-tile path):
            # additive -1e30 bias and multiplicative keep mask.
            bias = bias_ref[0]     # (Tm_blk, T2) f32
            keep = keep_ref[0]     # (Tm_blk, T2) f32

        # Static loop over heads (n_head is small).
        # TODO(synk): per-head lane slices are misaligned when d_k is an odd
        #             multiple of 64; a head-major / padded-d_k layout would remove
        #             the resulting relayouts at the cost of extra MXU work.
        for h in range(n_head):
            sl = slice(h * d_k, (h + 1) * d_k)
            qh = q_bf[:, sl]                       # (TQ, d_k) bf16
            kh = kc_ref[0, :, sl]                  # (T2, d_k) bf16 (resident output block)
            vh = vc_ref[0, :, sl]                  # (T2, d_k) bf16

            # Contract the last dims directly -- no materialized kh.T (saves XLU work).
            scores = lax.dot_general(qh, kh, (((1,), (1,)), ((), ())),
                                     preferred_element_type=jnp.float32)  # (TQ, T2)
            if use_mask:
                scores = scores + bias

            m = jnp.max(scores, axis=-1, keepdims=True)
            e = jnp.exp(scores - m)
            # approx reciprocal runs on the EUP slot; ~1e-2 rel error, swap to
            # approx=False for accuracy-sensitive deployments.
            inv = pl.reciprocal(jnp.sum(e, axis=-1, keepdims=True), approx=True)
            attn = e * inv
            if use_mask:
                attn = attn * keep                 # matches masked_fill(0.0)

            # Store straight into the bf16 pre-shaped scratch: no concat/stack,
            # no later full-slab cast before the Wo matmul.
            x_sc[:, sl] = jnp.dot(attn.astype(jnp.bfloat16), vh,
                                  preferred_element_type=jnp.float32).astype(x_sc.dtype)

        out = jnp.dot(x_sc[...], wo_ref[...],
                      preferred_element_type=jnp.float32) + bo_ref[0]
        out_ref[0] = out.astype(out_ref.dtype)

    return kernel


def multi_headed_attention(query, key, value, params, mask=None, *, n_head):
    """Fused MHA forward (empty-cache path).  Returns (out, new_cache)."""
    B, T1, F = query.shape
    T2 = key.shape[1]
    assert F % n_head == 0
    d_k = F // n_head

    cdt = jnp.bfloat16           # compute / activation / weight dtype (f32 accumulation)
    vmem_cap = _vmem_capacity_bytes()
    TQ = _pick_tq(T1, vmem_cap)
    assert T1 % TQ == 0
    nt = T1 // TQ

    use_mask = (mask is not None) and (mask.shape[-1] > 0)
    mask_const_t = False
    Tm_blk = 1
    if use_mask:
        Tm = mask.shape[1]
        assert Tm in (1, T1), "mask must be (B,1,T2) or (B,T1,T2)"
        # Hoisted out of the kernel's per-tile path: additive bias + keep mask.
        mask_bias = jnp.where(mask == 0, -1e30, 0.0).astype(jnp.float32)
        mask_keep = jnp.where(mask == 0, 0.0, 1.0).astype(jnp.float32)
        if Tm == 1:
            Tm_blk, mask_map, mask_const_t = 1, (lambda b, t: (b, 0, 0)), True
        else:
            Tm_blk, mask_map, mask_const_t = TQ, (lambda b, t: (b, t, 0)), False

    kernel = _make_mha_kernel(n_head, d_k, use_mask)

    out_shapes = (
        jax.ShapeDtypeStruct((B, T1, F), cdt),     # attention output
        jax.ShapeDtypeStruct((B, T2, F), cdt),     # projected K (lane-dense cache slab)
        jax.ShapeDtypeStruct((B, T2, F), cdt),     # projected V (lane-dense cache slab)
    )

    args = [query.astype(cdt), key.astype(cdt), value.astype(cdt)]
    if use_mask:
        args += [mask_bias, mask_keep]
    args += [
        params["wq_t"].astype(cdt), params["bq"].astype(jnp.float32),
        params["wk_t"].astype(cdt), params["bk"].astype(jnp.float32),
        params["wv_t"].astype(cdt), params["bv"].astype(jnp.float32),
        params["wo_t"].astype(cdt), params["bo"].astype(jnp.float32),
    ]

    def _call(single_buffer):
        # Single-buffer every block whose index map never changes over the inner
        # (time1) axis: weights, biases, key/value inputs, K/V cache outputs, and
        # the mask when it is (B,1,T2).  Default double-buffering of these blocks
        # is pure VMEM waste (O(T2*F + F*F) bytes).
        sb = {"pipeline_mode": pl.Buffered(1)} if single_buffer else {}
        msb = sb if (use_mask and mask_const_t) else {}

        in_specs = [
            pl.BlockSpec((1, TQ, F), lambda b, t: (b, t, 0)),          # query tile
            pl.BlockSpec((1, T2, F), lambda b, t: (b, 0, 0), **sb),    # key   (resident over t)
            pl.BlockSpec((1, T2, F), lambda b, t: (b, 0, 0), **sb),    # value (resident over t)
        ]
        if use_mask:
            in_specs += [
                pl.BlockSpec((1, Tm_blk, T2), mask_map, **msb),        # additive mask bias (f32)
                pl.BlockSpec((1, Tm_blk, T2), mask_map, **msb),        # keep mask (f32)
            ]
        for _ in range(4):   # (Wq,bq), (Wk,bk), (Wv,bv), (Wo,bo)
            in_specs += [
                pl.BlockSpec((F, F), lambda b, t: (0, 0), **sb),       # W^T (bf16)
                pl.BlockSpec((1, F), lambda b, t: (0, 0), **sb),       # bias (f32)
            ]

        out_specs = [
            pl.BlockSpec((1, TQ, F), lambda b, t: (b, t, 0)),          # out tile
            pl.BlockSpec((1, T2, F), lambda b, t: (b, 0, 0), **sb),    # K cache slab
            pl.BlockSpec((1, T2, F), lambda b, t: (b, 0, 0), **sb),    # V cache slab
        ]

        grid_spec = pltpu.PrefetchScalarGridSpec(
            num_scalar_prefetch=0,
            grid=(B, nt),
            in_specs=in_specs,
            out_specs=out_specs,
            scratch_shapes=[pltpu.VMEM((TQ, F), cdt)],    # bf16 head-output slab
        )

        compiler_params = pltpu.CompilerParams(
            # batch axis parallel (megacore); time1 arbitrary so the K/V cache
            # blocks written at t==0 stay resident/valid across the t sweep.
            # TODO(synk): B==1 decode on v7x leaves one TensorCore idle; a 2-way
            #             time1 split with per-half K/V recompute would fix that.
            # TODO(synk): very long T2 on v7x would want a T2-tiled online-softmax
            #             (flash-style) inner loop instead of resident K/V slabs.
            dimension_semantics=("parallel", "arbitrary"),
            vmem_limit_bytes=_vmem_limit_bytes(TQ, T2, F, Tm_blk, use_mask,
                                               single_buffer, vmem_cap),
        )

        return pl.pallas_call(
            kernel,
            out_shape=out_shapes,
            grid_spec=grid_spec,
            compiler_params=compiler_params,
        )(*args)

    try:
        out, kc, vc = _call(True)
    except Exception:
        # Fallback in case this JAX build rejects pl.Buffered(1) single-buffering.
        out, kc, vc = _call(False)

    # Head split / interleave of the cache outside the kernel (free layout plumbing).
    kc = kc.reshape(B, T2, n_head, d_k).transpose(0, 2, 1, 3)
    vc = vc.reshape(B, T2, n_head, d_k).transpose(0, 2, 1, 3)
    new_cache = jnp.concatenate([kc, vc], axis=-1).astype(query.dtype)
    # Restore the module's dtype contract (compute stays bf16 internally).
    return out.astype(query.dtype), new_cache


def _reference(query, key, value, params, mask, n_head):
    """Pure-JAX f32 mirror of the PyTorch forward (empty cache, eval mode)."""
    B, T1, F = query.shape
    T2 = key.shape[1]
    d_k = F // n_head

    def lin(x, wt, b):
        return x @ wt + b[0]

    q = lin(query, params["wq_t"], params["bq"]).reshape(B, T1, n_head, d_k).transpose(0, 2, 1, 3)
    k = lin(key, params["wk_t"], params["bk"]).reshape(B, T2, n_head, d_k).transpose(0, 2, 1, 3)
    v = lin(value, params["wv_t"], params["bv"]).reshape(B, T2, n_head, d_k).transpose(0, 2, 1, 3)

    scores = jnp.einsum("bhqd,bhkd->bhqk", q, k) / math.sqrt(d_k)
    if mask is not None and mask.shape[-1] > 0:
        m = (mask == 0)[:, None, :, :]
        scores = jnp.where(m, -jnp.inf, scores)
        attn = jax.nn.softmax(scores, axis=-1)
        attn = jnp.where(m, 0.0, attn)
    else:
        attn = jax.nn.softmax(scores, axis=-1)
    x = jnp.einsum("bhqk,bhkd->bhqd", attn, v).transpose(0, 2, 1, 3).reshape(B, T1, F)
    out = lin(x, params["wo_t"], params["bo"])
    new_cache = jnp.concatenate([k, v], axis=-1)
    return out, new_cache


def _init_params(key, n_feat):
    keys = jax.random.split(key, 8)
    s = 1.0 / math.sqrt(n_feat)
    return {
        "wq_t": jax.random.normal(keys[0], (n_feat, n_feat), jnp.float32) * s,
        "bq":   jax.random.normal(keys[1], (1, n_feat), jnp.float32) * s,
        "wk_t": jax.random.normal(keys[2], (n_feat, n_feat), jnp.float32) * s,
        "bk":   jax.random.normal(keys[3], (1, n_feat), jnp.float32) * s,
        "wv_t": jax.random.normal(keys[4], (n_feat, n_feat), jnp.float32) * s,
        "bv":   jax.random.normal(keys[5], (1, n_feat), jnp.float32) * s,
        "wo_t": jax.random.normal(keys[6], (n_feat, n_feat), jnp.float32) * s,
        "bo":   jax.random.normal(keys[7], (1, n_feat), jnp.float32) * s,
    }


if __name__ == "__main__":
    B, T1, T2 = 2, 8, 8
    n_head, n_feat = 4, 32
    d_k = n_feat // n_head

    root = jax.random.PRNGKey(0)
    k_p, k_q, k_k, k_v = jax.random.split(root, 4)
    params = _init_params(k_p, n_feat)

    query = jax.random.normal(k_q, (B, T1, n_feat), jnp.float32)
    key_ = jax.random.normal(k_k, (B, T2, n_feat), jnp.float32)
    value = jax.random.normal(k_v, (B, T2, n_feat), jnp.float32)

    # padding mask (B, 1, T2): batch 1 has its last 3 key positions masked out
    mask = jnp.ones((B, 1, T2), dtype=jnp.int32)
    mask = mask.at[1, 0, -3:].set(0)

    # Masked path
    out, new_cache = multi_headed_attention(query, key_, value, params, mask, n_head=n_head)
    out = jax.block_until_ready(out)
    new_cache = jax.block_until_ready(new_cache)

    ref_out, ref_cache = _reference(query, key_, value, params, mask, n_head)
    assert out.shape == (B, T1, n_feat)
    assert new_cache.shape == (B, n_head, T2, 2 * d_k)
    # bf16 compute + approx reciprocal -> compare to the f32 reference loosely.
    assert jnp.allclose(out.astype(jnp.float32), ref_out, atol=5e-2, rtol=5e-2)
    assert jnp.allclose(new_cache.astype(jnp.float32), ref_cache, atol=5e-2, rtol=5e-2)

    # Unmasked (fake-mask) path
    out2, cache2 = multi_headed_attention(query, key_, value, params, None, n_head=n_head)
    out2 = jax.block_until_ready(out2)
    ref_out2, ref_cache2 = _reference(query, key_, value, params, None, n_head)
    assert jnp.allclose(out2.astype(jnp.float32), ref_out2, atol=5e-2, rtol=5e-2)
    assert jnp.allclose(cache2.astype(jnp.float32), ref_cache2, atol=5e-2, rtol=5e-2)

    print("KERNEL_OK")
</pallas_src>

<mosaic_0001>
module attributes {stable_mosaic.version = 11 : i64} {
  func.func @kernel(%arg0: i32, %arg1: i32, %arg2: memref<1x8x32xbf16, #tpu.memory_space<vmem>>, %arg3: memref<1x8x32xbf16, #tpu.memory_space<vmem>>, %arg4: memref<1x8x32xbf16, #tpu.memory_space<vmem>>, %arg5: memref<1x1x8xf32, #tpu.memory_space<vmem>>, %arg6: memref<1x1x8xf32, #tpu.memory_space<vmem>>, %arg7: memref<32x32xbf16, #tpu.memory_space<vmem>>, %arg8: memref<1x32xf32, #tpu.memory_space<vmem>>, %arg9: memref<32x32xbf16, #tpu.memory_space<vmem>>, %arg10: memref<1x32xf32, #tpu.memory_space<vmem>>, %arg11: memref<32x32xbf16, #tpu.memory_space<vmem>>, %arg12: memref<1x32xf32, #tpu.memory_space<vmem>>, %arg13: memref<32x32xbf16, #tpu.memory_space<vmem>>, %arg14: memref<1x32xf32, #tpu.memory_space<vmem>>, %arg15: memref<1x8x32xbf16, #tpu.memory_space<vmem>>, %arg16: memref<1x8x32xbf16, #tpu.memory_space<vmem>>, %arg17: memref<1x8x32xbf16, #tpu.memory_space<vmem>>, %arg18: memref<8x32xbf16, #tpu.memory_space<vmem>>) attributes {dimension_semantics = [#tpu.dimension_semantics<parallel>, #tpu.dimension_semantics<arbitrary>], iteration_bounds = array<i64: 2, 1>, scalar_prefetch = 0 : i64, scratch_operands = 1 : i64, tpu.core_type = #tpu.core_type<tc>, window_params = [{transform_indices = @transform_0, window_bounds = array<i64: 1, 8, 32>}, {pipeline_mode = #tpu.pipeline_mode<synchronous>, transform_indices = @transform_1, window_bounds = array<i64: 1, 8, 32>}, {pipeline_mode = #tpu.pipeline_mode<synchronous>, transform_indices = @transform_2, window_bounds = array<i64: 1, 8, 32>}, {pipeline_mode = #tpu.pipeline_mode<synchronous>, transform_indices = @transform_3, window_bounds = array<i64: 1, 1, 8>}, {pipeline_mode = #tpu.pipeline_mode<synchronous>, transform_indices = @transform_4, window_bounds = array<i64: 1, 1, 8>}, {pipeline_mode = #tpu.pipeline_mode<synchronous>, transform_indices = @transform_5, window_bounds = array<i64: 32, 32>}, {pipeline_mode = #tpu.pipeline_mode<synchronous>, transform_indices = @transform_6, window_bounds = array<i64: 1, 32>}, {pipeline_mode = #tpu.pipeline_mode<synchronous>, transform_indices = @transform_7, window_bounds = array<i64: 32, 32>}, {pipeline_mode = #tpu.pipeline_mode<synchronous>, transform_indices = @transform_8, window_bounds = array<i64: 1, 32>}, {pipeline_mode = #tpu.pipeline_mode<synchronous>, transform_indices = @transform_9, window_bounds = array<i64: 32, 32>}, {pipeline_mode = #tpu.pipeline_mode<synchronous>, transform_indices = @transform_10, window_bounds = array<i64: 1, 32>}, {pipeline_mode = #tpu.pipeline_mode<synchronous>, transform_indices = @transform_11, window_bounds = array<i64: 32, 32>}, {pipeline_mode = #tpu.pipeline_mode<synchronous>, transform_indices = @transform_12, window_bounds = array<i64: 1, 32>}, {transform_indices = @transform_13, window_bounds = array<i64: 1, 8, 32>}, {pipeline_mode = #tpu.pipeline_mode<synchronous>, transform_indices = @transform_14, window_bounds = array<i64: 1, 8, 32>}, {pipeline_mode = #tpu.pipeline_mode<synchronous>, transform_indices = @transform_15, window_bounds = array<i64: 1, 8, 32>}]} {
    %c0_i32 = arith.constant 0 : i32
    %0 = arith.cmpi eq, %arg1, %c0_i32 : i32
    %1 = arith.extui %0 : i1 to i32
    %c0_i32_0 = arith.constant 0 : i32
    %2 = arith.cmpi ne, %1, %c0_i32_0 : i32
    scf.if %2 {
      %c0_69 = arith.constant 0 : index
      %c0_70 = arith.constant 0 : index
      %c0_71 = arith.constant 0 : index
      %127 = vector.load %arg3[%c0_69, %c0_70, %c0_71] : memref<1x8x32xbf16, #tpu.memory_space<vmem>>, vector<1x8x32xbf16>
      %128 = vector.shape_cast %127 : vector<1x8x32xbf16> to vector<8x32xbf16>
      %c0_72 = arith.constant 0 : index
      %c0_73 = arith.constant 0 : index
      %129 = vector.load %arg9[%c0_72, %c0_73] : memref<32x32xbf16, #tpu.memory_space<vmem>>, vector<32x32xbf16>
      %cst_74 = arith.constant dense<0.000000e+00> : vector<8x32xf32>
      %130 = tpu.matmul %128, %129, %cst_74 {dimension_numbers = #tpu.dot_dimension_numbers<[1], [0], [0], [1], [0, 0, 1, 1], [], []>} : vector<8x32xbf16>, vector<32x32xbf16>, vector<8x32xf32> -> vector<8x32xf32>
      %c0_75 = arith.constant 0 : index
      %c0_76 = arith.constant 0 : index
      %131 = vector.load %arg10[%c0_75, %c0_76] : memref<1x32xf32, #tpu.memory_space<vmem>>, vector<1x32xf32>
      %132 = vector.shape_cast %131 : vector<1x32xf32> to vector<32xf32>
      %133 = vector.shape_cast %132 : vector<32xf32> to vector<1x32xf32>
      %134 = vector.broadcast %133 : vector<1x32xf32> to vector<8x32xf32>
      %135 = arith.addf %130, %134 : vector<8x32xf32>
      %c0_77 = arith.constant 0 : index
      %c0_78 = arith.constant 0 : index
      %c0_79 = arith.constant 0 : index
      %136 = vector.load %arg4[%c0_77, %c0_78, %c0_79] : memref<1x8x32xbf16, #tpu.memory_space<vmem>>, vector<1x8x32xbf16>
      %137 = vector.shape_cast %136 : vector<1x8x32xbf16> to vector<8x32xbf16>
      %c0_80 = arith.constant 0 : index
      %c0_81 = arith.constant 0 : index
      %138 = vector.load %arg11[%c0_80, %c0_81] : memref<32x32xbf16, #tpu.memory_space<vmem>>, vector<32x32xbf16>
      %cst_82 = arith.constant dense<0.000000e+00> : vector<8x32xf32>
      %139 = tpu.matmul %137, %138, %cst_82 {dimension_numbers = #tpu.dot_dimension_numbers<[1], [0], [0], [1], [0, 0, 1, 1], [], []>} : vector<8x32xbf16>, vector<32x32xbf16>, vector<8x32xf32> -> vector<8x32xf32>
      %c0_83 = arith.constant 0 : index
      %c0_84 = arith.constant 0 : index
      %140 = vector.load %arg12[%c0_83, %c0_84] : memref<1x32xf32, #tpu.memory_space<vmem>>, vector<1x32xf32>
      %141 = vector.shape_cast %140 : vector<1x32xf32> to vector<32xf32>
      %142 = vector.shape_cast %141 : vector<32xf32> to vector<1x32xf32>
      %143 = vector.broadcast %142 : vector<1x32xf32> to vector<8x32xf32>
      %144 = arith.addf %139, %143 : vector<8x32xf32>
      %145 = arith.truncf %135 : vector<8x32xf32> to vector<8x32xbf16>
      %c0_85 = arith.constant 0 : index
      %c0_86 = arith.constant 0 : index
      %c0_87 = arith.constant 0 : index
      %146 = vector.load %arg16[%c0_85, %c0_86, %c0_87] : memref<1x8x32xbf16, #tpu.memory_space<vmem>>, vector<1x8x32xbf16>
      %147 = vector.shape_cast %146 : vector<1x8x32xbf16> to vector<8x32xbf16>
      %148 = vector.shape_cast %145 : vector<8x32xbf16> to vector<1x8x32xbf16>
      tpu.vector_store %arg16[%c0_85, %c0_86, %c0_87], %148 {strides = array<i32>} : memref<1x8x32xbf16, #tpu.memory_space<vmem>>, vector<1x8x32xbf16>,
      %149 = arith.truncf %144 : vector<8x32xf32> to vector<8x32xbf16>
      %c0_88 = arith.constant 0 : index
      %c0_89 = arith.constant 0 : index
      %c0_90 = arith.constant 0 : index
      %150 = vector.load %arg17[%c0_88, %c0_89, %c0_90] : memref<1x8x32xbf16, #tpu.memory_space<vmem>>, vector<1x8x32xbf16>
      %151 = vector.shape_cast %150 : vector<1x8x32xbf16> to vector<8x32xbf16>
      %152 = vector.shape_cast %149 : vector<8x32xbf16> to vector<1x8x32xbf16>
      tpu.vector_store %arg17[%c0_88, %c0_89, %c0_90], %152 {strides = array<i32>} : memref<1x8x32xbf16, #tpu.memory_space<vmem>>, vector<1x8x32xbf16>,
    } else {
    }
    %c0 = arith.constant 0 : index
    %c0_1 = arith.constant 0 : index
    %c0_2 = arith.constant 0 : index
    %3 = vector.load %arg2[%c0, %c0_1, %c0_2] : memref<1x8x32xbf16, #tpu.memory_space<vmem>>, vector<1x8x32xbf16>
    %4 = vector.shape_cast %3 : vector<1x8x32xbf16> to vector<8x32xbf16>
    %c0_3 = arith.constant 0 : index
    %c0_4 = arith.constant 0 : index
    %5 = vector.load %arg7[%c0_3, %c0_4] : memref<32x32xbf16, #tpu.memory_space<vmem>>, vector<32x32xbf16>
    %cst = arith.constant dense<0.000000e+00> : vector<8x32xf32>
    %6 = tpu.matmul %4, %5, %cst {dimension_numbers = #tpu.dot_dimension_numbers<[1], [0], [0], [1], [0, 0, 1, 1], [], []>} : vector<8x32xbf16>, vector<32x32xbf16>, vector<8x32xf32> -> vector<8x32xf32>
    %c0_5 = arith.constant 0 : index
    %c0_6 = arith.constant 0 : index
    %7 = vector.load %arg8[%c0_5, %c0_6] : memref<1x32xf32, #tpu.memory_space<vmem>>, vector<1x32xf32>
    %8 = vector.shape_cast %7 : vector<1x32xf32> to vector<32xf32>
    %9 = vector.shape_cast %8 : vector<32xf32> to vector<1x32xf32>
    %10 = vector.broadcast %9 : vector<1x32xf32> to vector<8x32xf32>
    %11 = arith.addf %6, %10 : vector<8x32xf32>
    %cst_7 = arith.constant 0.353553385 : f32
    %12 = vector.broadcast %cst_7 : f32 to vector<8x32xf32>
    %13 = arith.mulf %11, %12 : vector<8x32xf32>
    %14 = arith.truncf %13 : vector<8x32xf32> to vector<8x32xbf16>
    %c0_8 = arith.constant 0 : index
    %c0_9 = arith.constant 0 : index
    %c0_10 = arith.constant 0 : index
    %15 = vector.load %arg5[%c0_8, %c0_9, %c0_10] : memref<1x1x8xf32, #tpu.memory_space<vmem>>, vector<1x1x8xf32>
    %16 = vector.shape_cast %15 : vector<1x1x8xf32> to vector<1x8xf32>
    %c0_11 = arith.constant 0 : index
    %c0_12 = arith.constant 0 : index
    %c0_13 = arith.constant 0 : index
    %17 = vector.load %arg6[%c0_11, %c0_12, %c0_13] : memref<1x1x8xf32, #tpu.memory_space<vmem>>, vector<1x1x8xf32>
    %18 = vector.shape_cast %17 : vector<1x1x8xf32> to vector<1x8xf32>
    %19 = vector.extract_strided_slice %14 {offsets = [0, 0], sizes = [8, 8], strides = [1, 1]} : vector<8x32xbf16> to vector<8x8xbf16>
    %c0_14 = arith.constant 0 : index
    %c0_15 = arith.constant 0 : index
    %c0_16 = arith.constant 0 : index
    %20 = vector.load %arg16[%c0_14, %c0_15, %c0_16] : memref<1x8x32xbf16, #tpu.memory_space<vmem>>, vector<1x8x8xbf16>
    %21 = vector.shape_cast %20 : vector<1x8x8xbf16> to vector<8x8xbf16>
    %c0_17 = arith.constant 0 : index
    %c0_18 = arith.constant 0 : index
    %c0_19 = arith.constant 0 : index
    %22 = vector.load %arg17[%c0_17, %c0_18, %c0_19] : memref<1x8x32xbf16, #tpu.memory_space<vmem>>, vector<1x8x8xbf16>
    %23 = vector.shape_cast %22 : vector<1x8x8xbf16> to vector<8x8xbf16>
    %cst_20 = arith.constant dense<0.000000e+00> : vector<8x8xf32>
    %24 = tpu.matmul %19, %21, %cst_20 {dimension_numbers = #tpu.dot_dimension_numbers<[1], [1], [0], [0], [0, 0, 1, 0], [], []>} : vector<8x8xbf16>, vector<8x8xbf16>, vector<8x8xf32> -> vector<8x8xf32>
    %25 = vector.broadcast %16 : vector<1x8xf32> to vector<8x8xf32>
    %26 = arith.addf %24, %25 : vector<8x8xf32>
    %cst_21 = arith.constant dense<0xFF800000> : vector<8xf32>
    %27 = vector.multi_reduction <maximumf>, %26, %cst_21 [1] : vector<8x8xf32> to vector<8xf32>
    %28 = vector.shape_cast %27 : vector<8xf32> to vector<8x1xf32>
    %29 = vector.broadcast %28 : vector<8x1xf32> to vector<8x8xf32>
    %30 = arith.subf %26, %29 : vector<8x8xf32>
    %31 = math.exp %30 : vector<8x8xf32>
    %cst_22 = arith.constant dense<0.000000e+00> : vector<8xf32>
    %32 = vector.multi_reduction <add>, %31, %cst_22 [1] : vector<8x8xf32> to vector<8xf32>
    %33 = vector.shape_cast %32 : vector<8xf32> to vector<8x1xf32>
    %34 = tpu.reciprocal %33 {approx = true} : vector<8x1xf32> -> vector<8x1xf32>
    %35 = vector.broadcast %34 : vector<8x1xf32> to vector<8x8xf32>
    %36 = arith.mulf %31, %35 : vector<8x8xf32>
    %37 = vector.broadcast %18 : vector<1x8xf32> to vector<8x8xf32>
    %38 = arith.mulf %36, %37 : vector<8x8xf32>
    %39 = arith.truncf %38 : vector<8x8xf32> to vector<8x8xbf16>
    %cst_23 = arith.constant dense<0.000000e+00> : vector<8x8xf32>
    %40 = tpu.matmul %39, %23, %cst_23 {dimension_numbers = #tpu.dot_dimension_numbers<[1], [0], [0], [1], [0, 0, 1, 1], [], []>} : vector<8x8xbf16>, vector<8x8xbf16>, vector<8x8xf32> -> vector<8x8xf32>
    %41 = arith.truncf %40 : vector<8x8xf32> to vector<8x8xbf16>
    %c0_24 = arith.constant 0 : index
    %c0_25 = arith.constant 0 : index
    %42 = vector.load %arg18[%c0_24, %c0_25] : memref<8x32xbf16, #tpu.memory_space<vmem>>, vector<8x8xbf16>
    tpu.vector_store %arg18[%c0_24, %c0_25], %41 {strides = array<i32>} : memref<8x32xbf16, #tpu.memory_space<vmem>>, vector<8x8xbf16>,
    %43 = vector.extract_strided_slice %14 {offsets = [0, 8], sizes = [8, 8], strides = [1, 1]} : vector<8x32xbf16> to vector<8x8xbf16>
    %c0_26 = arith.constant 0 : index
    %c0_27 = arith.constant 0 : index
    %c8 = arith.constant 8 : index
    %44 = vector.load %arg16[%c0_26, %c0_27, %c8] : memref<1x8x32xbf16, #tpu.memory_space<vmem>>, vector<1x8x8xbf16>
    %45 = vector.shape_cast %44 : vector<1x8x8xbf16> to vector<8x8xbf16>
    %c0_28 = arith.constant 0 : index
    %c0_29 = arith.constant 0 : index
    %c8_30 = arith.constant 8 : index
    %46 = vector.load %arg17[%c0_28, %c0_29, %c8_30] : memref<1x8x32xbf16, #tpu.memory_space<vmem>>, vector<1x8x8xbf16>
    %47 = vector.shape_cast %46 : vector<1x8x8xbf16> to vector<8x8xbf16>
    %cst_31 = arith.constant dense<0.000000e+00> : vector<8x8xf32>
    %48 = tpu.matmul %43, %45, %cst_31 {dimension_numbers = #tpu.dot_dimension_numbers<[1], [1], [0], [0], [0, 0, 1, 0], [], []>} : vector<8x8xbf16>, vector<8x8xbf16>, vector<8x8xf32> -> vector<8x8xf32>
    %49 = vector.broadcast %16 : vector<1x8xf32> to vector<8x8xf32>
    %50 = arith.addf %48, %49 : vector<8x8xf32>
    %cst_32 = arith.constant dense<0xFF800000> : vector<8xf32>
    %51 = vector.multi_reduction <maximumf>, %50, %cst_32 [1] : vector<8x8xf32> to vector<8xf32>
    %52 = vector.shape_cast %51 : vector<8xf32> to vector<8x1xf32>
    %53 = vector.broadcast %52 : vector<8x1xf32> to vector<8x8xf32>
    %54 = arith.subf %50, %53 : vector<8x8xf32>
    %55 = math.exp %54 : vector<8x8xf32>
    %cst_33 = arith.constant dense<0.000000e+00> : vector<8xf32>
    %56 = vector.multi_reduction <add>, %55, %cst_33 [1] : vector<8x8xf32> to vector<8xf32>
    %57 = vector.shape_cast %56 : vector<8xf32> to vector<8x1xf32>
    %58 = tpu.reciprocal %57 {approx = true} : vector<8x1xf32> -> vector<8x1xf32>
    %59 = vector.broadcast %58 : vector<8x1xf32> to vector<8x8xf32>
    %60 = arith.mulf %55, %59 : vector<8x8xf32>
    %61 = vector.broadcast %18 : vector<1x8xf32> to vector<8x8xf32>
    %62 = arith.mulf %60, %61 : vector<8x8xf32>
    %63 = arith.truncf %62 : vector<8x8xf32> to vector<8x8xbf16>
    %cst_34 = arith.constant dense<0.000000e+00> : vector<8x8xf32>
    %64 = tpu.matmul %63, %47, %cst_34 {dimension_numbers = #tpu.dot_dimension_numbers<[1], [0], [0], [1], [0, 0, 1, 1], [], []>} : vector<8x8xbf16>, vector<8x8xbf16>, vector<8x8xf32> -> vector<8x8xf32>
    %65 = arith.truncf %64 : vector<8x8xf32> to vector<8x8xbf16>
    %c0_35 = arith.constant 0 : index
    %c8_36 = arith.constant 8 : index
    %66 = vector.load %arg18[%c0_35, %c8_36] : memref<8x32xbf16, #tpu.memory_space<vmem>>, vector<8x8xbf16>
    tpu.vector_store %arg18[%c0_35, %c8_36], %65 {strides = array<i32>} : memref<8x32xbf16, #tpu.memory_space<vmem>>, vector<8x8xbf16>,
    %67 = vector.extract_strided_slice %14 {offsets = [0, 16], sizes = [8, 8], strides = [1, 1]} : vector<8x32xbf16> to vector<8x8xbf16>
    %c0_37 = arith.constant 0 : index
    %c0_38 = arith.constant 0 : index
    %c16 = arith.constant 16 : index
    %68 = vector.load %arg16[%c0_37, %c0_38, %c16] : memref<1x8x32xbf16, #tpu.memory_space<vmem>>, vector<1x8x8xbf16>
    %69 = vector.shape_cast %68 : vector<1x8x8xbf16> to vector<8x8xbf16>
    %c0_39 = arith.constant 0 : index
    %c0_40 = arith.constant 0 : index
    %c16_41 = arith.constant 16 : index
    %70 = vector.load %arg17[%c0_39, %c0_40, %c16_41] : memref<1x8x32xbf16, #tpu.memory_space<vmem>>, vector<1x8x8xbf16>
    %71 = vector.shape_cast %70 : vector<1x8x8xbf16> to vector<8x8xbf16>
    %cst_42 = arith.constant dense<0.000000e+00> : vector<8x8xf32>
    %72 = tpu.matmul %67, %69, %cst_42 {dimension_numbers = #tpu.dot_dimension_numbers<[1], [1], [0], [0], [0, 0, 1, 0], [], []>} : vector<8x8xbf16>, vector<8x8xbf16>, vector<8x8xf32> -> vector<8x8xf32>
    %73 = vector.broadcast %16 : vector<1x8xf32> to vector<8x8xf32>
    %74 = arith.addf %72, %73 : vector<8x8xf32>
    %cst_43 = arith.constant dense<0xFF800000> : vector<8xf32>
    %75 = vector.multi_reduction <maximumf>, %74, %cst_43 [1] : vector<8x8xf32> to vector<8xf32>
    %76 = vector.shape_cast %75 : vector<8xf32> to vector<8x1xf32>
    %77 = vector.broadcast %76 : vector<8x1xf32> to vector<8x8xf32>
    %78 = arith.subf %74, %77 : vector<8x8xf32>
    %79 = math.exp %78 : vector<8x8xf32>
    %cst_44 = arith.constant dense<0.000000e+00> : vector<8xf32>
    %80 = vector.multi_reduction <add>, %79, %cst_44 [1] : vector<8x8xf32> to vector<8xf32>
    %81 = vector.shape_cast %80 : vector<8xf32> to vector<8x1xf32>
    %82 = tpu.reciprocal %81 {approx = true} : vector<8x1xf32> -> vector<8x1xf32>
    %83 = vector.broadcast %82 : vector<8x1xf32> to vector<8x8xf32>
    %84 = arith.mulf %79, %83 : vector<8x8xf32>
    %85 = vector.broadcast %18 : vector<1x8xf32> to vector<8x8xf32>
    %86 = arith.mulf %84, %85 : vector<8x8xf32>
    %87 = arith.truncf %86 : vector<8x8xf32> to vector<8x8xbf16>
    %cst_45 = arith.constant dense<0.000000e+00> : vector<8x8xf32>
    %88 = tpu.matmul %87, %71, %cst_45 {dimension_numbers = #tpu.dot_dimension_numbers<[1], [0], [0], [1], [0, 0, 1, 1], [], []>} : vector<8x8xbf16>, vector<8x8xbf16>, vector<8x8xf32> -> vector<8x8xf32>
    %89 = arith.truncf %88 : vector<8x8xf32> to vector<8x8xbf16>
    %c0_46 = arith.constant 0 : index
    %c16_47 = arith.constant 16 : index
    %90 = vector.load %arg18[%c0_46, %c16_47] : memref<8x32xbf16, #tpu.memory_space<vmem>>, vector<8x8xbf16>
    tpu.vector_store %arg18[%c0_46, %c16_47], %89 {strides = array<i32>} : memref<8x32xbf16, #tpu.memory_space<vmem>>, vector<8x8xbf16>,
    %91 = vector.extract_strided_slice %14 {offsets = [0, 24], sizes = [8, 8], strides = [1, 1]} : vector<8x32xbf16> to vector<8x8xbf16>
    %c0_48 = arith.constant 0 : index
    %c0_49 = arith.constant 0 : index
    %c24 = arith.constant 24 : index
    %92 = vector.load %arg16[%c0_48, %c0_49, %c24] : memref<1x8x32xbf16, #tpu.memory_space<vmem>>, vector<1x8x8xbf16>
    %93 = vector.shape_cast %92 : vector<1x8x8xbf16> to vector<8x8xbf16>
    %c0_50 = arith.constant 0 : index
    %c0_51 = arith.constant 0 : index
    %c24_52 = arith.constant 24 : index
    %94 = vector.load %arg17[%c0_50, %c0_51, %c24_52] : memref<1x8x32xbf16, #tpu.memory_space<vmem>>, vector<1x8x8xbf16>
    %95 = vector.shape_cast %94 : vector<1x8x8xbf16> to vector<8x8xbf16>
    %cst_53 = arith.constant dense<0.000000e+00> : vector<8x8xf32>
    %96 = tpu.matmul %91, %93, %cst_53 {dimension_numbers = #tpu.dot_dimension_numbers<[1], [1], [0], [0], [0, 0, 1, 0], [], []>} : vector<8x8xbf16>, vector<8x8xbf16>, vector<8x8xf32> -> vector<8x8xf32>
    %97 = vector.broadcast %16 : vector<1x8xf32> to vector<8x8xf32>
    %98 = arith.addf %96, %97 : vector<8x8xf32>
    %cst_54 = arith.constant dense<0xFF800000> : vector<8xf32>
    %99 = vector.multi_reduction <maximumf>, %98, %cst_54 [1] : vector<8x8xf32> to vector<8xf32>
    %100 = vector.shape_cast %99 : vector<8xf32> to vector<8x1xf32>
    %101 = vector.broadcast %100 : vector<8x1xf32> to vector<8x8xf32>
    %102 = arith.subf %98, %101 : vector<8x8xf32>
    %103 = math.exp %102 : vector<8x8xf32>
    %cst_55 = arith.constant dense<0.000000e+00> : vector<8xf32>
    %104 = vector.multi_reduction <add>, %103, %cst_55 [1] : vector<8x8xf32> to vector<8xf32>
    %105 = vector.shape_cast %104 : vector<8xf32> to vector<8x1xf32>
    %106 = tpu.reciprocal %105 {approx = true} : vector<8x1xf32> -> vector<8x1xf32>
    %107 = vector.broadcast %106 : vector<8x1xf32> to vector<8x8xf32>
    %108 = arith.mulf %103, %107 : vector<8x8xf32>
    %109 = vector.broadcast %18 : vector<1x8xf32> to vector<8x8xf32>
    %110 = arith.mulf %108, %109 : vector<8x8xf32>
    %111 = arith.truncf %110 : vector<8x8xf32> to vector<8x8xbf16>
    %cst_56 = arith.constant dense<0.000000e+00> : vector<8x8xf32>
    %112 = tpu.matmul %111, %95, %cst_56 {dimension_numbers = #tpu.dot_dimension_numbers<[1], [0], [0], [1], [0, 0, 1, 1], [], []>} : vector<8x8xbf16>, vector<8x8xbf16>, vector<8x8xf32> -> vector<8x8xf32>
    %113 = arith.truncf %112 : vector<8x8xf32> to vector<8x8xbf16>
    %c0_57 = arith.constant 0 : index
    %c24_58 = arith.constant 24 : index
    %114 = vector.load %arg18[%c0_57, %c24_58] : memref<8x32xbf16, #tpu.memory_space<vmem>>, vector<8x8xbf16>
    tpu.vector_store %arg18[%c0_57, %c24_58], %113 {strides = array<i32>} : memref<8x32xbf16, #tpu.memory_space<vmem>>, vector<8x8xbf16>,
    %c0_59 = arith.constant 0 : index
    %c0_60 = arith.constant 0 : index
    %115 = vector.load %arg18[%c0_59, %c0_60] : memref<8x32xbf16, #tpu.memory_space<vmem>>, vector<8x32xbf16>
    %c0_61 = arith.constant 0 : index
    %c0_62 = arith.constant 0 : index
    %116 = vector.load %arg13[%c0_61, %c0_62] : memref<32x32xbf16, #tpu.memory_space<vmem>>, vector<32x32xbf16>
    %cst_63 = arith.constant dense<0.000000e+00> : vector<8x32xf32>
    %117 = tpu.matmul %115, %116, %cst_63 {dimension_numbers = #tpu.dot_dimension_numbers<[1], [0], [0], [1], [0, 0, 1, 1], [], []>} : vector<8x32xbf16>, vector<32x32xbf16>, vector<8x32xf32> -> vector<8x32xf32>
    %c0_64 = arith.constant 0 : index
    %c0_65 = arith.constant 0 : index
    %118 = vector.load %arg14[%c0_64, %c0_65] : memref<1x32xf32, #tpu.memory_space<vmem>>, vector<1x32xf32>
    %119 = vector.shape_cast %118 : vector<1x32xf32> to vector<32xf32>
    %120 = vector.shape_cast %119 : vector<32xf32> to vector<1x32xf32>
    %121 = vector.broadcast %120 : vector<1x32xf32> to vector<8x32xf32>
    %122 = arith.addf %117, %121 : vector<8x32xf32>
    %123 = arith.truncf %122 : vector<8x32xf32> to vector<8x32xbf16>
    %c0_66 = arith.constant 0 : index
    %c0_67 = arith.constant 0 : index
    %c0_68 = arith.constant 0 : index
    %124 = vector.load %arg15[%c0_66, %c0_67, %c0_68] : memref<1x8x32xbf16, #tpu.memory_space<vmem>>, vector<1x8x32xbf16>
    %125 = vector.shape_cast %124 : vector<1x8x32xbf16> to vector<8x32xbf16>
    %126 = vector.shape_cast %123 : vector<8x32xbf16> to vector<1x8x32xbf16>
    tpu.vector_store %arg15[%c0_66, %c0_67, %c0_68], %126 {strides = array<i32>} : memref<1x8x32xbf16, #tpu.memory_space<vmem>>, vector<1x8x32xbf16>,
    return
  }
  func.func @transform_0(%arg0: i32, %arg1: i32) -> (i32, i32, i32) {
    %c0_i32 = arith.constant 0 : i32
    %c0_i32_0 = arith.constant 0 : i32
    return %arg0, %arg1, %c0_i32 : i32, i32, i32
  }
  func.func @transform_1(%arg0: i32, %arg1: i32) -> (i32, i32, i32) {
    %c0_i32 = arith.constant 0 : i32
    %c0_i32_0 = arith.constant 0 : i32
    %c0_i32_1 = arith.constant 0 : i32
    return %arg0, %c0_i32, %c0_i32_0 : i32, i32, i32
  }
  func.func @transform_2(%arg0: i32, %arg1: i32) -> (i32, i32, i32) {
    %c0_i32 = arith.constant 0 : i32
    %c0_i32_0 = arith.constant 0 : i32
    %c0_i32_1 = arith.constant 0 : i32
    return %arg0, %c0_i32, %c0_i32_0 : i32, i32, i32
  }
  func.func @transform_3(%arg0: i32, %arg1: i32) -> (i32, i32, i32) {
    %c0_i32 = arith.constant 0 : i32
    %c0_i32_0 = arith.constant 0 : i32
    %c0_i32_1 = arith.constant 0 : i32
    return %arg0, %c0_i32, %c0_i32_0 : i32, i32, i32
  }
  func.func @transform_4(%arg0: i32, %arg1: i32) -> (i32, i32, i32) {
    %c0_i32 = arith.constant 0 : i32
    %c0_i32_0 = arith.constant 0 : i32
    %c0_i32_1 = arith.constant 0 : i32
    return %arg0, %c0_i32, %c0_i32_0 : i32, i32, i32
  }
  func.func @transform_5(%arg0: i32, %arg1: i32) -> (i32, i32) {
    %c0_i32 = arith.constant 0 : i32
    %c0_i32_0 = arith.constant 0 : i32
    %c0_i32_1 = arith.constant 0 : i32
    return %c0_i32, %c0_i32_0 : i32, i32
  }
  func.func @transform_6(%arg0: i32, %arg1: i32) -> (i32, i32) {
    %c0_i32 = arith.constant 0 : i32
    %c0_i32_0 = arith.constant 0 : i32
    %c0_i32_1 = arith.constant 0 : i32
    return %c0_i32, %c0_i32_0 : i32, i32
  }
  func.func @transform_7(%arg0: i32, %arg1: i32) -> (i32, i32) {
    %c0_i32 = arith.constant 0 : i32
    %c0_i32_0 = arith.constant 0 : i32
    %c0_i32_1 = arith.constant 0 : i32
    return %c0_i32, %c0_i32_0 : i32, i32
  }
  func.func @transform_8(%arg0: i32, %arg1: i32) -> (i32, i32) {
    %c0_i32 = arith.constant 0 : i32
    %c0_i32_0 = arith.constant 0 : i32
    %c0_i32_1 = arith.constant 0 : i32
    return %c0_i32, %c0_i32_0 : i32, i32
  }
  func.func @transform_9(%arg0: i32, %arg1: i32) -> (i32, i32) {
    %c0_i32 = arith.constant 0 : i32
    %c0_i32_0 = arith.constant 0 : i32
    %c0_i32_1 = arith.constant 0 : i32
    return %c0_i32, %c0_i32_0 : i32, i32
  }
  func.func @transform_10(%arg0: i32, %arg1: i32) -> (i32, i32) {
    %c0_i32 = arith.constant 0 : i32
    %c0_i32_0 = arith.constant 0 : i32
    %c0_i32_1 = arith.constant 0 : i32
    return %c0_i32, %c0_i32_0 : i32, i32
  }
  func.func @transform_11(%arg0: i32, %arg1: i32) -> (i32, i32) {
    %c0_i32 = arith.constant 0 : i32
    %c0_i32_0 = arith.constant 0 : i32
    %c0_i32_1 = arith.constant 0 : i32
    return %c0_i32, %c0_i32_0 : i32, i32
  }
  func.func @transform_12(%arg0: i32, %arg1: i32) -> (i32, i32) {
    %c0_i32 = arith.constant 0 : i32
    %c0_i32_0 = arith.constant 0 : i32
    %c0_i32_1 = arith.constant 0 : i32
    return %c0_i32, %c0_i32_0 : i32, i32
  }
  func.func @transform_13(%arg0: i32, %arg1: i32) -> (i32, i32, i32) {
    %c0_i32 = arith.constant 0 : i32
    %c0_i32_0 = arith.constant 0 : i32
    return %arg0, %arg1, %c0_i32 : i32, i32, i32
  }
  func.func @transform_14(%arg0: i32, %arg1: i32) -> (i32, i32, i32) {
    %c0_i32 = arith.constant 0 : i32
    %c0_i32_0 = arith.constant 0 : i32
    %c0_i32_1 = arith.constant 0 : i32
    return %arg0, %c0_i32, %c0_i32_0 : i32, i32, i32
  }
  func.func @transform_15(%arg0: i32, %arg1: i32) -> (i32, i32, i32) {
    %c0_i32 = arith.constant 0 : i32
    %c0_i32_0 = arith.constant 0 : i32
    %c0_i32_1 = arith.constant 0 : i32
    return %arg0, %c0_i32, %c0_i32_0 : i32, i32, i32
  }
}

module attributes {stable_mosaic.version = 11 : i64} {
  func.func @kernel(%arg0: i32, %arg1: i32, %arg2: memref<1x8x32xbf16, #tpu.memory_space<vmem>>, %arg3: memref<1x8x32xbf16, #tpu.memory_space<vmem>>, %arg4: memref<1x8x32xbf16, #tpu.memory_space<vmem>>, %arg5: memref<1x1x8xf32, #tpu.memory_space<vmem>>, %arg6: memref<1x1x8xf32, #tpu.memory_space<vmem>>, %arg7: memref<32x32xbf16, #tpu.memory_space<vmem>>, %arg8: memref<1x32xf32, #tpu.memory_space<vmem>>, %arg9: memref<32x32xbf16, #tpu.memory_space<vmem>>, %arg10: memref<1x32xf32, #tpu.memory_space<vmem>>, %arg11: memref<32x32xbf16, #tpu.memory_space<vmem>>, %arg12: memref<1x32xf32, #tpu.memory_space<vmem>>, %arg13: memref<32x32xbf16, #tpu.memory_space<vmem>>, %arg14: memref<1x32xf32, #tpu.memory_space<vmem>>, %arg15: memref<1x8x32xbf16, #tpu.memory_space<vmem>>, %arg16: memref<1x8x32xbf16, #tpu.memory_space<vmem>>, %arg17: memref<1x8x32xbf16, #tpu.memory_space<vmem>>, %arg18: memref<8x32xbf16, #tpu.memory_space<vmem>>) attributes {dimension_semantics = [#tpu.dimension_semantics<parallel>, #tpu.dimension_semantics<arbitrary>], iteration_bounds = array<i64: 2, 1>, scalar_prefetch = 0 : i64, scratch_operands = 1 : i64, tpu.core_type = #tpu.core_type<tc>, window_params = [{transform_indices = @transform_0, window_bounds = array<i64: 1, 8, 32>}, {transform_indices = @transform_1, window_bounds = array<i64: 1, 8, 32>}, {transform_indices = @transform_2, window_bounds = array<i64: 1, 8, 32>}, {transform_indices = @transform_3, window_bounds = array<i64: 1, 1, 8>}, {transform_indices = @transform_4, window_bounds = array<i64: 1, 1, 8>}, {pipeline_mode = #tpu.pipeline_mode<synchronous>, transform_indices = @transform_5, window_bounds = array<i64: 32, 32>}, {pipeline_mode = #tpu.pipeline_mode<synchronous>, transform_indices = @transform_6, window_bounds = array<i64: 1, 32>}, {pipeline_mode = #tpu.pipeline_mode<synchronous>, transform_indices = @transform_7, window_bounds = array<i64: 32, 32>}, {pipeline_mode = #tpu.pipeline_mode<synchronous>, transform_indices = @transform_8, window_bounds = array<i64: 1, 32>}, {pipeline_mode = #tpu.pipeline_mode<synchronous>, transform_indices = @transform_9, window_bounds = array<i64: 32, 32>}, {pipeline_mode = #tpu.pipeline_mode<synchronous>, transform_indices = @transform_10, window_bounds = array<i64: 1, 32>}, {pipeline_mode = #tpu.pipeline_mode<synchronous>, transform_indices = @transform_11, window_bounds = array<i64: 32, 32>}, {pipeline_mode = #tpu.pipeline_mode<synchronous>, transform_indices = @transform_12, window_bounds = array<i64: 1, 32>}, {transform_indices = @transform_13, window_bounds = array<i64: 1, 8, 32>}, {transform_indices = @transform_14, window_bounds = array<i64: 1, 8, 32>}, {transform_indices = @transform_15, window_bounds = array<i64: 1, 8, 32>}]} {
    %c0_i32 = arith.constant 0 : i32
    %0 = arith.cmpi eq, %arg1, %c0_i32 : i32
    %1 = arith.extui %0 : i1 to i32
    %c0_i32_0 = arith.constant 0 : i32
    %2 = arith.cmpi ne, %1, %c0_i32_0 : i32
    scf.if %2 {
      %c0_69 = arith.constant 0 : index
      %c0_70 = arith.constant 0 : index
      %c0_71 = arith.constant 0 : index
      %127 = vector.load %arg3[%c0_69, %c0_70, %c0_71] : memref<1x8x32xbf16, #tpu.memory_space<vmem>>, vector<1x8x32xbf16>
      %128 = vector.shape_cast %127 : vector<1x8x32xbf16> to vector<8x32xbf16>
      %c0_72 = arith.constant 0 : index
      %c0_73 = arith.constant 0 : index
      %129 = vector.load %arg9[%c0_72, %c0_73] : memref<32x32xbf16, #tpu.memory_space<vmem>>, vector<32x32xbf16>
      %cst_74 = arith.constant dense<0.000000e+00> : vector<8x32xf32>
      %130 = tpu.matmul %128, %129, %cst_74 {dimension_numbers = #tpu.dot_dimension_numbers<[1], [0], [0], [1], [0, 0, 1, 1], [], []>} : vector<8x32xbf16>, vector<32x32xbf16>, vector<8x32xf32> -> vector<8x32xf32>
      %c0_75 = arith.constant 0 : index
      %c0_76 = arith.constant 0 : index
      %131 = vector.load %arg10[%c0_75, %c0_76] : memref<1x32xf32, #tpu.memory_space<vmem>>, vector<1x32xf32>
      %132 = vector.shape_cast %131 : vector<1x32xf32> to vector<32xf32>
      %133 = vector.shape_cast %132 : vector<32xf32> to vector<1x32xf32>
      %134 = vector.broadcast %133 : vector<1x32xf32> to vector<8x32xf32>
      %135 = arith.addf %130, %134 : vector<8x32xf32>
      %c0_77 = arith.constant 0 : index
      %c0_78 = arith.constant 0 : index
      %c0_79 = arith.constant 0 : index
      %136 = vector.load %arg4[%c0_77, %c0_78, %c0_79] : memref<1x8x32xbf16, #tpu.memory_space<vmem>>, vector<1x8x32xbf16>
      %137 = vector.shape_cast %136 : vector<1x8x32xbf16> to vector<8x32xbf16>
      %c0_80 = arith.constant 0 : index
      %c0_81 = arith.constant 0 : index
      %138 = vector.load %arg11[%c0_80, %c0_81] : memref<32x32xbf16, #tpu.memory_space<vmem>>, vector<32x32xbf16>
      %cst_82 = arith.constant dense<0.000000e+00> : vector<8x32xf32>
      %139 = tpu.matmul %137, %138, %cst_82 {dimension_numbers = #tpu.dot_dimension_numbers<[1], [0], [0], [1], [0, 0, 1, 1], [], []>} : vector<8x32xbf16>, vector<32x32xbf16>, vector<8x32xf32> -> vector<8x32xf32>
      %c0_83 = arith.constant 0 : index
      %c0_84 = arith.constant 0 : index
      %140 = vector.load %arg12[%c0_83, %c0_84] : memref<1x32xf32, #tpu.memory_space<vmem>>, vector<1x32xf32>
      %141 = vector.shape_cast %140 : vector<1x32xf32> to vector<32xf32>
      %142 = vector.shape_cast %141 : vector<32xf32> to vector<1x32xf32>
      %143 = vector.broadcast %142 : vector<1x32xf32> to vector<8x32xf32>
      %144 = arith.addf %139, %143 : vector<8x32xf32>
      %145 = arith.truncf %135 : vector<8x32xf32> to vector<8x32xbf16>
      %c0_85 = arith.constant 0 : index
      %c0_86 = arith.constant 0 : index
      %c0_87 = arith.constant 0 : index
      %146 = vector.load %arg16[%c0_85, %c0_86, %c0_87] : memref<1x8x32xbf16, #tpu.memory_space<vmem>>, vector<1x8x32xbf16>
      %147 = vector.shape_cast %146 : vector<1x8x32xbf16> to vector<8x32xbf16>
      %148 = vector.shape_cast %145 : vector<8x32xbf16> to vector<1x8x32xbf16>
      tpu.vector_store %arg16[%c0_85, %c0_86, %c0_87], %148 {strides = array<i32>} : memref<1x8x32xbf16, #tpu.memory_space<vmem>>, vector<1x8x32xbf16>,
      %149 = arith.truncf %144 : vector<8x32xf32> to vector<8x32xbf16>
      %c0_88 = arith.constant 0 : index
      %c0_89 = arith.constant 0 : index
      %c0_90 = arith.constant 0 : index
      %150 = vector.load %arg17[%c0_88, %c0_89, %c0_90] : memref<1x8x32xbf16, #tpu.memory_space<vmem>>, vector<1x8x32xbf16>
      %151 = vector.shape_cast %150 : vector<1x8x32xbf16> to vector<8x32xbf16>
      %152 = vector.shape_cast %149 : vector<8x32xbf16> to vector<1x8x32xbf16>
      tpu.vector_store %arg17[%c0_88, %c0_89, %c0_90], %152 {strides = array<i32>} : memref<1x8x32xbf16, #tpu.memory_space<vmem>>, vector<1x8x32xbf16>,
    } else {
    }
    %c0 = arith.constant 0 : index
    %c0_1 = arith.constant 0 : index
    %c0_2 = arith.constant 0 : index
    %3 = vector.load %arg2[%c0, %c0_1, %c0_2] : memref<1x8x32xbf16, #tpu.memory_space<vmem>>, vector<1x8x32xbf16>
    %4 = vector.shape_cast %3 : vector<1x8x32xbf16> to vector<8x32xbf16>
    %c0_3 = arith.constant 0 : index
    %c0_4 = arith.constant 0 : index
    %5 = vector.load %arg7[%c0_3, %c0_4] : memref<32x32xbf16, #tpu.memory_space<vmem>>, vector<32x32xbf16>
    %cst = arith.constant dense<0.000000e+00> : vector<8x32xf32>
    %6 = tpu.matmul %4, %5, %cst {dimension_numbers = #tpu.dot_dimension_numbers<[1], [0], [0], [1], [0, 0, 1, 1], [], []>} : vector<8x32xbf16>, vector<32x32xbf16>, vector<8x32xf32> -> vector<8x32xf32>
    %c0_5 = arith.constant 0 : index
    %c0_6 = arith.constant 0 : index
    %7 = vector.load %arg8[%c0_5, %c0_6] : memref<1x32xf32, #tpu.memory_space<vmem>>, vector<1x32xf32>
    %8 = vector.shape_cast %7 : vector<1x32xf32> to vector<32xf32>
    %9 = vector.shape_cast %8 : vector<32xf32> to vector<1x32xf32>
    %10 = vector.broadcast %9 : vector<1x32xf32> to vector<8x32xf32>
    %11 = arith.addf %6, %10 : vector<8x32xf32>
    %cst_7 = arith.constant 0.353553385 : f32
    %12 = vector.broadcast %cst_7 : f32 to vector<8x32xf32>
    %13 = arith.mulf %11, %12 : vector<8x32xf32>
    %14 = arith.truncf %13 : vector<8x32xf32> to vector<8x32xbf16>
    %c0_8 = arith.constant 0 : index
    %c0_9 = arith.constant 0 : index
    %c0_10 = arith.constant 0 : index
    %15 = vector.load %arg5[%c0_8, %c0_9, %c0_10] : memref<1x1x8xf32, #tpu.memory_space<vmem>>, vector<1x1x8xf32>
    %16 = vector.shape_cast %15 : vector<1x1x8xf32> to vector<1x8xf32>
    %c0_11 = arith.constant 0 : index
    %c0_12 = arith.constant 0 : index
    %c0_13 = arith.constant 0 : index
    %17 = vector.load %arg6[%c0_11, %c0_12, %c0_13] : memref<1x1x8xf32, #tpu.memory_space<vmem>>, vector<1x1x8xf32>
    %18 = vector.shape_cast %17 : vector<1x1x8xf32> to vector<1x8xf32>
    %19 = vector.extract_strided_slice %14 {offsets = [0, 0], sizes = [8, 8], strides = [1, 1]} : vector<8x32xbf16> to vector<8x8xbf16>
    %c0_14 = arith.constant 0 : index
    %c0_15 = arith.constant 0 : index
    %c0_16 = arith.constant 0 : index
    %20 = vector.load %arg16[%c0_14, %c0_15, %c0_16] : memref<1x8x32xbf16, #tpu.memory_space<vmem>>, vector<1x8x8xbf16>
    %21 = vector.shape_cast %20 : vector<1x8x8xbf16> to vector<8x8xbf16>
    %c0_17 = arith.constant 0 : index
    %c0_18 = arith.constant 0 : index
    %c0_19 = arith.constant 0 : index
    %22 = vector.load %arg17[%c0_17, %c0_18, %c0_19] : memref<1x8x32xbf16, #tpu.memory_space<vmem>>, vector<1x8x8xbf16>
    %23 = vector.shape_cast %22 : vector<1x8x8xbf16> to vector<8x8xbf16>
    %cst_20 = arith.constant dense<0.000000e+00> : vector<8x8xf32>
    %24 = tpu.matmul %19, %21, %cst_20 {dimension_numbers = #tpu.dot_dimension_numbers<[1], [1], [0], [0], [0, 0, 1, 0], [], []>} : vector<8x8xbf16>, vector<8x8xbf16>, vector<8x8xf32> -> vector<8x8xf32>
    %25 = vector.broadcast %16 : vector<1x8xf32> to vector<8x8xf32>
    %26 = arith.addf %24, %25 : vector<8x8xf32>
    %cst_21 = arith.constant dense<0xFF800000> : vector<8xf32>
    %27 = vector.multi_reduction <maximumf>, %26, %cst_21 [1] : vector<8x8xf32> to vector<8xf32>
    %28 = vector.shape_cast %27 : vector<8xf32> to vector<8x1xf32>
    %29 = vector.broadcast %28 : vector<8x1xf32> to vector<8x8xf32>
    %30 = arith.subf %26, %29 : vector<8x8xf32>
    %31 = math.exp %30 : vector<8x8xf32>
    %cst_22 = arith.constant dense<0.000000e+00> : vector<8xf32>
    %32 = vector.multi_reduction <add>, %31, %cst_22 [1] : vector<8x8xf32> to vector<8xf32>
    %33 = vector.shape_cast %32 : vector<8xf32> to vector<8x1xf32>
    %34 = tpu.reciprocal %33 {approx = true} : vector<8x1xf32> -> vector<8x1xf32>
    %35 = vector.broadcast %34 : vector<8x1xf32> to vector<8x8xf32>
    %36 = arith.mulf %31, %35 : vector<8x8xf32>
    %37 = vector.broadcast %18 : vector<1x8xf32> to vector<8x8xf32>
    %38 = arith.mulf %36, %37 : vector<8x8xf32>
    %39 = arith.truncf %38 : vector<8x8xf32> to vector<8x8xbf16>
    %cst_23 = arith.constant dense<0.000000e+00> : vector<8x8xf32>
    %40 = tpu.matmul %39, %23, %cst_23 {dimension_numbers = #tpu.dot_dimension_numbers<[1], [0], [0], [1], [0, 0, 1, 1], [], []>} : vector<8x8xbf16>, vector<8x8xbf16>, vector<8x8xf32> -> vector<8x8xf32>
    %41 = arith.truncf %40 : vector<8x8xf32> to vector<8x8xbf16>
    %c0_24 = arith.constant 0 : index
    %c0_25 = arith.constant 0 : index
    %42 = vector.load %arg18[%c0_24, %c0_25] : memref<8x32xbf16, #tpu.memory_space<vmem>>, vector<8x8xbf16>
    tpu.vector_store %arg18[%c0_24, %c0_25], %41 {strides = array<i32>} : memref<8x32xbf16, #tpu.memory_space<vmem>>, vector<8x8xbf16>,
    %43 = vector.extract_strided_slice %14 {offsets = [0, 8], sizes = [8, 8], strides = [1, 1]} : vector<8x32xbf16> to vector<8x8xbf16>
    %c0_26 = arith.constant 0 : index
    %c0_27 = arith.constant 0 : index
    %c8 = arith.constant 8 : index
    %44 = vector.load %arg16[%c0_26, %c0_27, %c8] : memref<1x8x32xbf16, #tpu.memory_space<vmem>>, vector<1x8x8xbf16>
    %45 = vector.shape_cast %44 : vector<1x8x8xbf16> to vector<8x8xbf16>
    %c0_28 = arith.constant 0 : index
    %c0_29 = arith.constant 0 : index
    %c8_30 = arith.constant 8 : index
    %46 = vector.load %arg17[%c0_28, %c0_29, %c8_30] : memref<1x8x32xbf16, #tpu.memory_space<vmem>>, vector<1x8x8xbf16>
    %47 = vector.shape_cast %46 : vector<1x8x8xbf16> to vector<8x8xbf16>
    %cst_31 = arith.constant dense<0.000000e+00> : vector<8x8xf32>
    %48 = tpu.matmul %43, %45, %cst_31 {dimension_numbers = #tpu.dot_dimension_numbers<[1], [1], [0], [0], [0, 0, 1, 0], [], []>} : vector<8x8xbf16>, vector<8x8xbf16>, vector<8x8xf32> -> vector<8x8xf32>
    %49 = vector.broadcast %16 : vector<1x8xf32> to vector<8x8xf32>
    %50 = arith.addf %48, %49 : vector<8x8xf32>
    %cst_32 = arith.constant dense<0xFF800000> : vector<8xf32>
    %51 = vector.multi_reduction <maximumf>, %50, %cst_32 [1] : vector<8x8xf32> to vector<8xf32>
    %52 = vector.shape_cast %51 : vector<8xf32> to vector<8x1xf32>
    %53 = vector.broadcast %52 : vector<8x1xf32> to vector<8x8xf32>
    %54 = arith.subf %50, %53 : vector<8x8xf32>
    %55 = math.exp %54 : vector<8x8xf32>
    %cst_33 = arith.constant dense<0.000000e+00> : vector<8xf32>
    %56 = vector.multi_reduction <add>, %55, %cst_33 [1] : vector<8x8xf32> to vector<8xf32>
    %57 = vector.shape_cast %56 : vector<8xf32> to vector<8x1xf32>
    %58 = tpu.reciprocal %57 {approx = true} : vector<8x1xf32> -> vector<8x1xf32>
    %59 = vector.broadcast %58 : vector<8x1xf32> to vector<8x8xf32>
    %60 = arith.mulf %55, %59 : vector<8x8xf32>
    %61 = vector.broadcast %18 : vector<1x8xf32> to vector<8x8xf32>
    %62 = arith.mulf %60, %61 : vector<8x8xf32>
    %63 = arith.truncf %62 : vector<8x8xf32> to vector<8x8xbf16>
    %cst_34 = arith.constant dense<0.000000e+00> : vector<8x8xf32>
    %64 = tpu.matmul %63, %47, %cst_34 {dimension_numbers = #tpu.dot_dimension_numbers<[1], [0], [0], [1], [0, 0, 1, 1], [], []>} : vector<8x8xbf16>, vector<8x8xbf16>, vector<8x8xf32> -> vector<8x8xf32>
    %65 = arith.truncf %64 : vector<8x8xf32> to vector<8x8xbf16>
    %c0_35 = arith.constant 0 : index
    %c8_36 = arith.constant 8 : index
    %66 = vector.load %arg18[%c0_35, %c8_36] : memref<8x32xbf16, #tpu.memory_space<vmem>>, vector<8x8xbf16>
    tpu.vector_store %arg18[%c0_35, %c8_36], %65 {strides = array<i32>} : memref<8x32xbf16, #tpu.memory_space<vmem>>, vector<8x8xbf16>,
    %67 = vector.extract_strided_slice %14 {offsets = [0, 16], sizes = [8, 8], strides = [1, 1]} : vector<8x32xbf16> to vector<8x8xbf16>
    %c0_37 = arith.constant 0 : index
    %c0_38 = arith.constant 0 : index
    %c16 = arith.constant 16 : index
    %68 = vector.load %arg16[%c0_37, %c0_38, %c16] : memref<1x8x32xbf16, #tpu.memory_space<vmem>>, vector<1x8x8xbf16>
    %69 = vector.shape_cast %68 : vector<1x8x8xbf16> to vector<8x8xbf16>
    %c0_39 = arith.constant 0 : index
    %c0_40 = arith.constant 0 : index
    %c16_41 = arith.constant 16 : index
    %70 = vector.load %arg17[%c0_39, %c0_40, %c16_41] : memref<1x8x32xbf16, #tpu.memory_space<vmem>>, vector<1x8x8xbf16>
    %71 = vector.shape_cast %70 : vector<1x8x8xbf16> to vector<8x8xbf16>
    %cst_42 = arith.constant dense<0.000000e+00> : vector<8x8xf32>
    %72 = tpu.matmul %67, %69, %cst_42 {dimension_numbers = #tpu.dot_dimension_numbers<[1], [1], [0], [0], [0, 0, 1, 0], [], []>} : vector<8x8xbf16>, vector<8x8xbf16>, vector<8x8xf32> -> vector<8x8xf32>
    %73 = vector.broadcast %16 : vector<1x8xf32> to vector<8x8xf32>
    %74 = arith.addf %72, %73 : vector<8x8xf32>
    %cst_43 = arith.constant dense<0xFF800000> : vector<8xf32>
    %75 = vector.multi_reduction <maximumf>, %74, %cst_43 [1] : vector<8x8xf32> to vector<8xf32>
    %76 = vector.shape_cast %75 : vector<8xf32> to vector<8x1xf32>
    %77 = vector.broadcast %76 : vector<8x1xf32> to vector<8x8xf32>
    %78 = arith.subf %74, %77 : vector<8x8xf32>
    %79 = math.exp %78 : vector<8x8xf32>
    %cst_44 = arith.constant dense<0.000000e+00> : vector<8xf32>
    %80 = vector.multi_reduction <add>, %79, %cst_44 [1] : vector<8x8xf32> to vector<8xf32>
    %81 = vector.shape_cast %80 : vector<8xf32> to vector<8x1xf32>
    %82 = tpu.reciprocal %81 {approx = true} : vector<8x1xf32> -> vector<8x1xf32>
    %83 = vector.broadcast %82 : vector<8x1xf32> to vector<8x8xf32>
    %84 = arith.mulf %79, %83 : vector<8x8xf32>
    %85 = vector.broadcast %18 : vector<1x8xf32> to vector<8x8xf32>
    %86 = arith.mulf %84, %85 : vector<8x8xf32>
    %87 = arith.truncf %86 : vector<8x8xf32> to vector<8x8xbf16>
    %cst_45 = arith.constant dense<0.000000e+00> : vector<8x8xf32>
    %88 = tpu.matmul %87, %71, %cst_45 {dimension_numbers = #tpu.dot_dimension_numbers<[1], [0], [0], [1], [0, 0, 1, 1], [], []>} : vector<8x8xbf16>, vector<8x8xbf16>, vector<8x8xf32> -> vector<8x8xf32>
    %89 = arith.truncf %88 : vector<8x8xf32> to vector<8x8xbf16>
    %c0_46 = arith.constant 0 : index
    %c16_47 = arith.constant 16 : index
    %90 = vector.load %arg18[%c0_46, %c16_47] : memref<8x32xbf16, #tpu.memory_space<vmem>>, vector<8x8xbf16>
    tpu.vector_store %arg18[%c0_46, %c16_47], %89 {strides = array<i32>} : memref<8x32xbf16, #tpu.memory_space<vmem>>, vector<8x8xbf16>,
    %91 = vector.extract_strided_slice %14 {offsets = [0, 24], sizes = [8, 8], strides = [1, 1]} : vector<8x32xbf16> to vector<8x8xbf16>
    %c0_48 = arith.constant 0 : index
    %c0_49 = arith.constant 0 : index
    %c24 = arith.constant 24 : index
    %92 = vector.load %arg16[%c0_48, %c0_49, %c24] : memref<1x8x32xbf16, #tpu.memory_space<vmem>>, vector<1x8x8xbf16>
    %93 = vector.shape_cast %92 : vector<1x8x8xbf16> to vector<8x8xbf16>
    %c0_50 = arith.constant 0 : index
    %c0_51 = arith.constant 0 : index
    %c24_52 = arith.constant 24 : index
    %94 = vector.load %arg17[%c0_50, %c0_51, %c24_52] : memref<1x8x32xbf16, #tpu.memory_space<vmem>>, vector<1x8x8xbf16>
    %95 = vector.shape_cast %94 : vector<1x8x8xbf16> to vector<8x8xbf16>
    %cst_53 = arith.constant dense<0.000000e+00> : vector<8x8xf32>
    %96 = tpu.matmul %91, %93, %cst_53 {dimension_numbers = #tpu.dot_dimension_numbers<[1], [1], [0], [0], [0, 0, 1, 0], [], []>} : vector<8x8xbf16>, vector<8x8xbf16>, vector<8x8xf32> -> vector<8x8xf32>
    %97 = vector.broadcast %16 : vector<1x8xf32> to vector<8x8xf32>
    %98 = arith.addf %96, %97 : vector<8x8xf32>
    %cst_54 = arith.constant dense<0xFF800000> : vector<8xf32>
    %99 = vector.multi_reduction <maximumf>, %98, %cst_54 [1] : vector<8x8xf32> to vector<8xf32>
    %100 = vector.shape_cast %99 : vector<8xf32> to vector<8x1xf32>
    %101 = vector.broadcast %100 : vector<8x1xf32> to vector<8x8xf32>
    %102 = arith.subf %98, %101 : vector<8x8xf32>
    %103 = math.exp %102 : vector<8x8xf32>
    %cst_55 = arith.constant dense<0.000000e+00> : vector<8xf32>
    %104 = vector.multi_reduction <add>, %103, %cst_55 [1] : vector<8x8xf32> to vector<8xf32>
    %105 = vector.shape_cast %104 : vector<8xf32> to vector<8x1xf32>
    %106 = tpu.reciprocal %105 {approx = true} : vector<8x1xf32> -> vector<8x1xf32>
    %107 = vector.broadcast %106 : vector<8x1xf32> to vector<8x8xf32>
    %108 = arith.mulf %103, %107 : vector<8x8xf32>
    %109 = vector.broadcast %18 : vector<1x8xf32> to vector<8x8xf32>
    %110 = arith.mulf %108, %109 : vector<8x8xf32>
    %111 = arith.truncf %110 : vector<8x8xf32> to vector<8x8xbf16>
    %cst_56 = arith.constant dense<0.000000e+00> : vector<8x8xf32>
    %112 = tpu.matmul %111, %95, %cst_56 {dimension_numbers = #tpu.dot_dimension_numbers<[1], [0], [0], [1], [0, 0, 1, 1], [], []>} : vector<8x8xbf16>, vector<8x8xbf16>, vector<8x8xf32> -> vector<8x8xf32>
    %113 = arith.truncf %112 : vector<8x8xf32> to vector<8x8xbf16>
    %c0_57 = arith.constant 0 : index
    %c24_58 = arith.constant 24 : index
    %114 = vector.load %arg18[%c0_57, %c24_58] : memref<8x32xbf16, #tpu.memory_space<vmem>>, vector<8x8xbf16>
    tpu.vector_store %arg18[%c0_57, %c24_58], %113 {strides = array<i32>} : memref<8x32xbf16, #tpu.memory_space<vmem>>, vector<8x8xbf16>,
    %c0_59 = arith.constant 0 : index
    %c0_60 = arith.constant 0 : index
    %115 = vector.load %arg18[%c0_59, %c0_60] : memref<8x32xbf16, #tpu.memory_space<vmem>>, vector<8x32xbf16>
    %c0_61 = arith.constant 0 : index
    %c0_62 = arith.constant 0 : index
    %116 = vector.load %arg13[%c0_61, %c0_62] : memref<32x32xbf16, #tpu.memory_space<vmem>>, vector<32x32xbf16>
    %cst_63 = arith.constant dense<0.000000e+00> : vector<8x32xf32>
    %117 = tpu.matmul %115, %116, %cst_63 {dimension_numbers = #tpu.dot_dimension_numbers<[1], [0], [0], [1], [0, 0, 1, 1], [], []>} : vector<8x32xbf16>, vector<32x32xbf16>, vector<8x32xf32> -> vector<8x32xf32>
    %c0_64 = arith.constant 0 : index
    %c0_65 = arith.constant 0 : index
    %118 = vector.load %arg14[%c0_64, %c0_65] : memref<1x32xf32, #tpu.memory_space<vmem>>, vector<1x32xf32>
    %119 = vector.shape_cast %118 : vector<1x32xf32> to vector<32xf32>
    %120 = vector.shape_cast %119 : vector<32xf32> to vector<1x32xf32>
    %121 = vector.broadcast %120 : vector<1x32xf32> to vector<8x32xf32>
    %122 = arith.addf %117, %121 : vector<8x32xf32>
    %123 = arith.truncf %122 : vector<8x32xf32> to vector<8x32xbf16>
    %c0_66 = arith.constant 0 : index
    %c0_67 = arith.constant 0 : index
    %c0_68 = arith.constant 0 : index
    %124 = vector.load %arg15[%c0_66, %c0_67, %c0_68] : memref<1x8x32xbf16, #tpu.memory_space<vmem>>, vector<1x8x32xbf16>
    %125 = vector.shape_cast %124 : vector<1x8x32xbf16> to vector<8x32xbf16>
    %126 = vector.shape_cast %123 : vector<8x32xbf16> to vector<1x8x32xbf16>
    tpu.vector_store %arg15[%c0_66, %c0_67, %c0_68], %126 {strides = array<i32>} : memref<1x8x32xbf16, #tpu.memory_space<vmem>>, vector<1x8x32xbf16>,
    return
  }
  func.func @transform_0(%arg0: i32, %arg1: i32) -> (i32, i32, i32) {
    %c0_i32 = arith.constant 0 : i32
    %c0_i32_0 = arith.constant 0 : i32
    return %arg0, %arg1, %c0_i32 : i32, i32, i32
  }
  func.func @transform_1(%arg0: i32, %arg1: i32) -> (i32, i32, i32) {
    %c0_i32 = arith.constant 0 : i32
    %c0_i32_0 = arith.constant 0 : i32
    %c0_i32_1 = arith.constant 0 : i32
    return %arg0, %c0_i32, %c0_i32_0 : i32, i32, i32
  }
  func.func @transform_2(%arg0: i32, %arg1: i32) -> (i32, i32, i32) {
    %c0_i32 = arith.constant 0 : i32
    %c0_i32_0 = arith.constant 0 : i32
    %c0_i32_1 = arith.constant 0 : i32
    return %arg0, %c0_i32, %c0_i32_0 : i32, i32, i32
  }
  func.func @transform_3(%arg0: i32, %arg1: i32) -> (i32, i32, i32) {
    %c0_i32 = arith.constant 0 : i32
    %c0_i32_0 = arith.constant 0 : i32
    %c0_i32_1 = arith.constant 0 : i32
    return %arg0, %c0_i32, %c0_i32_0 : i32, i32, i32
  }
  func.func @transform_4(%arg0: i32, %arg1: i32) -> (i32, i32, i32) {
    %c0_i32 = arith.constant 0 : i32
    %c0_i32_0 = arith.constant 0 : i32
    %c0_i32_1 = arith.constant 0 : i32
    return %arg0, %c0_i32, %c0_i32_0 : i32, i32, i32
  }
  func.func @transform_5(%arg0: i32, %arg1: i32) -> (i32, i32) {
    %c0_i32 = arith.constant 0 : i32
    %c0_i32_0 = arith.constant 0 : i32
    %c0_i32_1 = arith.constant 0 : i32
    return %c0_i32, %c0_i32_0 : i32, i32
  }
  func.func @transform_6(%arg0: i32, %arg1: i32) -> (i32, i32) {
    %c0_i32 = arith.constant 0 : i32
    %c0_i32_0 = arith.constant 0 : i32
    %c0_i32_1 = arith.constant 0 : i32
    return %c0_i32, %c0_i32_0 : i32, i32
  }
  func.func @transform_7(%arg0: i32, %arg1: i32) -> (i32, i32) {
    %c0_i32 = arith.constant 0 : i32
    %c0_i32_0 = arith.constant 0 : i32
    %c0_i32_1 = arith.constant 0 : i32
    return %c0_i32, %c0_i32_0 : i32, i32
  }
  func.func @transform_8(%arg0: i32, %arg1: i32) -> (i32, i32) {
    %c0_i32 = arith.constant 0 : i32
    %c0_i32_0 = arith.constant 0 : i32
    %c0_i32_1 = arith.constant 0 : i32
    return %c0_i32, %c0_i32_0 : i32, i32
  }
  func.func @transform_9(%arg0: i32, %arg1: i32) -> (i32, i32) {
    %c0_i32 = arith.constant 0 : i32
    %c0_i32_0 = arith.constant 0 : i32
    %c0_i32_1 = arith.constant 0 : i32
    return %c0_i32, %c0_i32_0 : i32, i32
  }
  func.func @transform_10(%arg0: i32, %arg1: i32) -> (i32, i32) {
    %c0_i32 = arith.constant 0 : i32
    %c0_i32_0 = arith.constant 0 : i32
    %c0_i32_1 = arith.constant 0 : i32
    return %c0_i32, %c0_i32_0 : i32, i32
  }
  func.func @transform_11(%arg0: i32, %arg1: i32) -> (i32, i32) {
    %c0_i32 = arith.constant 0 : i32
    %c0_i32_0 = arith.constant 0 : i32
    %c0_i32_1 = arith.constant 0 : i32
    return %c0_i32, %c0_i32_0 : i32, i32
  }
  func.func @transform_12(%arg0: i32, %arg1: i32) -> (i32, i32) {
    %c0_i32 = arith.constant 0 : i32
    %c0_i32_0 = arith.constant 0 : i32
    %c0_i32_1 = arith.constant 0 : i32
    return %c0_i32, %c0_i32_0 : i32, i32
  }
  func.func @transform_13(%arg0: i32, %arg1: i32) -> (i32, i32, i32) {
    %c0_i32 = arith.constant 0 : i32
    %c0_i32_0 = arith.constant 0 : i32
    return %arg0, %arg1, %c0_i32 : i32, i32, i32
  }
  func.func @transform_14(%arg0: i32, %arg1: i32) -> (i32, i32, i32) {
    %c0_i32 = arith.constant 0 : i32
    %c0_i32_0 = arith.constant 0 : i32
    %c0_i32_1 = arith.constant 0 : i32
    return %arg0, %c0_i32, %c0_i32_0 : i32, i32, i32
  }
  func.func @transform_15(%arg0: i32, %arg1: i32) -> (i32, i32, i32) {
    %c0_i32 = arith.constant 0 : i32
    %c0_i32_0 = arith.constant 0 : i32
    %c0_i32_1 = arith.constant 0 : i32
    return %arg0, %c0_i32, %c0_i32_0 : i32, i32, i32
  }
}

</mosaic_0001>

<llo_original>
// kernel: tpu_custom_call.1
$region0: #{tpu_custom_call.1}
  #allocation0 [shape = 'u32[]', space=smem, size = 0x4, offset = 0x4, fixed_abs, tag = 'smem constant byte address 0x4 - core index']
  #allocation1 [shape = 'u32[144,128]{1,0:T(1,128)}', space=vmem, size = 0x12000, scoped, tag = 'internal scratch']
  #allocation2 [shape = 'bf16[8,32]{1,0:T(8,128)(2,1)}', space=vmem, size = 0x800, scoped, tag = 'scratch operand']
  %s0 = inlined_call_operand.hbm [shape: bf16[2,8,32], index: 0, kind: input, shape index: {}]
  %s1 = inlined_call_operand.hbm [shape: bf16[2,8,32], index: 1, kind: input, shape index: {}]
  %s2 = inlined_call_operand.hbm [shape: bf16[2,8,32], index: 2, kind: input, shape index: {}]
  %s3 = inlined_call_operand.vmem [shape: f32[2,1,8], index: 3, kind: input, shape index: {}]
  %s4 = inlined_call_operand.hbm [shape: f32[2,1,8], index: 4, kind: input, shape index: {}]
  %s5 = inlined_call_operand.vmem [shape: bf16[32,32], index: 5, kind: input, shape index: {}]
  %s6 = inlined_call_operand.hbm [shape: f32[1,32], index: 6, kind: input, shape index: {}]
  %s7 = inlined_call_operand.hbm [shape: bf16[32,32], index: 7, kind: input, shape index: {}]
  %s8 = inlined_call_operand.hbm [shape: f32[1,32], index: 8, kind: input, shape index: {}]
  %s9 = inlined_call_operand.vmem [shape: bf16[32,32], index: 9, kind: input, shape index: {}]
  %s10 = inlined_call_operand.vmem [shape: f32[1,32], index: 10, kind: input, shape index: {}]
  %s11 = inlined_call_operand.hbm [shape: bf16[32,32], index: 11, kind: input, shape index: {}]
  %s12 = inlined_call_operand.vmem [shape: f32[1,32], index: 12, kind: input, shape index: {}]
  %s13 = inlined_call_operand.hbm [shape: bf16[2,8,32], index: 13, kind: output, shape index: {0}]
  %s14 = inlined_call_operand.hbm [shape: bf16[2,8,32], index: 14, kind: output, shape index: {1}]
  %s15 = inlined_call_operand.hbm [shape: bf16[2,8,32], index: 15, kind: output, shape index: {2}]
  %16 = xla_tuple %s13, %s14, %s15
  %s17 = sld [smem:[#allocation0]]
  $region137: #{tpu_custom_call.1} parent=0
    _
  %s19 = ssub.s32 1, %s17
  %s20 = scalar_select 0, %s19, %s17
  $region1: #{tpu_custom_call.1} parent=0
    #allocation3 [shape = 'u8[4096]{0}', space=vmem, size = 0x1000, scoped, tag = 'input window, operand 0']
    #allocation4 [shape = 's32[2]{0}', space=sflag, size = 0x8, scoped, tag = 'scoped memory for tpu_custom_call.1']
    #allocation5 [shape = 's32[2]{0}', space=sflag, size = 0x8, scoped, tag = 'scoped memory for tpu_custom_call.1']
    #allocation6 [shape = 'u8[2048]{0}', space=vmem, size = 0x800, scoped, tag = 'input window, operand 1, single buffered']
    #allocation7 [shape = 's32[1]{0}', space=sflag, size = 0x4, scoped, tag = 'scoped memory for tpu_custom_call.1']
    #allocation8 [shape = 'u8[2048]{0}', space=vmem, size = 0x800, scoped, tag = 'input window, operand 2, single buffered']
    #allocation9 [shape = 'u8[512]{0}', space=vmem, size = 0x400, scoped, tag = 'input window, operand 4, single buffered']
    #allocation10 [shape = 's32[1]{0}', space=sflag, size = 0x4, scoped, tag = 'scoped memory for tpu_custom_call.1']
    #allocation11 [shape = 'u8[512]{0}', space=vmem, size = 0x400, scoped, tag = 'input window, operand 6, single buffered']
    #allocation12 [shape = 'u8[8192]{0}', space=vmem, size = 0x2000, scoped, tag = 'input window, operand 7, single buffered']
    #allocation13 [shape = 's32[1]{0}', space=sflag, size = 0x4, scoped, tag = 'scoped memory for tpu_custom_call.1']
    #allocation14 [shape = 'u8[512]{0}', space=vmem, size = 0x400, scoped, tag = 'input window, operand 8, single buffered']
    #allocation15 [shape = 'u8[8192]{0}', space=vmem, size = 0x2000, scoped, tag = 'input window, operand 11, single buffered']
    #allocation16 [shape = 's32[1]{0}', space=sflag, size = 0x4, scoped, tag = 'scoped memory for tpu_custom_call.1']
    #allocation17 [shape = 'u8[4096]{0}', space=vmem, size = 0x1000, scoped, tag = 'output window, operand 0']
    #allocation18 [shape = 'u8[2048]{0}', space=vmem, size = 0x800, scoped, tag = 'output window, operand 1, single buffered']
    #allocation19 [shape = 's32[1]{0}', space=sflag, size = 0x4, scoped, tag = 'scoped memory for tpu_custom_call.1']
    #allocation20 [shape = 'u8[2048]{0}', space=vmem, size = 0x800, scoped, tag = 'output window, operand 2, single buffered']
    %21 = vsyncpa [#allocation4], 0
    %s22 = scalar_lea.sflag [#allocation4], 1
    %23 = vsyncpa %s22, 0
    %24 = vsyncpa [#allocation7], 0
    %25 = vsyncpa [#allocation10], 0
    %26 = vsyncpa [#allocation13], 0
    %27 = vsyncpa [#allocation16], 0
    %28 = vsyncpa [#allocation5], 0
    %s29 = scalar_lea.sflag [#allocation5], 1
    %30 = vsyncpa %s29, 0
    %31 = vsyncpa [#allocation19], 0
    loop: start=0, step=1, limit=4
    $region2: #{tpu_custom_call.1} parent=1 // loop_pre_header
      _
    $region3: #{tpu_custom_call.1} parent=1 // loop_header
      %s33 = sphi 0, %s37
      %p34 = scmp.ge.s32.totalorder %s33, 4
      %s40 = sphi 0, %s52
      %s41 = sphi 0, %s48
      %s42 = sphi 0, %s40
      %s43 = sphi 0, %s41
      %s44 = sphi 0, %s42
      %s45 = sphi 0, %s43
      %s57 = sphi 0, %s59
      %s60 = sphi 0, %s57
      %s61 = sphi 0, %s60
      %s77 = sphi 0, %s61
      %s83 = sphi 0, %s85
      %s86 = sphi 0, %s83
      %s87 = sphi 0, %s86
      %s103 = sphi 0, %s87
      %s109 = sphi 0, %s111
      %s112 = sphi 0, %s109
      %s113 = sphi 0, %s112
      %s129 = sphi 0, %s113
      %s135 = sphi 0, %s137
      %s138 = sphi 0, %s135
      %s139 = sphi 0, %s138
      %s155 = sphi 0, %s139
      %s161 = sphi 0, %s163
      %s164 = sphi 0, %s161
      %s165 = sphi 0, %s164
      %s181 = sphi 0, %s165
      %s185 = sphi 0, %s185
      %s187 = sphi 0, %s185
      %s188 = sphi 0, %s187
      %s202 = sphi 0, %s188
      %s206 = sphi 0, %s206
      %s208 = sphi 0, %s206
      %s209 = sphi 0, %s208
      %s223 = sphi 0, %s209
      %s227 = sphi 0, %s227
      %s229 = sphi 0, %s227
      %s230 = sphi 0, %s229
      %s244 = sphi 0, %s230
      %s248 = sphi 0, %s248
      %s250 = sphi 0, %s248
      %s251 = sphi 0, %s250
      %s265 = sphi 0, %s251
      %s269 = sphi 0, %s269
      %s271 = sphi 0, %s269
      %s272 = sphi 0, %s271
      %s286 = sphi 0, %s272
      %s290 = sphi 0, %s290
      %s292 = sphi 0, %s290
      %s293 = sphi 0, %s292
      %s307 = sphi 0, %s293
      %s311 = sphi 0, %s311
      %s313 = sphi 0, %s311
      %s314 = sphi 0, %s313
      %s328 = sphi 0, %s314
      %s332 = sphi 0, %s332
      %s334 = sphi 0, %s332
      %s335 = sphi 0, %s334
      %s349 = sphi 0, %s335
      %s357 = sphi 0, %s359
      %s360 = sphi 0, %s357
      %s361 = sphi 0, %s360
      %s377 = sphi 0, %s361
      %s383 = sphi 0, %s385
      %s386 = sphi 0, %s383
      %s387 = sphi 0, %s386
      %s403 = sphi 0, %s387
      %s409 = sphi 0, %s411
      %s412 = sphi 0, %s409
      %s413 = sphi 0, %s412
      %s429 = sphi 0, %s413
    $region4: #{tpu_custom_call.1} parent=1 // loop_header_branch
      %36 = sbr.rel (%p34) target = $region8
    $region5: #{tpu_custom_call.1} parent=1 // loop_body
      %s38 = ssub.s32 %s33, 1
      %s39 = ssub.s32 %s33, 2
      %s46 = sadd.s32 1, %s41
      %p47 = scmp.ge.s32.totalorder %s46, 1
      %s48 = scalar_select %p47, 0, %s46
      %s49 = sadd.s32 1, %s40
      %s50 = scalar_select %p47, %s49, %s40
      %p51 = scmp.ge.s32.totalorder %s50, 2
      %s52 = scalar_select %p51, 0, %s50
      %s53 = ssub.s32 %s40, %s52
      %s54 = ssub.s32 %s41, %s48
      %s55 = sor.u32 %s53, %s54
      %p56 = scmp.eq.s32.totalorder %s55, 0
      %s58 = sadd.s32 %s57, 1
      %s59 = scalar_select %p56, %s57, %s58
      %p62 = pneg %p56
      %p63 = scmp.eq.s32.totalorder %s33, 1
      %p64 = por %p62, %p63
      %p65 = scmp.ne.s32.totalorder %s57, %s60
      %p66 = scmp.eq.s32.totalorder %s33, 0
      %p67 = por %p65, %p66
      %p68 = scmp.ne.s32.totalorder %s57, %s60
      %p69 = scmp.eq.s32.totalorder %s38, 1
      %p70 = por %p68, %p69
      %p71 = scmp.ne.s32.totalorder %s60, %s61
      %p72 = scmp.eq.s32.totalorder %s38, 0
      %p73 = por %p71, %p72
      %p74 = scmp.ne.s32.totalorder %s60, %s61
      %p75 = scmp.eq.s32.totalorder %s39, 1
      %p76 = por %p74, %p75
      %p78 = scmp.ne.s32.totalorder %s61, %s77
      %p79 = scmp.eq.s32.totalorder %s39, 0
      %p80 = por %p78, %p79
      %s81 = ssub.s32 %s40, %s52
      %p82 = scmp.eq.s32.totalorder %s81, 0
      %s84 = sadd.s32 %s83, 1
      %s85 = scalar_select %p82, %s83, %s84
      %p88 = pneg %p82
      %p89 = scmp.eq.s32.totalorder %s33, 1
      %p90 = por %p88, %p89
      %p91 = scmp.ne.s32.totalorder %s83, %s86
      %p92 = scmp.eq.s32.totalorder %s33, 0
      %p93 = por %p91, %p92
      %p94 = scmp.ne.s32.totalorder %s83, %s86
      %p95 = scmp.eq.s32.totalorder %s38, 1
      %p96 = por %p94, %p95
      %p97 = scmp.ne.s32.totalorder %s86, %s87
      %p98 = scmp.eq.s32.totalorder %s38, 0
      %p99 = por %p97, %p98
      %p100 = scmp.ne.s32.totalorder %s86, %s87
      %p101 = scmp.eq.s32.totalorder %s39, 1
      %p102 = por %p100, %p101
      %p104 = scmp.ne.s32.totalorder %s87, %s103
      %p105 = scmp.eq.s32.totalorder %s39, 0
      %p106 = por %p104, %p105
      %s107 = ssub.s32 %s40, %s52
      %p108 = scmp.eq.s32.totalorder %s107, 0
      %s110 = sadd.s32 %s109, 1
      %s111 = scalar_select %p108, %s109, %s110
      %p114 = pneg %p108
      %p115 = scmp.eq.s32.totalorder %s33, 1
      %p116 = por %p114, %p115
      %p117 = scmp.ne.s32.totalorder %s109, %s112
      %p118 = scmp.eq.s32.totalorder %s33, 0
      %p119 = por %p117, %p118
      %p120 = scmp.ne.s32.totalorder %s109, %s112
      %p121 = scmp.eq.s32.totalorder %s38, 1
      %p122 = por %p120, %p121
      %p123 = scmp.ne.s32.totalorder %s112, %s113
      %p124 = scmp.eq.s32.totalorder %s38, 0
      %p125 = por %p123, %p124
      %p126 = scmp.ne.s32.totalorder %s112, %s113
      %p127 = scmp.eq.s32.totalorder %s39, 1
      %p128 = por %p126, %p127
      %p130 = scmp.ne.s32.totalorder %s113, %s129
      %p131 = scmp.eq.s32.totalorder %s39, 0
      %p132 = por %p130, %p131
      %s133 = ssub.s32 %s40, %s52
      %p134 = scmp.eq.s32.totalorder %s133, 0
      %s136 = sadd.s32 %s135, 1
      %s137 = scalar_select %p134, %s135, %s136
      %p140 = pneg %p134
      %p141 = scmp.eq.s32.totalorder %s33, 1
      %p142 = por %p140, %p141
      %p143 = scmp.ne.s32.totalorder %s135, %s138
      %p144 = scmp.eq.s32.totalorder %s33, 0
      %p145 = por %p143, %p144
      %p146 = scmp.ne.s32.totalorder %s135, %s138
      %p147 = scmp.eq.s32.totalorder %s38, 1
      %p148 = por %p146, %p147
      %p149 = scmp.ne.s32.totalorder %s138, %s139
      %p150 = scmp.eq.s32.totalorder %s38, 0
      %p151 = por %p149, %p150
      %p152 = scmp.ne.s32.totalorder %s138, %s139
      %p153 = scmp.eq.s32.totalorder %s39, 1
      %p154 = por %p152, %p153
      %p156 = scmp.ne.s32.totalorder %s139, %s155
      %p157 = scmp.eq.s32.totalorder %s39, 0
      %p158 = por %p156, %p157
      %s159 = ssub.s32 %s40, %s52
      %p160 = scmp.eq.s32.totalorder %s159, 0
      %s162 = sadd.s32 %s161, 1
      %s163 = scalar_select %p160, %s161, %s162
      %p166 = pneg %p160
      %p167 = scmp.eq.s32.totalorder %s33, 1
      %p168 = por %p166, %p167
      %p169 = scmp.ne.s32.totalorder %s161, %s164
      %p170 = scmp.eq.s32.totalorder %s33, 0
      %p171 = por %p169, %p170
      %p172 = scmp.ne.s32.totalorder %s161, %s164
      %p173 = scmp.eq.s32.totalorder %s38, 1
      %p174 = por %p172, %p173
      %p175 = scmp.ne.s32.totalorder %s164, %s165
      %p176 = scmp.eq.s32.totalorder %s38, 0
      %p177 = por %p175, %p176
      %p178 = scmp.ne.s32.totalorder %s164, %s165
      %p179 = scmp.eq.s32.totalorder %s39, 1
      %p180 = por %p178, %p179
      %p182 = scmp.ne.s32.totalorder %s165, %s181
      %p183 = scmp.eq.s32.totalorder %s39, 0
      %p184 = por %p182, %p183
      %s186 = sadd.s32 %s185, 1
      %p189 = scmp.eq.s32.totalorder %s33, 1
      %p190 = scmp.ne.s32.totalorder %s185, %s187
      %p191 = scmp.eq.s32.totalorder %s33, 0
      %p192 = por %p190, %p191
      %p193 = scmp.ne.s32.totalorder %s185, %s187
      %p194 = scmp.eq.s32.totalorder %s38, 1
      %p195 = por %p193, %p194
      %p196 = scmp.ne.s32.totalorder %s187, %s188
      %p197 = scmp.eq.s32.totalorder %s38, 0
      %p198 = por %p196, %p197
      %p199 = scmp.ne.s32.totalorder %s187, %s188
      %p200 = scmp.eq.s32.totalorder %s39, 1
      %p201 = por %p199, %p200
      %p203 = scmp.ne.s32.totalorder %s188, %s202
      %p204 = scmp.eq.s32.totalorder %s39, 0
      %p205 = por %p203, %p204
      %s207 = sadd.s32 %s206, 1
      %p210 = scmp.eq.s32.totalorder %s33, 1
      %p211 = scmp.ne.s32.totalorder %s206, %s208
      %p212 = scmp.eq.s32.totalorder %s33, 0
      %p213 = por %p211, %p212
      %p214 = scmp.ne.s32.totalorder %s206, %s208
      %p215 = scmp.eq.s32.totalorder %s38, 1
      %p216 = por %p214, %p215
      %p217 = scmp.ne.s32.totalorder %s208, %s209
      %p218 = scmp.eq.s32.totalorder %s38, 0
      %p219 = por %p217, %p218
      %p220 = scmp.ne.s32.totalorder %s208, %s209
      %p221 = scmp.eq.s32.totalorder %s39, 1
      %p222 = por %p220, %p221
      %p224 = scmp.ne.s32.totalorder %s209, %s223
      %p225 = scmp.eq.s32.totalorder %s39, 0
      %p226 = por %p224, %p225
      %s228 = sadd.s32 %s227, 1
      %p231 = scmp.eq.s32.totalorder %s33, 1
      %p232 = scmp.ne.s32.totalorder %s227, %s229
      %p233 = scmp.eq.s32.totalorder %s33, 0
      %p234 = por %p232, %p233
      %p235 = scmp.ne.s32.totalorder %s227, %s229
      %p236 = scmp.eq.s32.totalorder %s38, 1
      %p237 = por %p235, %p236
      %p238 = scmp.ne.s32.totalorder %s229, %s230
      %p239 = scmp.eq.s32.totalorder %s38, 0
      %p240 = por %p238, %p239
      %p241 = scmp.ne.s32.totalorder %s229, %s230
      %p242 = scmp.eq.s32.totalorder %s39, 1
      %p243 = por %p241, %p242
      %p245 = scmp.ne.s32.totalorder %s230, %s244
      %p246 = scmp.eq.s32.totalorder %s39, 0
      %p247 = por %p245, %p246
      %s249 = sadd.s32 %s248, 1
      %p252 = scmp.eq.s32.totalorder %s33, 1
      %p253 = scmp.ne.s32.totalorder %s248, %s250
      %p254 = scmp.eq.s32.totalorder %s33, 0
      %p255 = por %p253, %p254
      %p256 = scmp.ne.s32.totalorder %s248, %s250
      %p257 = scmp.eq.s32.totalorder %s38, 1
      %p258 = por %p256, %p257
      %p259 = scmp.ne.s32.totalorder %s250, %s251
      %p260 = scmp.eq.s32.totalorder %s38, 0
      %p261 = por %p259, %p260
      %p262 = scmp.ne.s32.totalorder %s250, %s251
      %p263 = scmp.eq.s32.totalorder %s39, 1
      %p264 = por %p262, %p263
      %p266 = scmp.ne.s32.totalorder %s251, %s265
      %p267 = scmp.eq.s32.totalorder %s39, 0
      %p268 = por %p266, %p267
      %s270 = sadd.s32 %s269, 1
      %p273 = scmp.eq.s32.totalorder %s33, 1
      %p274 = scmp.ne.s32.totalorder %s269, %s271
      %p275 = scmp.eq.s32.totalorder %s33, 0
      %p276 = por %p274, %p275
      %p277 = scmp.ne.s32.totalorder %s269, %s271
      %p278 = scmp.eq.s32.totalorder %s38, 1
      %p279 = por %p277, %p278
      %p280 = scmp.ne.s32.totalorder %s271, %s272
      %p281 = scmp.eq.s32.totalorder %s38, 0
      %p282 = por %p280, %p281
      %p283 = scmp.ne.s32.totalorder %s271, %s272
      %p284 = scmp.eq.s32.totalorder %s39, 1
      %p285 = por %p283, %p284
      %p287 = scmp.ne.s32.totalorder %s272, %s286
      %p288 = scmp.eq.s32.totalorder %s39, 0
      %p289 = por %p287, %p288
      %s291 = sadd.s32 %s290, 1
      %p294 = scmp.eq.s32.totalorder %s33, 1
      %p295 = scmp.ne.s32.totalorder %s290, %s292
      %p296 = scmp.eq.s32.totalorder %s33, 0
      %p297 = por %p295, %p296
      %p298 = scmp.ne.s32.totalorder %s290, %s292
      %p299 = scmp.eq.s32.totalorder %s38, 1
      %p300 = por %p298, %p299
      %p301 = scmp.ne.s32.totalorder %s292, %s293
      %p302 = scmp.eq.s32.totalorder %s38, 0
      %p303 = por %p301, %p302
      %p304 = scmp.ne.s32.totalorder %s292, %s293
      %p305 = scmp.eq.s32.totalorder %s39, 1
      %p306 = por %p304, %p305
      %p308 = scmp.ne.s32.totalorder %s293, %s307
      %p309 = scmp.eq.s32.totalorder %s39, 0
      %p310 = por %p308, %p309
      %s312 = sadd.s32 %s311, 1
      %p315 = scmp.eq.s32.totalorder %s33, 1
      %p316 = scmp.ne.s32.totalorder %s311, %s313
      %p317 = scmp.eq.s32.totalorder %s33, 0
      %p318 = por %p316, %p317
      %p319 = scmp.ne.s32.totalorder %s311, %s313
      %p320 = scmp.eq.s32.totalorder %s38, 1
      %p321 = por %p319, %p320
      %p322 = scmp.ne.s32.totalorder %s313, %s314
      %p323 = scmp.eq.s32.totalorder %s38, 0
      %p324 = por %p322, %p323
      %p325 = scmp.ne.s32.totalorder %s313, %s314
      %p326 = scmp.eq.s32.totalorder %s39, 1
      %p327 = por %p325, %p326
      %p329 = scmp.ne.s32.totalorder %s314, %s328
      %p330 = scmp.eq.s32.totalorder %s39, 0
      %p331 = por %p329, %p330
      %s333 = sadd.s32 %s332, 1
      %p336 = scmp.eq.s32.totalorder %s33, 1
      %p337 = scmp.ne.s32.totalorder %s332, %s334
      %p338 = scmp.eq.s32.totalorder %s33, 0
      %p339 = por %p337, %p338
      %p340 = scmp.ne.s32.totalorder %s332, %s334
      %p341 = scmp.eq.s32.totalorder %s38, 1
      %p342 = por %p340, %p341
      %p343 = scmp.ne.s32.totalorder %s334, %s335
      %p344 = scmp.eq.s32.totalorder %s38, 0
      %p345 = por %p343, %p344
      %p346 = scmp.ne.s32.totalorder %s334, %s335
      %p347 = scmp.eq.s32.totalorder %s39, 1
      %p348 = por %p346, %p347
      %p350 = scmp.ne.s32.totalorder %s335, %s349
      %p351 = scmp.eq.s32.totalorder %s39, 0
      %p352 = por %p350, %p351
      %s353 = ssub.s32 %s40, %s52
      %s354 = ssub.s32 %s41, %s48
      %s355 = sor.u32 %s353, %s354
      %p356 = scmp.eq.s32.totalorder %s355, 0
      %s358 = sadd.s32 %s357, 1
      %s359 = scalar_select %p356, %s357, %s358
      %p362 = pneg %p356
      %p363 = scmp.eq.s32.totalorder %s33, 1
      %p364 = por %p362, %p363
      %p365 = scmp.ne.s32.totalorder %s357, %s360
      %p366 = scmp.eq.s32.totalorder %s33, 0
      %p367 = por %p365, %p366
      %p368 = scmp.ne.s32.totalorder %s357, %s360
      %p369 = scmp.eq.s32.totalorder %s38, 1
      %p370 = por %p368, %p369
      %p371 = scmp.ne.s32.totalorder %s360, %s361
      %p372 = scmp.eq.s32.totalorder %s38, 0
      %p373 = por %p371, %p372
      %p374 = scmp.ne.s32.totalorder %s360, %s361
      %p375 = scmp.eq.s32.totalorder %s39, 1
      %p376 = por %p374, %p375
      %p378 = scmp.ne.s32.totalorder %s361, %s377
      %p379 = scmp.eq.s32.totalorder %s39, 0
      %p380 = por %p378, %p379
      %s381 = ssub.s32 %s40, %s52
      %p382 = scmp.eq.s32.totalorder %s381, 0
      %s384 = sadd.s32 %s383, 1
      %s385 = scalar_select %p382, %s383, %s384
      %p388 = pneg %p382
      %p389 = scmp.eq.s32.totalorder %s33, 1
      %p390 = por %p388, %p389
      %p391 = scmp.ne.s32.totalorder %s383, %s386
      %p392 = scmp.eq.s32.totalorder %s33, 0
      %p393 = por %p391, %p392
      %p394 = scmp.ne.s32.totalorder %s383, %s386
      %p395 = scmp.eq.s32.totalorder %s38, 1
      %p396 = por %p394, %p395
      %p397 = scmp.ne.s32.totalorder %s386, %s387
      %p398 = scmp.eq.s32.totalorder %s38, 0
      %p399 = por %p397, %p398
      %p400 = scmp.ne.s32.totalorder %s386, %s387
      %p401 = scmp.eq.s32.totalorder %s39, 1
      %p402 = por %p400, %p401
      %p404 = scmp.ne.s32.totalorder %s387, %s403
      %p405 = scmp.eq.s32.totalorder %s39, 0
      %p406 = por %p404, %p405
      %s407 = ssub.s32 %s40, %s52
      %p408 = scmp.eq.s32.totalorder %s407, 0
      %s410 = sadd.s32 %s409, 1
      %s411 = scalar_select %p408, %s409, %s410
      %p414 = pneg %p408
      %p415 = scmp.eq.s32.totalorder %s33, 1
      %p416 = por %p414, %p415
      %p417 = scmp.ne.s32.totalorder %s409, %s412
      %p418 = scmp.eq.s32.totalorder %s33, 0
      %p419 = por %p417, %p418
      %p420 = scmp.ne.s32.totalorder %s409, %s412
      %p421 = scmp.eq.s32.totalorder %s38, 1
      %p422 = por %p420, %p421
      %p423 = scmp.ne.s32.totalorder %s412, %s413
      %p424 = scmp.eq.s32.totalorder %s38, 0
      %p425 = por %p423, %p424
      %p426 = scmp.ne.s32.totalorder %s412, %s413
      %p427 = scmp.eq.s32.totalorder %s39, 1
      %p428 = por %p426, %p427
      %p430 = scmp.ne.s32.totalorder %s413, %s429
      %p431 = scmp.eq.s32.totalorder %s39, 0
      %p432 = por %p430, %p431
      %p433 = scmp.le.s32.totalorder 1, %s33
      %p434 = scmp.lt.s32.totalorder %s33, 3
      %p435 = pnand %p433, %p434
      %p436 = pneg %p435
      // Predicated region
      $region9: #{tpu_custom_call.1} parent=5 // pred_check
        _
      $region10: #{tpu_custom_call.1} parent=5 // pred_check_branch
        %438 = sbr.rel (%p435) target = $region12
      $region11: #{tpu_custom_call.1} parent=5 // pred_region
        %s439 = ssub.s32 %s33, 1
        // Predicated region
        $region13: #{tpu_custom_call.1} parent=11 // pred_check
          %p440 = pneg %p99
        $region14: #{tpu_custom_call.1} parent=11 // pred_check_branch
          %442 = sbr.rel (%p440) target = $region16
        $region15: #{tpu_custom_call.1} parent=11 // pred_region
          %s444 = ssub.s32 64, 64
          %445 = vsyncadd [#allocation7], %s444
          %s446 = smul.addr %s42, 64
          %s447 = scalar_lea.hbm %s1, %s446
          %s449 = sshll.u32 [#allocation6], 4
          %s450 = int_to_ptr.vmem [resolvable:$true] %s449
          %452 = dma.hbm_to_vmem [thread:$0]  %s447, 64, %s450, [#allocation7]
        $region16: #{tpu_custom_call.1} parent=11 // pred_fallthru
          _
        // Predicated region
        $region17: #{tpu_custom_call.1} parent=11 // pred_check
          %p453 = pneg %p125
        $region18: #{tpu_custom_call.1} parent=11 // pred_check_branch
          %455 = sbr.rel (%p453) target = $region20
        $region19: #{tpu_custom_call.1} parent=11 // pred_region
          %s457 = ssub.s32 64, 64
          %458 = vsyncadd [#allocation7], %s457
          %s459 = smul.addr %s42, 64
          %s460 = scalar_lea.hbm %s2, %s459
          %s462 = sshll.u32 [#allocation8], 4
          %s463 = int_to_ptr.vmem [resolvable:$true] %s462
          %465 = dma.hbm_to_vmem [thread:$0]  %s460, 64, %s463, [#allocation7]
        $region20: #{tpu_custom_call.1} parent=11 // pred_fallthru
          _
        // Predicated region
        $region21: #{tpu_custom_call.1} parent=11 // pred_check
          %p466 = pneg %p151
        $region22: #{tpu_custom_call.1} parent=11 // pred_check_branch
          %468 = sbr.rel (%p466) target = $region24
        $region23: #{tpu_custom_call.1} parent=11 // pred_region
          %p469 = scmp.lt.s32.totalorder %s42, 1
          %s470 = scalar_select %p469, %s42, 1
          %s471 = scalar_lea.vmem %s3, %s470
        $region24: #{tpu_custom_call.1} parent=11 // pred_fallthru
          _
        // Predicated region
        $region25: #{tpu_custom_call.1} parent=11 // pred_check
          %p472 = pneg %p177
        $region26: #{tpu_custom_call.1} parent=11 // pred_check_branch
          %474 = sbr.rel (%p472) target = $region28
        $region27: #{tpu_custom_call.1} parent=11 // pred_region
          %s476 = ssub.s32 16, 16
          %477 = vsyncadd [#allocation10], %s476
          %s478 = smul.addr %s42, 16
          %s479 = scalar_lea.hbm %s4, %s478
          %s481 = sshll.u32 [#allocation9], 4
          %s482 = int_to_ptr.vmem [resolvable:$true] %s481
          %484 = dma.hbm_to_vmem [thread:$0]  %s479, 16, %s482, [#allocation10]
        $region28: #{tpu_custom_call.1} parent=11 // pred_fallthru
          _
        // Predicated region
        $region29: #{tpu_custom_call.1} parent=11 // pred_check
          %p485 = pneg %p198
        $region30: #{tpu_custom_call.1} parent=11 // pred_check_branch
          %487 = sbr.rel (%p485) target = $region32
        $region31: #{tpu_custom_call.1} parent=11 // pred_region
          _
        $region32: #{tpu_custom_call.1} parent=11 // pred_fallthru
          _
        // Predicated region
        $region33: #{tpu_custom_call.1} parent=11 // pred_check
          %p488 = pneg %p219
        $region34: #{tpu_custom_call.1} parent=11 // pred_check_branch
          %490 = sbr.rel (%p488) target = $region36
        $region35: #{tpu_custom_call.1} parent=11 // pred_region
          %s492 = ssub.s32 16, 16
          %493 = vsyncadd [#allocation10], %s492
          %s495 = sshll.u32 [#allocation11], 4
          %s496 = int_to_ptr.vmem [resolvable:$true] %s495
          %498 = dma.hbm_to_vmem [thread:$0]  %s6, 16, %s496, [#allocation10]
        $region36: #{tpu_custom_call.1} parent=11 // pred_fallthru
          _
        // Predicated region
        $region37: #{tpu_custom_call.1} parent=11 // pred_check
          %p499 = pneg %p240
        $region38: #{tpu_custom_call.1} parent=11 // pred_check_branch
          %501 = sbr.rel (%p499) target = $region40
        $region39: #{tpu_custom_call.1} parent=11 // pred_region
          %s503 = ssub.s32 256, 256
          %504 = vsyncadd [#allocation13], %s503
          %s505 = sshll.u32 [#allocation12], 4
          %s506 = int_to_ptr.vmem [resolvable:$true] %s505
          %511 = dma.hbm_to_vmem [thread:$0]  %s7, 256, %s506, [#allocation13], 64, 64, 4
        $region40: #{tpu_custom_call.1} parent=11 // pred_fallthru
          _
        // Predicated region
        $region41: #{tpu_custom_call.1} parent=11 // pred_check
          %p512 = pneg %p261
        $region42: #{tpu_custom_call.1} parent=11 // pred_check_branch
          %514 = sbr.rel (%p512) target = $region44
        $region43: #{tpu_custom_call.1} parent=11 // pred_region
          %s516 = ssub.s32 16, 16
          %517 = vsyncadd [#allocation13], %s516
          %s519 = sshll.u32 [#allocation14], 4
          %s520 = int_to_ptr.vmem [resolvable:$true] %s519
          %522 = dma.hbm_to_vmem [thread:$0]  %s8, 16, %s520, [#allocation13]
        $region44: #{tpu_custom_call.1} parent=11 // pred_fallthru
          _
        // Predicated region
        $region45: #{tpu_custom_call.1} parent=11 // pred_check
          %p523 = pneg %p282
        $region46: #{tpu_custom_call.1} parent=11 // pred_check_branch
          %525 = sbr.rel (%p523) target = $region48
        $region47: #{tpu_custom_call.1} parent=11 // pred_region
          _
        $region48: #{tpu_custom_call.1} parent=11 // pred_fallthru
          _
        // Predicated region
        $region49: #{tpu_custom_call.1} parent=11 // pred_check
          %p526 = pneg %p303
        $region50: #{tpu_custom_call.1} parent=11 // pred_check_branch
          %528 = sbr.rel (%p526) target = $region52
        $region51: #{tpu_custom_call.1} parent=11 // pred_region
          _
        $region52: #{tpu_custom_call.1} parent=11 // pred_fallthru
          _
        // Predicated region
        $region53: #{tpu_custom_call.1} parent=11 // pred_check
          %p529 = pneg %p324
        $region54: #{tpu_custom_call.1} parent=11 // pred_check_branch
          %531 = sbr.rel (%p529) target = $region56
        $region55: #{tpu_custom_call.1} parent=11 // pred_region
          %s533 = ssub.s32 256, 256
          %534 = vsyncadd [#allocation16], %s533
          %s535 = sshll.u32 [#allocation15], 4
          %s536 = int_to_ptr.vmem [resolvable:$true] %s535
          %541 = dma.hbm_to_vmem [thread:$0]  %s11, 256, %s536, [#allocation16], 64, 64, 4
        $region56: #{tpu_custom_call.1} parent=11 // pred_fallthru
          _
        // Predicated region
        $region57: #{tpu_custom_call.1} parent=11 // pred_check
          %p542 = pneg %p345
        $region58: #{tpu_custom_call.1} parent=11 // pred_check_branch
          %544 = sbr.rel (%p542) target = $region60
        $region59: #{tpu_custom_call.1} parent=11 // pred_region
          _
        $region60: #{tpu_custom_call.1} parent=11 // pred_fallthru
          _
      $region12: #{tpu_custom_call.1} parent=5 // pred_fallthru
        _
      %p545 = scmp.lt.s32.totalorder %s33, 2
      // Predicated region
      $region61: #{tpu_custom_call.1} parent=5 // pred_check
        %p546 = pneg %p545
      $region62: #{tpu_custom_call.1} parent=5 // pred_check_branch
        %548 = sbr.rel (%p546) target = $region64
      $region63: #{tpu_custom_call.1} parent=5 // pred_region
        // Predicated region
        $region65: #{tpu_custom_call.1} parent=63 // pred_check
          %p549 = pneg %p67
        $region66: #{tpu_custom_call.1} parent=63 // pred_check_branch
          %551 = sbr.rel (%p549) target = $region68
        $region67: #{tpu_custom_call.1} parent=63 // pred_region
          %s552 = sand.u32 %s57, 1
          %s553 = scalar_lea.sflag [#allocation4], %s552
          %s554 = sand.u32 %s57, 1
          %s555 = smul.addr %s554, 4
          %s556 = scalar_lea.vmem [#allocation3], %s555
          %s558 = ssub.s32 64, 64
          %559 = vsyncadd %s553, %s558
          %s560 = sadd.s32 %s41, %s40
          %s561 = smul.addr %s560, 64
          %s562 = scalar_lea.hbm %s0, %s561
          %s564 = sshll.u32 %s556, 4
          %s565 = int_to_ptr.vmem [resolvable:$true] %s564
          %567 = dma.hbm_to_vmem [thread:$0]  %s562, 64, %s565, %s553
        $region68: #{tpu_custom_call.1} parent=63 // pred_fallthru
          _
      $region64: #{tpu_custom_call.1} parent=5 // pred_fallthru
        _
      %p568 = scmp.le.s32.totalorder 1, %s33
      %p569 = scmp.lt.s32.totalorder %s33, 3
      %p570 = pnand %p568, %p569
      %p571 = pneg %p570
      // Predicated region
      $region69: #{tpu_custom_call.1} parent=5 // pred_check
        _
      $region70: #{tpu_custom_call.1} parent=5 // pred_check_branch
        %573 = sbr.rel (%p570) target = $region72
      $region71: #{tpu_custom_call.1} parent=5 // pred_region
        %s574 = ssub.s32 %s33, 1
        %s575 = sand.u32 %s60, 1
        %s576 = scalar_lea.sflag [#allocation4], %s575
        %s577 = sand.u32 %s60, 1
        %s578 = smul.addr %s577, 4
        %s579 = scalar_lea.vmem [#allocation3], %s578
        // Predicated region
        $region73: #{tpu_custom_call.1} parent=71 // pred_check
          %p580 = pneg %p73
        $region74: #{tpu_custom_call.1} parent=71 // pred_check_branch
          %582 = sbr.rel (%p580) target = $region76
        $region75: #{tpu_custom_call.1} parent=71 // pred_region
          %583 = dma.done %s576, 64
        $region76: #{tpu_custom_call.1} parent=71 // pred_fallthru
          _
        // Predicated region
        $region77: #{tpu_custom_call.1} parent=71 // pred_check
          %p584 = pneg %p99
        $region78: #{tpu_custom_call.1} parent=71 // pred_check_branch
          %586 = sbr.rel (%p584) target = $region80
        $region79: #{tpu_custom_call.1} parent=71 // pred_region
          %587 = dma.done [#allocation7], 64
        $region80: #{tpu_custom_call.1} parent=71 // pred_fallthru
          _
        // Predicated region
        $region81: #{tpu_custom_call.1} parent=71 // pred_check
          %p588 = pneg %p125
        $region82: #{tpu_custom_call.1} parent=71 // pred_check_branch
          %590 = sbr.rel (%p588) target = $region84
        $region83: #{tpu_custom_call.1} parent=71 // pred_region
          %591 = dma.done [#allocation7], 64
        $region84: #{tpu_custom_call.1} parent=71 // pred_fallthru
          _
        // Predicated region
        $region85: #{tpu_custom_call.1} parent=71 // pred_check
          %p592 = pneg %p177
        $region86: #{tpu_custom_call.1} parent=71 // pred_check_branch
          %594 = sbr.rel (%p592) target = $region88
        $region87: #{tpu_custom_call.1} parent=71 // pred_region
          %595 = dma.done [#allocation10], 16
        $region88: #{tpu_custom_call.1} parent=71 // pred_fallthru
          _
        // Predicated region
        $region89: #{tpu_custom_call.1} parent=71 // pred_check
          %p596 = pneg %p219
        $region90: #{tpu_custom_call.1} parent=71 // pred_check_branch
          %598 = sbr.rel (%p596) target = $region92
        $region91: #{tpu_custom_call.1} parent=71 // pred_region
          %599 = dma.done [#allocation10], 16
        $region92: #{tpu_custom_call.1} parent=71 // pred_fallthru
          _
        // Predicated region
        $region93: #{tpu_custom_call.1} parent=71 // pred_check
          %p600 = pneg %p240
        $region94: #{tpu_custom_call.1} parent=71 // pred_check_branch
          %602 = sbr.rel (%p600) target = $region96
        $region95: #{tpu_custom_call.1} parent=71 // pred_region
          %603 = dma.done [#allocation13], 256
        $region96: #{tpu_custom_call.1} parent=71 // pred_fallthru
          _
        // Predicated region
        $region97: #{tpu_custom_call.1} parent=71 // pred_check
          %p604 = pneg %p261
        $region98: #{tpu_custom_call.1} parent=71 // pred_check_branch
          %606 = sbr.rel (%p604) target = $region100
        $region99: #{tpu_custom_call.1} parent=71 // pred_region
          %607 = dma.done [#allocation13], 16
        $region100: #{tpu_custom_call.1} parent=71 // pred_fallthru
          _
        // Predicated region
        $region101: #{tpu_custom_call.1} parent=71 // pred_check
          %p608 = pneg %p324
        $region102: #{tpu_custom_call.1} parent=71 // pred_check_branch
          %610 = sbr.rel (%p608) target = $region104
        $region103: #{tpu_custom_call.1} parent=71 // pred_region
          %611 = dma.done [#allocation16], 256
        $region104: #{tpu_custom_call.1} parent=71 // pred_fallthru
          _
        %s612 = sand.u32 %s60, 1
        %s613 = scalar_lea.sflag [#allocation4], %s612
        %s614 = sand.u32 %s60, 1
        %s615 = smul.addr %s614, 4
        %s616 = scalar_lea.vmem [#allocation3], %s615
        %p617 = pneg %p73
        %p618 = pneg %p70
        %p619 = pneg %p99
        %p620 = pneg %p96
        %p621 = pneg %p125
        %p622 = pneg %p122
        %p623 = scmp.lt.s32.totalorder %s42, 1
        %s624 = scalar_select %p623, %s42, 1
        %s625 = scalar_lea.vmem %s3, %s624
        %p626 = pneg %p151
        %p627 = pneg %p148
        %p628 = pneg %p177
        %p629 = pneg %p174
        %p630 = pneg %p198
        %p631 = pneg %p195
        %p632 = pneg %p219
        %p633 = pneg %p216
        %p634 = pneg %p240
        %p635 = pneg %p237
        %p636 = pneg %p261
        %p637 = pneg %p258
        %p638 = pneg %p282
        %p639 = pneg %p279
        %p640 = pneg %p303
        %p641 = pneg %p300
        %p642 = pneg %p324
        %p643 = pneg %p321
        %p644 = pneg %p345
        %p645 = pneg %p342
        %p646 = pneg %p373
        %p647 = pneg %p370
        %s648 = sand.u32 %s360, 1
        %s649 = scalar_lea.sflag [#allocation5], %s648
        %s650 = sand.u32 %s360, 1
        %s651 = smul.addr %s650, 4
        %s652 = scalar_lea.vmem [#allocation17], %s651
        %p653 = pneg %p399
        %p654 = pneg %p396
        %p655 = pneg %p425
        %p656 = pneg %p422
        %p657 = scmp.lt.s32.totalorder %s42, 1
        %s658 = scalar_select %p657, %s42, 1
        %s659 = scalar_lea.vmem %s3, %s658
        %p661 = scmp.eq.s32.totalorder %s43, 0
        // Predicated region
        $region105: #{tpu_custom_call.1} parent=71 // pred_check
          %p662 = pneg %p661
        $region106: #{tpu_custom_call.1} parent=71 // pred_check_branch
          %664 = sbr.rel (%p662) target = $region108
        $region107: #{tpu_custom_call.1} parent=71 // pred_region
          %v665 = vld [vmem:[#allocation6] sm:$0xf]
          %v666 = vld [vmem:[#allocation12] sm:$0xf]
          %v667 = vld [vmem:[#allocation12 + $0x4] sm:$0xf]
          %v668 = vld [vmem:[#allocation12 + $0x8] sm:$0xf]
          %v669 = vld [vmem:[#allocation12 + $0xc] sm:$0xf]
          %v670 = vld [vmem:[#allocation14] sm:$0x1]
          %v672 = vlaneseq
          %v673 = vshrl.u32 %v672, 7
          %v674 = vsub.s32 0, %v673
          %v675 = vrot.slane %v670, %v674
          %v681 = vunpack.c.l.b16 %v666
          %v682 = vunpack.c.l.b16 %v667
          %v683 = vunpack.c.l.b16 %v668
          %v684 = vunpack.c.l.b16 %v669
          %v685 = vpack.c.b16 %v682, %v681
          %v686 = vpack.c.b16 %v684, %v683
          %vm689 = vcmask 261120
          %v691 = vsel %vm689, %v665, 0
          %693 = vmatprep.subr.bf16.mxu0 0
          %694 = vmatpush1.bf16.msra.mxu0 %v685
          %695 = vmatprep.subr.bf16.mxu0 0
          %696 = vmatpush1.bf16.msra.mxu0 %v686
          %697 = vmatprep.subr.bf16.mxu0 0
          %698 = vmatpush1.bf16.msra.mxu0 0
          %699 = vmatprep.subr.bf16.mxu0 0
          %700 = vmatpush1.bf16.msra.mxu0 0
          %701 = vmatprep.subr.bf16.mxu0 0
          %702 = vmatpush1.bf16.msra.mxu0 0
          %703 = vmatprep.subr.bf16.mxu0 0
          %704 = vmatpush1.bf16.msra.mxu0 0
          %705 = vmatprep.subr.bf16.mxu0 0
          %706 = vmatpush1.bf16.msra.mxu0 0
          %707 = vmatprep.subr.bf16.mxu0 0
          %708 = vmatpush1.bf16.msra.mxu0 0
          %709 = vmatprep.subr.bf16.mxu0 0
          %710 = vmatpush1.bf16.msra.mxu0 0
          %711 = vmatprep.subr.bf16.mxu0 0
          %712 = vmatpush1.bf16.msra.mxu0 0
          %713 = vmatprep.subr.bf16.mxu0 0
          %714 = vmatpush1.bf16.msra.mxu0 0
          %715 = vmatprep.subr.bf16.mxu0 0
          %716 = vmatpush1.bf16.msra.mxu0 0
          %717 = vmatprep.subr.bf16.mxu0 0
          %718 = vmatpush1.bf16.msra.mxu0 0
          %719 = vmatprep.subr.bf16.mxu0 0
          %720 = vmatpush1.bf16.msra.mxu0 0
          %721 = vmatprep.subr.bf16.mxu0 0
          %722 = vmatpush1.bf16.msra.mxu0 0
          %723 = vmatprep.subr.bf16.mxu0 0
          %724 = vmatpush1.bf16.msra.mxu0 0
          %725 = vmatprep.mubr.bf16.mxu0 0
          %726 = vmatmul.mubr.bf16.gmra.mrb[0].mxu0 %v691
          %v727 = vpop.f32.mrb[0].mxu0
          %v728 = vadd.f32 %v675, %v727
          %v729 = vpop.f32.mrb[0].mxu0
          %v730 = vpop.f32.mrb[0].mxu0
          %v731 = vpop.f32.mrb[0].mxu0
          %732 = vdwg.mxu0
          %v733 = vld [vmem:[#allocation8] sm:$0xf]
          %v734 = vld [vmem:[%s9] sm:$0xf]
          %v735 = vld [vmem:[%s9 + $0x4] sm:$0xf]
          %v736 = vld [vmem:[%s9 + $0x8] sm:$0xf]
          %v737 = vld [vmem:[%s9 + $0xc] sm:$0xf]
          %v738 = vld [vmem:[%s10] sm:$0x1]
          %v740 = vlaneseq
          %v741 = vshrl.u32 %v740, 7
          %v742 = vsub.s32 0, %v741
          %v743 = vrot.slane %v738, %v742
          %v749 = vunpack.c.l.b16 %v734
          %v750 = vunpack.c.l.b16 %v735
          %v751 = vunpack.c.l.b16 %v736
          %v752 = vunpack.c.l.b16 %v737
          %v753 = vpack.c.b16 %v750, %v749
          %v754 = vpack.c.b16 %v752, %v751
          %v758 = vsel %vm689, %v733, 0
          %760 = vmatprep.subr.bf16.mxu0 0
          %761 = vmatpush1.bf16.msra.mxu0 %v753
          %762 = vmatprep.subr.bf16.mxu0 0
          %763 = vmatpush1.bf16.msra.mxu0 %v754
          %764 = vmatprep.subr.bf16.mxu0 0
          %765 = vmatpush1.bf16.msra.mxu0 0
          %766 = vmatprep.subr.bf16.mxu0 0
          %767 = vmatpush1.bf16.msra.mxu0 0
          %768 = vmatprep.subr.bf16.mxu0 0
          %769 = vmatpush1.bf16.msra.mxu0 0
          %770 = vmatprep.subr.bf16.mxu0 0
          %771 = vmatpush1.bf16.msra.mxu0 0
          %772 = vmatprep.subr.bf16.mxu0 0
          %773 = vmatpush1.bf16.msra.mxu0 0
          %774 = vmatprep.subr.bf16.mxu0 0
          %775 = vmatpush1.bf16.msra.mxu0 0
          %776 = vmatprep.subr.bf16.mxu0 0
          %777 = vmatpush1.bf16.msra.mxu0 0
          %778 = vmatprep.subr.bf16.mxu0 0
          %779 = vmatpush1.bf16.msra.mxu0 0
          %780 = vmatprep.subr.bf16.mxu0 0
          %781 = vmatpush1.bf16.msra.mxu0 0
          %782 = vmatprep.subr.bf16.mxu0 0
          %783 = vmatpush1.bf16.msra.mxu0 0
          %784 = vmatprep.subr.bf16.mxu0 0
          %785 = vmatpush1.bf16.msra.mxu0 0
          %786 = vmatprep.subr.bf16.mxu0 0
          %787 = vmatpush1.bf16.msra.mxu0 0
          %788 = vmatprep.subr.bf16.mxu0 0
          %789 = vmatpush1.bf16.msra.mxu0 0
          %790 = vmatprep.subr.bf16.mxu0 0
          %791 = vmatpush1.bf16.msra.mxu0 0
          %792 = vmatprep.mubr.bf16.mxu0 0
          %793 = vmatmul.mubr.bf16.gmra.mrb[0].mxu0 %v758
          %v794 = vpop.f32.mrb[0].mxu0
          %v795 = vadd.f32 %v743, %v794
          %v796 = vpop.f32.mrb[0].mxu0
          %v797 = vpop.f32.mrb[0].mxu0
          %v798 = vpop.f32.mrb[0].mxu0
          %799 = vdwg.mxu0
          %v800 = vpack.c.bf16 %v728, %v728
          %vm801 = vcmask 257024
          %802 = vst.msk [vmem:[#allocation18] sm:$0xf] %vm801, %v800
          %v803 = vpack.c.bf16 %v795, %v795
          %804 = vst.msk [vmem:[#allocation20] sm:$0xf] %vm801, %v803
        $region108: #{tpu_custom_call.1} parent=71 // pred_fallthru
          _
        %v805 = vld [vmem:[%s579] sm:$0xf]
        %v806 = vld [vmem:[%s5] sm:$0xf]
        %v807 = vld [vmem:[%s5 + $0x4] sm:$0xf]
        %v808 = vld [vmem:[%s5 + $0x8] sm:$0xf]
        %v809 = vld [vmem:[%s5 + $0xc] sm:$0xf]
        %v810 = vld [vmem:[#allocation11] sm:$0x1]
        %v812 = vlaneseq
        %v813 = vshrl.u32 %v812, 7
        %v814 = vsub.s32 0, %v813
        %v815 = vrot.slane %v810, %v814
        %v821 = vunpack.c.l.b16 %v806
        %v822 = vunpack.c.l.b16 %v807
        %v823 = vunpack.c.l.b16 %v808
        %v824 = vunpack.c.l.b16 %v809
        %v825 = vpack.c.b16 %v822, %v821
        %v826 = vpack.c.b16 %v824, %v823
        %vm829 = vcmask 261120
        %v831 = vsel %vm829, %v805, 0
        %833 = vmatprep.subr.bf16.mxu0 0
        %834 = vmatpush1.bf16.msra.mxu0 %v825
        %835 = vmatprep.subr.bf16.mxu0 0
        %836 = vmatpush1.bf16.msra.mxu0 %v826
        %837 = vmatprep.subr.bf16.mxu0 0
        %838 = vmatpush1.bf16.msra.mxu0 0
        %839 = vmatprep.subr.bf16.mxu0 0
        %840 = vmatpush1.bf16.msra.mxu0 0
        %841 = vmatprep.subr.bf16.mxu0 0
        %842 = vmatpush1.bf16.msra.mxu0 0
        %843 = vmatprep.subr.bf16.mxu0 0
        %844 = vmatpush1.bf16.msra.mxu0 0
        %845 = vmatprep.subr.bf16.mxu0 0
        %846 = vmatpush1.bf16.msra.mxu0 0
        %847 = vmatprep.subr.bf16.mxu0 0
        %848 = vmatpush1.bf16.msra.mxu0 0
        %849 = vmatprep.subr.bf16.mxu0 0
        %850 = vmatpush1.bf16.msra.mxu0 0
        %851 = vmatprep.subr.bf16.mxu0 0
        %852 = vmatpush1.bf16.msra.mxu0 0
        %853 = vmatprep.subr.bf16.mxu0 0
        %854 = vmatpush1.bf16.msra.mxu0 0
        %855 = vmatprep.subr.bf16.mxu0 0
        %856 = vmatpush1.bf16.msra.mxu0 0
        %857 = vmatprep.subr.bf16.mxu0 0
        %858 = vmatpush1.bf16.msra.mxu0 0
        %859 = vmatprep.subr.bf16.mxu0 0
        %860 = vmatpush1.bf16.msra.mxu0 0
        %861 = vmatprep.subr.bf16.mxu0 0
        %862 = vmatpush1.bf16.msra.mxu0 0
        %863 = vmatprep.subr.bf16.mxu0 0
        %864 = vmatpush1.bf16.msra.mxu0 0
        %865 = vmatprep.mubr.bf16.mxu0 0
        %866 = vmatmul.mubr.bf16.gmra.mrb[0].mxu0 %v831
        %v867 = vpop.f32.mrb[0].mxu0
        %v868 = vadd.f32 %v815, %v867
        %v869 = vpop.f32.mrb[0].mxu0
        %v870 = vpop.f32.mrb[0].mxu0
        %v871 = vpop.f32.mrb[0].mxu0
        %872 = vdwg.mxu0
        %v873 = vmul.f32 %v868, 0.35355338
        %v874 = vpack.c.bf16 %v873, %v873
        %v875 = vld [vmem:[%s659] sm:$0x1]
        %v876 = vld [vmem:[#allocation9] sm:$0x1]
        %v877 = vld [vmem:[#allocation18] sm:$0xf]
        %v878 = vld [vmem:[#allocation20] sm:$0xf]
        %v880 = vlaneseq
        %v881 = vshrl.u32 %v880, 7
        %v882 = vsub.s32 0, %v881
        %v883 = vrot.slane %v875, %v882
        %vm885 = vcmask 64512
        %v887 = vsel %vm885, %v874, 0
        %v890 = vsel %vm885, %v877, 0
        %892 = vmatprep.subr.bf16.mxu0 0
        %893 = vmatpush1.bf16.xpose.msra.mxu0 %v890
        %894 = vmatprep.subr.bf16.mxu0 0
        %895 = vmatpush1.bf16.xpose.msra.mxu0 0
        %896 = vmatprep.subr.bf16.mxu0 0
        %897 = vmatpush1.bf16.xpose.msra.mxu0 0
        %898 = vmatprep.subr.bf16.mxu0 0
        %899 = vmatpush1.bf16.xpose.msra.mxu0 0
        %900 = vmatprep.subr.bf16.mxu0 0
        %901 = vmatpush1.bf16.xpose.msra.mxu0 0
        %902 = vmatprep.subr.bf16.mxu0 0
        %903 = vmatpush1.bf16.xpose.msra.mxu0 0
        %904 = vmatprep.subr.bf16.mxu0 0
        %905 = vmatpush1.bf16.xpose.msra.mxu0 0
        %906 = vmatprep.subr.bf16.mxu0 0
        %907 = vmatpush1.bf16.xpose.msra.mxu0 0
        %908 = vmatprep.subr.bf16.mxu0 0
        %909 = vmatpush1.bf16.xpose.msra.mxu0 0
        %910 = vmatprep.subr.bf16.mxu0 0
        %911 = vmatpush1.bf16.xpose.msra.mxu0 0
        %912 = vmatprep.subr.bf16.mxu0 0
        %913 = vmatpush1.bf16.xpose.msra.mxu0 0
        %914 = vmatprep.subr.bf16.mxu0 0
        %915 = vmatpush1.bf16.xpose.msra.mxu0 0
        %916 = vmatprep.subr.bf16.mxu0 0
        %917 = vmatpush1.bf16.xpose.msra.mxu0 0
        %918 = vmatprep.subr.bf16.mxu0 0
        %919 = vmatpush1.bf16.xpose.msra.mxu0 0
        %920 = vmatprep.subr.bf16.mxu0 0
        %921 = vmatpush1.bf16.xpose.msra.mxu0 0
        %922 = vmatprep.subr.bf16.mxu0 0
        %923 = vmatpush1.bf16.xpose.msra.mxu0 0
        %924 = vmatprep.mubr.bf16.mxu0 0
        %925 = vmatmul.mubr.bf16.gmra.mrb[0].mxu0 %v887
        %v926 = vpop.f32.mrb[0].mxu0
        %v927 = vadd.f32 %v883, %v926
        %v928 = vpop.f32.mrb[0].mxu0
        %v929 = vpop.f32.mrb[0].mxu0
        %v930 = vpop.f32.mrb[0].mxu0
        %931 = vdwg.mxu0
        %v932 = vsel %vm885, %v927, -inf
        %933 = vmax.xlane.f32.xlu0 %v932
        %v934 = vpop.xlane.xlu0 %933
        %v935 = vsub.f32 %v927, %v934
        %v936 = vmul.f32 %v935, 1.442695
        %v937 = vpow.pop %v936
        %v938 = vsel %vm885, %v937, 0.0
        %939 = vadd.xlane.f32.xlu0 %v938
        %v940 = vpop.xlane.xlu0 %939
        %v941 = vrcp.pop %v940
        %v942 = vmul.f32 %v937, %v941
        %v944 = vlaneseq
        %v945 = vshrl.u32 %v944, 7
        %v946 = vsub.s32 0, %v945
        %v947 = vrot.slane %v876, %v946
        %v949 = vmul.f32 %v942, %v947
        %v950 = vpack.c.bf16 %v949, %v949
        %v952 = vsel %vm885, %v950, 0
        %vm954 = vcmask 1043456
        %v956 = vsel %vm954, %v878, 0
        %958 = vmatprep.subr.bf16.mxu0 0
        %959 = vmatpush1.bf16.msra.mxu0 %v956
        %960 = vmatprep.subr.bf16.mxu0 0
        %961 = vmatpush1.bf16.msra.mxu0 0
        %962 = vmatprep.subr.bf16.mxu0 0
        %963 = vmatpush1.bf16.msra.mxu0 0
        %964 = vmatprep.subr.bf16.mxu0 0
        %965 = vmatpush1.bf16.msra.mxu0 0
        %966 = vmatprep.subr.bf16.mxu0 0
        %967 = vmatpush1.bf16.msra.mxu0 0
        %968 = vmatprep.subr.bf16.mxu0 0
        %969 = vmatpush1.bf16.msra.mxu0 0
        %970 = vmatprep.subr.bf16.mxu0 0
        %971 = vmatpush1.bf16.msra.mxu0 0
        %972 = vmatprep.subr.bf16.mxu0 0
        %973 = vmatpush1.bf16.msra.mxu0 0
        %974 = vmatprep.subr.bf16.mxu0 0
        %975 = vmatpush1.bf16.msra.mxu0 0
        %976 = vmatprep.subr.bf16.mxu0 0
        %977 = vmatpush1.bf16.msra.mxu0 0
        %978 = vmatprep.subr.bf16.mxu0 0
        %979 = vmatpush1.bf16.msra.mxu0 0
        %980 = vmatprep.subr.bf16.mxu0 0
        %981 = vmatpush1.bf16.msra.mxu0 0
        %982 = vmatprep.subr.bf16.mxu0 0
        %983 = vmatpush1.bf16.msra.mxu0 0
        %984 = vmatprep.subr.bf16.mxu0 0
        %985 = vmatpush1.bf16.msra.mxu0 0
        %986 = vmatprep.subr.bf16.mxu0 0
        %987 = vmatpush1.bf16.msra.mxu0 0
        %988 = vmatprep.subr.bf16.mxu0 0
        %989 = vmatpush1.bf16.msra.mxu0 0
        %990 = vmatprep.mubr.bf16.mxu0 0
        %991 = vmatmul.mubr.bf16.gmra.mrb[0].mxu0 %v952
        %v992 = vpop.f32.mrb[0].mxu0
        %v993 = vadd.f32 0.0, %v992
        %v994 = vpop.f32.mrb[0].mxu0
        %v995 = vpop.f32.mrb[0].mxu0
        %v996 = vpop.f32.mrb[0].mxu0
        %997 = vdwg.mxu0
        %v998 = vpack.c.bf16 %v993, %v993
        %vm999 = vcmask 60416
        %1000 = vst.msk [vmem:[#allocation2] sm:$0xf] %vm999, %v998
        %v1001 = vld [vmem:[#allocation18] sm:$0xf]
        %v1002 = vld [vmem:[#allocation20] sm:$0xf]
        %1004 = vrot.lane.b32.xlu0 %v874, 120
        %v1005 = vpop.permute.xlu0 %1004
        %v1007 = vunpack.c.l.b16 %v1001
        %v1008 = vpack.c.b16 %v1007, %v1007
        %1009 = vrot.lane.b32.xlu0 %v1008, 120
        %v1010 = vpop.permute.xlu0 %1009
        %v1012 = vsel %vm885, %v1005, 0
        %v1015 = vsel %vm885, %v1010, 0
        %1017 = vmatprep.subr.bf16.mxu0 0
        %1018 = vmatpush1.bf16.xpose.msra.mxu0 %v1015
        %1019 = vmatprep.subr.bf16.mxu0 0
        %1020 = vmatpush1.bf16.xpose.msra.mxu0 0
        %1021 = vmatprep.subr.bf16.mxu0 0
        %1022 = vmatpush1.bf16.xpose.msra.mxu0 0
        %1023 = vmatprep.subr.bf16.mxu0 0
        %1024 = vmatpush1.bf16.xpose.msra.mxu0 0
        %1025 = vmatprep.subr.bf16.mxu0 0
        %1026 = vmatpush1.bf16.xpose.msra.mxu0 0
        %1027 = vmatprep.subr.bf16.mxu0 0
        %1028 = vmatpush1.bf16.xpose.msra.mxu0 0
        %1029 = vmatprep.subr.bf16.mxu0 0
        %1030 = vmatpush1.bf16.xpose.msra.mxu0 0
        %1031 = vmatprep.subr.bf16.mxu0 0
        %1032 = vmatpush1.bf16.xpose.msra.mxu0 0
        %1033 = vmatprep.subr.bf16.mxu0 0
        %1034 = vmatpush1.bf16.xpose.msra.mxu0 0
        %1035 = vmatprep.subr.bf16.mxu0 0
        %1036 = vmatpush1.bf16.xpose.msra.mxu0 0
        %1037 = vmatprep.subr.bf16.mxu0 0
        %1038 = vmatpush1.bf16.xpose.msra.mxu0 0
        %1039 = vmatprep.subr.bf16.mxu0 0
        %1040 = vmatpush1.bf16.xpose.msra.mxu0 0
        %1041 = vmatprep.subr.bf16.mxu0 0
        %1042 = vmatpush1.bf16.xpose.msra.mxu0 0
        %1043 = vmatprep.subr.bf16.mxu0 0
        %1044 = vmatpush1.bf16.xpose.msra.mxu0 0
        %1045 = vmatprep.subr.bf16.mxu0 0
        %1046 = vmatpush1.bf16.xpose.msra.mxu0 0
        %1047 = vmatprep.subr.bf16.mxu0 0
        %1048 = vmatpush1.bf16.xpose.msra.mxu0 0
        %1049 = vmatprep.mubr.bf16.mxu0 0
        %1050 = vmatmul.mubr.bf16.gmra.mrb[0].mxu0 %v1012
        %v1051 = vpop.f32.mrb[0].mxu0
        %v1052 = vadd.f32 %v883, %v1051
        %v1053 = vpop.f32.mrb[0].mxu0
        %v1054 = vpop.f32.mrb[0].mxu0
        %v1055 = vpop.f32.mrb[0].mxu0
        %1056 = vdwg.mxu0
        %v1057 = vsel %vm885, %v1052, -inf
        %1058 = vmax.xlane.f32.xlu0 %v1057
        %v1059 = vpop.xlane.xlu0 %1058
        %v1060 = vsub.f32 %v1052, %v1059
        %v1061 = vmul.f32 %v1060, 1.442695
        %v1062 = vpow.pop %v1061
        %v1063 = vsel %vm885, %v1062, 0.0
        %1064 = vadd.xlane.f32.xlu0 %v1063
        %v1065 = vpop.xlane.xlu0 %1064
        %v1066 = vrcp.pop %v1065
        %v1067 = vmul.f32 %v1062, %v1066
        %v1068 = vmul.f32 %v1067, %v947
        %v1069 = vpack.c.bf16 %v1068, %v1068
        %v1071 = vunpack.c.l.b16 %v1002
        %v1072 = vpack.c.b16 %v1071, %v1071
        %1073 = vrot.lane.b32.xlu0 %v1072, 120
        %v1074 = vpop.permute.xlu0 %1073
        %v1076 = vsel %vm885, %v1069, 0
        %v1079 = vsel %vm954, %v1074, 0
        %1081 = vmatprep.subr.bf16.mxu0 0
        %1082 = vmatpush1.bf16.msra.mxu0 %v1079
        %1083 = vmatprep.subr.bf16.mxu0 0
        %1084 = vmatpush1.bf16.msra.mxu0 0
        %1085 = vmatprep.subr.bf16.mxu0 0
        %1086 = vmatpush1.bf16.msra.mxu0 0
        %1087 = vmatprep.subr.bf16.mxu0 0
        %1088 = vmatpush1.bf16.msra.mxu0 0
        %1089 = vmatprep.subr.bf16.mxu0 0
        %1090 = vmatpush1.bf16.msra.mxu0 0
        %1091 = vmatprep.subr.bf16.mxu0 0
        %1092 = vmatpush1.bf16.msra.mxu0 0
        %1093 = vmatprep.subr.bf16.mxu0 0
        %1094 = vmatpush1.bf16.msra.mxu0 0
        %1095 = vmatprep.subr.bf16.mxu0 0
        %1096 = vmatpush1.bf16.msra.mxu0 0
        %1097 = vmatprep.subr.bf16.mxu0 0
        %1098 = vmatpush1.bf16.msra.mxu0 0
        %1099 = vmatprep.subr.bf16.mxu0 0
        %1100 = vmatpush1.bf16.msra.mxu0 0
        %1101 = vmatprep.subr.bf16.mxu0 0
        %1102 = vmatpush1.bf16.msra.mxu0 0
        %1103 = vmatprep.subr.bf16.mxu0 0
        %1104 = vmatpush1.bf16.msra.mxu0 0
        %1105 = vmatprep.subr.bf16.mxu0 0
        %1106 = vmatpush1.bf16.msra.mxu0 0
        %1107 = vmatprep.subr.bf16.mxu0 0
        %1108 = vmatpush1.bf16.msra.mxu0 0
        %1109 = vmatprep.subr.bf16.mxu0 0
        %1110 = vmatpush1.bf16.msra.mxu0 0
        %1111 = vmatprep.subr.bf16.mxu0 0
        %1112 = vmatpush1.bf16.msra.mxu0 0
        %1113 = vmatprep.mubr.bf16.mxu0 0
        %1114 = vmatmul.mubr.bf16.gmra.mrb[0].mxu0 %v1076
        %v1115 = vpop.f32.mrb[0].mxu0
        %v1116 = vadd.f32 0.0, %v1115
        %v1117 = vpop.f32.mrb[0].mxu0
        %v1118 = vpop.f32.mrb[0].mxu0
        %v1119 = vpop.f32.mrb[0].mxu0
        %1120 = vdwg.mxu0
        %v1121 = vpack.c.bf16 %v1116, %v1116
        %v1123 = vunpack.c.l.b16 %v1121
        %v1124 = vpack.c.b16 %v1123, %v1123
        %1125 = vrot.lane.b32.xlu0 %v1124, 8
        %v1126 = vpop.permute.xlu0 %1125
        %vm1128 = vcmask 126016
        %1129 = vst.msk [vmem:[#allocation2] sm:$0xf] %vm1128, %v1126
        %v1130 = vld [vmem:[#allocation18] sm:$0xf]
        %v1131 = vld [vmem:[#allocation20] sm:$0xf]
        %1132 = vrot.lane.b32.xlu0 %v874, 112
        %v1133 = vpop.permute.xlu0 %1132
        %v1135 = vunpack.c.l.b16 %v1130
        %v1136 = vpack.c.b16 %v1135, %v1135
        %1137 = vrot.lane.b32.xlu0 %v1136, 112
        %v1138 = vpop.permute.xlu0 %1137
        %v1140 = vsel %vm885, %v1133, 0
        %v1143 = vsel %vm885, %v1138, 0
        %1145 = vmatprep.subr.bf16.mxu0 0
        %1146 = vmatpush1.bf16.xpose.msra.mxu0 %v1143
        %1147 = vmatprep.subr.bf16.mxu0 0
        %1148 = vmatpush1.bf16.xpose.msra.mxu0 0
        %1149 = vmatprep.subr.bf16.mxu0 0
        %1150 = vmatpush1.bf16.xpose.msra.mxu0 0
        %1151 = vmatprep.subr.bf16.mxu0 0
        %1152 = vmatpush1.bf16.xpose.msra.mxu0 0
        %1153 = vmatprep.subr.bf16.mxu0 0
        %1154 = vmatpush1.bf16.xpose.msra.mxu0 0
        %1155 = vmatprep.subr.bf16.mxu0 0
        %1156 = vmatpush1.bf16.xpose.msra.mxu0 0
        %1157 = vmatprep.subr.bf16.mxu0 0
        %1158 = vmatpush1.bf16.xpose.msra.mxu0 0
        %1159 = vmatprep.subr.bf16.mxu0 0
        %1160 = vmatpush1.bf16.xpose.msra.mxu0 0
        %1161 = vmatprep.subr.bf16.mxu0 0
        %1162 = vmatpush1.bf16.xpose.msra.mxu0 0
        %1163 = vmatprep.subr.bf16.mxu0 0
        %1164 = vmatpush1.bf16.xpose.msra.mxu0 0
        %1165 = vmatprep.subr.bf16.mxu0 0
        %1166 = vmatpush1.bf16.xpose.msra.mxu0 0
        %1167 = vmatprep.subr.bf16.mxu0 0
        %1168 = vmatpush1.bf16.xpose.msra.mxu0 0
        %1169 = vmatprep.subr.bf16.mxu0 0
        %1170 = vmatpush1.bf16.xpose.msra.mxu0 0
        %1171 = vmatprep.subr.bf16.mxu0 0
        %1172 = vmatpush1.bf16.xpose.msra.mxu0 0
        %1173 = vmatprep.subr.bf16.mxu0 0
        %1174 = vmatpush1.bf16.xpose.msra.mxu0 0
        %1175 = vmatprep.subr.bf16.mxu0 0
        %1176 = vmatpush1.bf16.xpose.msra.mxu0 0
        %1177 = vmatprep.mubr.bf16.mxu0 0
        %1178 = vmatmul.mubr.bf16.gmra.mrb[0].mxu0 %v1140
        %v1179 = vpop.f32.mrb[0].mxu0
        %v1180 = vadd.f32 %v883, %v1179
        %v1181 = vpop.f32.mrb[0].mxu0
        %v1182 = vpop.f32.mrb[0].mxu0
        %v1183 = vpop.f32.mrb[0].mxu0
        %1184 = vdwg.mxu0
        %v1185 = vsel %vm885, %v1180, -inf
        %1186 = vmax.xlane.f32.xlu0 %v1185
        %v1187 = vpop.xlane.xlu0 %1186
        %v1188 = vsub.f32 %v1180, %v1187
        %v1189 = vmul.f32 %v1188, 1.442695
        %v1190 = vpow.pop %v1189
        %v1191 = vsel %vm885, %v1190, 0.0
        %1192 = vadd.xlane.f32.xlu0 %v1191
        %v1193 = vpop.xlane.xlu0 %1192
        %v1194 = vrcp.pop %v1193
        %v1195 = vmul.f32 %v1190, %v1194
        %v1196 = vmul.f32 %v1195, %v947
        %v1197 = vpack.c.bf16 %v1196, %v1196
        %v1199 = vunpack.c.l.b16 %v1131
        %v1200 = vpack.c.b16 %v1199, %v1199
        %1201 = vrot.lane.b32.xlu0 %v1200, 112
        %v1202 = vpop.permute.xlu0 %1201
        %v1204 = vsel %vm885, %v1197, 0
        %v1207 = vsel %vm954, %v1202, 0
        %1209 = vmatprep.subr.bf16.mxu0 0
        %1210 = vmatpush1.bf16.msra.mxu0 %v1207
        %1211 = vmatprep.subr.bf16.mxu0 0
        %1212 = vmatpush1.bf16.msra.mxu0 0
        %1213 = vmatprep.subr.bf16.mxu0 0
        %1214 = vmatpush1.bf16.msra.mxu0 0
        %1215 = vmatprep.subr.bf16.mxu0 0
        %1216 = vmatpush1.bf16.msra.mxu0 0
        %1217 = vmatprep.subr.bf16.mxu0 0
        %1218 = vmatpush1.bf16.msra.mxu0 0
        %1219 = vmatprep.subr.bf16.mxu0 0
        %1220 = vmatpush1.bf16.msra.mxu0 0
        %1221 = vmatprep.subr.bf16.mxu0 0
        %1222 = vmatpush1.bf16.msra.mxu0 0
        %1223 = vmatprep.subr.bf16.mxu0 0
        %1224 = vmatpush1.bf16.msra.mxu0 0
        %1225 = vmatprep.subr.bf16.mxu0 0
        %1226 = vmatpush1.bf16.msra.mxu0 0
        %1227 = vmatprep.subr.bf16.mxu0 0
        %1228 = vmatpush1.bf16.msra.mxu0 0
        %1229 = vmatprep.subr.bf16.mxu0 0
        %1230 = vmatpush1.bf16.msra.mxu0 0
        %1231 = vmatprep.subr.bf16.mxu0 0
        %1232 = vmatpush1.bf16.msra.mxu0 0
        %1233 = vmatprep.subr.bf16.mxu0 0
        %1234 = vmatpush1.bf16.msra.mxu0 0
        %1235 = vmatprep.subr.bf16.mxu0 0
        %1236 = vmatpush1.bf16.msra.mxu0 0
        %1237 = vmatprep.subr.bf16.mxu0 0
        %1238 = vmatpush1.bf16.msra.mxu0 0
        %1239 = vmatprep.subr.bf16.mxu0 0
        %1240 = vmatpush1.bf16.msra.mxu0 0
        %1241 = vmatprep.mubr.bf16.mxu0 0
        %1242 = vmatmul.mubr.bf16.gmra.mrb[0].mxu0 %v1204
        %v1243 = vpop.f32.mrb[0].mxu0
        %v1244 = vadd.f32 0.0, %v1243
        %v1245 = vpop.f32.mrb[0].mxu0
        %v1246 = vpop.f32.mrb[0].mxu0
        %v1247 = vpop.f32.mrb[0].mxu0
        %1248 = vdwg.mxu0
        %v1249 = vpack.c.bf16 %v1244, %v1244
        %v1251 = vunpack.c.l.b16 %v1249
        %v1252 = vpack.c.b16 %v1251, %v1251
        %1253 = vrot.lane.b32.xlu0 %v1252, 16
        %v1254 = vpop.permute.xlu0 %1253
        %vm1256 = vcmask 191616
        %1257 = vst.msk [vmem:[#allocation2] sm:$0xf] %vm1256, %v1254
        %v1258 = vld [vmem:[#allocation18] sm:$0xf]
        %v1259 = vld [vmem:[#allocation20] sm:$0xf]
        %1260 = vrot.lane.b32.xlu0 %v874, 104
        %v1261 = vpop.permute.xlu0 %1260
        %v1263 = vunpack.c.l.b16 %v1258
        %v1264 = vpack.c.b16 %v1263, %v1263
        %1265 = vrot.lane.b32.xlu0 %v1264, 104
        %v1266 = vpop.permute.xlu0 %1265
        %v1268 = vsel %vm885, %v1261, 0
        %v1271 = vsel %vm885, %v1266, 0
        %1273 = vmatprep.subr.bf16.mxu0 0
        %1274 = vmatpush1.bf16.xpose.msra.mxu0 %v1271
        %1275 = vmatprep.subr.bf16.mxu0 0
        %1276 = vmatpush1.bf16.xpose.msra.mxu0 0
        %1277 = vmatprep.subr.bf16.mxu0 0
        %1278 = vmatpush1.bf16.xpose.msra.mxu0 0
        %1279 = vmatprep.subr.bf16.mxu0 0
        %1280 = vmatpush1.bf16.xpose.msra.mxu0 0
        %1281 = vmatprep.subr.bf16.mxu0 0
        %1282 = vmatpush1.bf16.xpose.msra.mxu0 0
        %1283 = vmatprep.subr.bf16.mxu0 0
        %1284 = vmatpush1.bf16.xpose.msra.mxu0 0
        %1285 = vmatprep.subr.bf16.mxu0 0
        %1286 = vmatpush1.bf16.xpose.msra.mxu0 0
        %1287 = vmatprep.subr.bf16.mxu0 0
        %1288 = vmatpush1.bf16.xpose.msra.mxu0 0
        %1289 = vmatprep.subr.bf16.mxu0 0
        %1290 = vmatpush1.bf16.xpose.msra.mxu0 0
        %1291 = vmatprep.subr.bf16.mxu0 0
        %1292 = vmatpush1.bf16.xpose.msra.mxu0 0
        %1293 = vmatprep.subr.bf16.mxu0 0
        %1294 = vmatpush1.bf16.xpose.msra.mxu0 0
        %1295 = vmatprep.subr.bf16.mxu0 0
        %1296 = vmatpush1.bf16.xpose.msra.mxu0 0
        %1297 = vmatprep.subr.bf16.mxu0 0
        %1298 = vmatpush1.bf16.xpose.msra.mxu0 0
        %1299 = vmatprep.subr.bf16.mxu0 0
        %1300 = vmatpush1.bf16.xpose.msra.mxu0 0
        %1301 = vmatprep.subr.bf16.mxu0 0
        %1302 = vmatpush1.bf16.xpose.msra.mxu0 0
        %1303 = vmatprep.subr.bf16.mxu0 0
        %1304 = vmatpush1.bf16.xpose.msra.mxu0 0
        %1305 = vmatprep.mubr.bf16.mxu0 0
        %1306 = vmatmul.mubr.bf16.gmra.mrb[0].mxu0 %v1268
        %v1307 = vpop.f32.mrb[0].mxu0
        %v1308 = vadd.f32 %v883, %v1307
        %v1309 = vpop.f32.mrb[0].mxu0
        %v1310 = vpop.f32.mrb[0].mxu0
        %v1311 = vpop.f32.mrb[0].mxu0
        %1312 = vdwg.mxu0
        %v1313 = vsel %vm885, %v1308, -inf
        %1314 = vmax.xlane.f32.xlu0 %v1313
        %v1315 = vpop.xlane.xlu0 %1314
        %v1316 = vsub.f32 %v1308, %v1315
        %v1317 = vmul.f32 %v1316, 1.442695
        %v1318 = vpow.pop %v1317
        %v1319 = vsel %vm885, %v1318, 0.0
        %1320 = vadd.xlane.f32.xlu0 %v1319
        %v1321 = vpop.xlane.xlu0 %1320
        %v1322 = vrcp.pop %v1321
        %v1323 = vmul.f32 %v1318, %v1322
        %v1324 = vmul.f32 %v1323, %v947
        %v1325 = vpack.c.bf16 %v1324, %v1324
        %v1327 = vunpack.c.l.b16 %v1259
        %v1328 = vpack.c.b16 %v1327, %v1327
        %1329 = vrot.lane.b32.xlu0 %v1328, 104
        %v1330 = vpop.permute.xlu0 %1329
        %v1332 = vsel %vm885, %v1325, 0
        %v1335 = vsel %vm954, %v1330, 0
        %1337 = vmatprep.subr.bf16.mxu0 0
        %1338 = vmatpush1.bf16.msra.mxu0 %v1335
        %1339 = vmatprep.subr.bf16.mxu0 0
        %1340 = vmatpush1.bf16.msra.mxu0 0
        %1341 = vmatprep.subr.bf16.mxu0 0
        %1342 = vmatpush1.bf16.msra.mxu0 0
        %1343 = vmatprep.subr.bf16.mxu0 0
        %1344 = vmatpush1.bf16.msra.mxu0 0
        %1345 = vmatprep.subr.bf16.mxu0 0
        %1346 = vmatpush1.bf16.msra.mxu0 0
        %1347 = vmatprep.subr.bf16.mxu0 0
        %1348 = vmatpush1.bf16.msra.mxu0 0
        %1349 = vmatprep.subr.bf16.mxu0 0
        %1350 = vmatpush1.bf16.msra.mxu0 0
        %1351 = vmatprep.subr.bf16.mxu0 0
        %1352 = vmatpush1.bf16.msra.mxu0 0
        %1353 = vmatprep.subr.bf16.mxu0 0
        %1354 = vmatpush1.bf16.msra.mxu0 0
        %1355 = vmatprep.subr.bf16.mxu0 0
        %1356 = vmatpush1.bf16.msra.mxu0 0
        %1357 = vmatprep.subr.bf16.mxu0 0
        %1358 = vmatpush1.bf16.msra.mxu0 0
        %1359 = vmatprep.subr.bf16.mxu0 0
        %1360 = vmatpush1.bf16.msra.mxu0 0
        %1361 = vmatprep.subr.bf16.mxu0 0
        %1362 = vmatpush1.bf16.msra.mxu0 0
        %1363 = vmatprep.subr.bf16.mxu0 0
        %1364 = vmatpush1.bf16.msra.mxu0 0
        %1365 = vmatprep.subr.bf16.mxu0 0
        %1366 = vmatpush1.bf16.msra.mxu0 0
        %1367 = vmatprep.subr.bf16.mxu0 0
        %1368 = vmatpush1.bf16.msra.mxu0 0
        %1369 = vmatprep.mubr.bf16.mxu0 0
        %1370 = vmatmul.mubr.bf16.gmra.mrb[0].mxu0 %v1332
        %v1371 = vpop.f32.mrb[0].mxu0
        %v1372 = vadd.f32 0.0, %v1371
        %v1373 = vpop.f32.mrb[0].mxu0
        %v1374 = vpop.f32.mrb[0].mxu0
        %v1375 = vpop.f32.mrb[0].mxu0
        %1376 = vdwg.mxu0
        %v1377 = vpack.c.bf16 %v1372, %v1372
        %v1379 = vunpack.c.l.b16 %v1377
        %v1380 = vpack.c.b16 %v1379, %v1379
        %1381 = vrot.lane.b32.xlu0 %v1380, 24
        %v1382 = vpop.permute.xlu0 %1381
        %vm1384 = vcmask 257216
        %1385 = vst.msk [vmem:[#allocation2] sm:$0xf] %vm1384, %v1382
        %v1386 = vld [vmem:[#allocation2] sm:$0xf]
        %v1387 = vld [vmem:[#allocation15] sm:$0xf]
        %v1388 = vld [vmem:[#allocation15 + $0x4] sm:$0xf]
        %v1389 = vld [vmem:[#allocation15 + $0x8] sm:$0xf]
        %v1390 = vld [vmem:[#allocation15 + $0xc] sm:$0xf]
        %v1391 = vld [vmem:[%s12] sm:$0x1]
        %v1393 = vlaneseq
        %v1394 = vshrl.u32 %v1393, 7
        %v1395 = vsub.s32 0, %v1394
        %v1396 = vrot.slane %v1391, %v1395
        %v1402 = vunpack.c.l.b16 %v1387
        %v1403 = vunpack.c.l.b16 %v1388
        %v1404 = vunpack.c.l.b16 %v1389
        %v1405 = vunpack.c.l.b16 %v1390
        %v1406 = vpack.c.b16 %v1403, %v1402
        %v1407 = vpack.c.b16 %v1405, %v1404
        %v1411 = vsel %vm829, %v1386, 0
        %1413 = vmatprep.subr.bf16.mxu0 0
        %1414 = vmatpush1.bf16.msra.mxu0 %v1406
        %1415 = vmatprep.subr.bf16.mxu0 0
        %1416 = vmatpush1.bf16.msra.mxu0 %v1407
        %1417 = vmatprep.subr.bf16.mxu0 0
        %1418 = vmatpush1.bf16.msra.mxu0 0
        %1419 = vmatprep.subr.bf16.mxu0 0
        %1420 = vmatpush1.bf16.msra.mxu0 0
        %1421 = vmatprep.subr.bf16.mxu0 0
        %1422 = vmatpush1.bf16.msra.mxu0 0
        %1423 = vmatprep.subr.bf16.mxu0 0
        %1424 = vmatpush1.bf16.msra.mxu0 0
        %1425 = vmatprep.subr.bf16.mxu0 0
        %1426 = vmatpush1.bf16.msra.mxu0 0
        %1427 = vmatprep.subr.bf16.mxu0 0
        %1428 = vmatpush1.bf16.msra.mxu0 0
        %1429 = vmatprep.subr.bf16.mxu0 0
        %1430 = vmatpush1.bf16.msra.mxu0 0
        %1431 = vmatprep.subr.bf16.mxu0 0
        %1432 = vmatpush1.bf16.msra.mxu0 0
        %1433 = vmatprep.subr.bf16.mxu0 0
        %1434 = vmatpush1.bf16.msra.mxu0 0
        %1435 = vmatprep.subr.bf16.mxu0 0
        %1436 = vmatpush1.bf16.msra.mxu0 0
        %1437 = vmatprep.subr.bf16.mxu0 0
        %1438 = vmatpush1.bf16.msra.mxu0 0
        %1439 = vmatprep.subr.bf16.mxu0 0
        %1440 = vmatpush1.bf16.msra.mxu0 0
        %1441 = vmatprep.subr.bf16.mxu0 0
        %1442 = vmatpush1.bf16.msra.mxu0 0
        %1443 = vmatprep.subr.bf16.mxu0 0
        %1444 = vmatpush1.bf16.msra.mxu0 0
        %1445 = vmatprep.mubr.bf16.mxu0 0
        %1446 = vmatmul.mubr.bf16.gmra.mrb[0].mxu0 %v1411
        %v1447 = vpop.f32.mrb[0].mxu0
        %v1448 = vadd.f32 %v1396, %v1447
        %v1449 = vpop.f32.mrb[0].mxu0
        %v1450 = vpop.f32.mrb[0].mxu0
        %v1451 = vpop.f32.mrb[0].mxu0
        %1452 = vdwg.mxu0
        %v1453 = vpack.c.bf16 %v1448, %v1448
        %vm1454 = vcmask 257024
        %1455 = vst.msk [vmem:[%s652] sm:$0xf] %vm1454, %v1453
        %s1456 = sand.u32 %s360, 1
        %s1457 = scalar_lea.sflag [#allocation5], %s1456
        %s1458 = sand.u32 %s360, 1
        %s1459 = smul.addr %s1458, 4
        %s1460 = scalar_lea.vmem [#allocation17], %s1459
        // Predicated region
        $region109: #{tpu_custom_call.1} parent=71 // pred_check
          %p1461 = pneg %p370
        $region110: #{tpu_custom_call.1} parent=71 // pred_check_branch
          %1463 = sbr.rel (%p1461) target = $region112
        $region111: #{tpu_custom_call.1} parent=71 // pred_region
          %s1465 = ssub.s32 64, 64
          %1466 = vsyncadd %s1457, %s1465
          %s1467 = sadd.s32 %s43, %s42
          %s1468 = smul.addr %s1467, 64
          %s1469 = scalar_lea.hbm %s13, %s1468
          %s1471 = sshll.u32 %s1460, 4
          %s1472 = int_to_ptr.vmem [resolvable:$true] %s1471
          %1474 = dma.vmem_to_hbm [thread:$0]  %s1472, 64, %s1469, %s1457
        $region112: #{tpu_custom_call.1} parent=71 // pred_fallthru
          _
        // Predicated region
        $region113: #{tpu_custom_call.1} parent=71 // pred_check
          %p1475 = pneg %p396
        $region114: #{tpu_custom_call.1} parent=71 // pred_check_branch
          %1477 = sbr.rel (%p1475) target = $region116
        $region115: #{tpu_custom_call.1} parent=71 // pred_region
          %s1479 = ssub.s32 64, 64
          %1480 = vsyncadd [#allocation19], %s1479
          %s1481 = smul.addr %s42, 64
          %s1482 = scalar_lea.hbm %s14, %s1481
          %s1484 = sshll.u32 [#allocation18], 4
          %s1485 = int_to_ptr.vmem [resolvable:$true] %s1484
          %1487 = dma.vmem_to_hbm [thread:$0]  %s1485, 64, %s1482, [#allocation19]
        $region116: #{tpu_custom_call.1} parent=71 // pred_fallthru
          _
        // Predicated region
        $region117: #{tpu_custom_call.1} parent=71 // pred_check
          %p1488 = pneg %p422
        $region118: #{tpu_custom_call.1} parent=71 // pred_check_branch
          %1490 = sbr.rel (%p1488) target = $region120
        $region119: #{tpu_custom_call.1} parent=71 // pred_region
          %s1492 = ssub.s32 64, 64
          %1493 = vsyncadd [#allocation19], %s1492
          %s1494 = smul.addr %s42, 64
          %s1495 = scalar_lea.hbm %s15, %s1494
          %s1497 = sshll.u32 [#allocation20], 4
          %s1498 = int_to_ptr.vmem [resolvable:$true] %s1497
          %1500 = dma.vmem_to_hbm [thread:$0]  %s1498, 64, %s1495, [#allocation19]
        $region120: #{tpu_custom_call.1} parent=71 // pred_fallthru
          _
        // Predicated region
        $region121: #{tpu_custom_call.1} parent=71 // pred_check
          %p1501 = pneg %p396
        $region122: #{tpu_custom_call.1} parent=71 // pred_check_branch
          %1503 = sbr.rel (%p1501) target = $region124
        $region123: #{tpu_custom_call.1} parent=71 // pred_region
          %1504 = dma.done [#allocation19], 64
        $region124: #{tpu_custom_call.1} parent=71 // pred_fallthru
          _
        // Predicated region
        $region125: #{tpu_custom_call.1} parent=71 // pred_check
          %p1505 = pneg %p422
        $region126: #{tpu_custom_call.1} parent=71 // pred_check_branch
          %1507 = sbr.rel (%p1505) target = $region128
        $region127: #{tpu_custom_call.1} parent=71 // pred_region
          %1508 = dma.done [#allocation19], 64
        $region128: #{tpu_custom_call.1} parent=71 // pred_fallthru
          _
      $region72: #{tpu_custom_call.1} parent=5 // pred_fallthru
        _
      %p1509 = scmp.le.s32.totalorder 2, %s33
      // Predicated region
      $region129: #{tpu_custom_call.1} parent=5 // pred_check
        %p1510 = pneg %p1509
      $region130: #{tpu_custom_call.1} parent=5 // pred_check_branch
        %1512 = sbr.rel (%p1510) target = $region132
      $region131: #{tpu_custom_call.1} parent=5 // pred_region
        %s1513 = ssub.s32 %s33, 2
        // Predicated region
        $region133: #{tpu_custom_call.1} parent=131 // pred_check
          %p1514 = pneg %p376
        $region134: #{tpu_custom_call.1} parent=131 // pred_check_branch
          %1516 = sbr.rel (%p1514) target = $region136
        $region135: #{tpu_custom_call.1} parent=131 // pred_region
          %s1517 = sand.u32 %s361, 1
          %s1518 = scalar_lea.sflag [#allocation5], %s1517
          %s1519 = sand.u32 %s361, 1
          %s1520 = smul.addr %s1519, 4
          %s1521 = scalar_lea.vmem [#allocation17], %s1520
          %1522 = dma.done %s1518, 64
        $region136: #{tpu_custom_call.1} parent=131 // pred_fallthru
          _
      $region132: #{tpu_custom_call.1} parent=5 // pred_fallthru
        _
    $region6: #{tpu_custom_call.1} parent=1 // loop_footer
      %s37 = sadd.s32 1, %s33
    $region7: #{tpu_custom_call.1} parent=1 // loop_footer_branch
      %32 = sbr.rel target = $region3
    $region8: #{tpu_custom_call.1} parent=1 // loop_exit
      _
    %1523 = vsyncpa [#allocation4], 1
    %s1524 = scalar_lea.sflag [#allocation4], 1
    %1525 = vsyncpa %s1524, 1
    %1526 = vsyncpa [#allocation7], 1
    %1527 = vsyncpa [#allocation10], 1
    %1528 = vsyncpa [#allocation13], 1
    %1529 = vsyncpa [#allocation16], 1
    %1530 = vsyncpa [#allocation5], 1
    %s1531 = scalar_lea.sflag [#allocation5], 1
    %1532 = vsyncpa %s1531, 1
    %1533 = vsyncpa [#allocation19], 1

// kernel: tpu_custom_call.1
$region0: #{tpu_custom_call.1}
  #allocation0 [shape = 'u32[]', space=smem, size = 0x4, offset = 0x4, fixed_abs, tag = 'smem constant byte address 0x4 - core index']
  #allocation1 [shape = 'u32[144,128]{1,0:T(1,128)}', space=vmem, size = 0x12000, scoped, tag = 'internal scratch']
  #allocation2 [shape = 'bf16[8,32]{1,0:T(8,128)(2,1)}', space=vmem, size = 0x800, scoped, tag = 'scratch operand']
  %s0 = inlined_call_operand.hbm [shape: bf16[2,8,32], index: 0, kind: input, shape index: {}]
  %s1 = inlined_call_operand.hbm [shape: bf16[2,8,32], index: 1, kind: input, shape index: {}]
  %s2 = inlined_call_operand.hbm [shape: bf16[2,8,32], index: 2, kind: input, shape index: {}]
  %s3 = inlined_call_operand.vmem [shape: f32[2,1,8], index: 3, kind: input, shape index: {}]
  %s4 = inlined_call_operand.hbm [shape: f32[2,1,8], index: 4, kind: input, shape index: {}]
  %s5 = inlined_call_operand.vmem [shape: bf16[32,32], index: 5, kind: input, shape index: {}]
  %s6 = inlined_call_operand.hbm [shape: f32[1,32], index: 6, kind: input, shape index: {}]
  %s7 = inlined_call_operand.hbm [shape: bf16[32,32], index: 7, kind: input, shape index: {}]
  %s8 = inlined_call_operand.hbm [shape: f32[1,32], index: 8, kind: input, shape index: {}]
  %s9 = inlined_call_operand.vmem [shape: bf16[32,32], index: 9, kind: input, shape index: {}]
  %s10 = inlined_call_operand.vmem [shape: f32[1,32], index: 10, kind: input, shape index: {}]
  %s11 = inlined_call_operand.hbm [shape: bf16[32,32], index: 11, kind: input, shape index: {}]
  %s12 = inlined_call_operand.vmem [shape: f32[1,32], index: 12, kind: input, shape index: {}]
  %s13 = inlined_call_operand.hbm [shape: bf16[2,8,32], index: 13, kind: output, shape index: {0}]
  %s14 = inlined_call_operand.hbm [shape: bf16[2,8,32], index: 14, kind: output, shape index: {1}]
  %s15 = inlined_call_operand.hbm [shape: bf16[2,8,32], index: 15, kind: output, shape index: {2}]
  %16 = xla_tuple %s13, %s14, %s15
  %s17 = sld [smem:[#allocation0]]
  $region137: #{tpu_custom_call.1} parent=0
    _
  %s19 = ssub.s32 1, %s17
  %s20 = scalar_select 0, %s19, %s17
  $region1: #{tpu_custom_call.1} parent=0
    #allocation3 [shape = 'u8[4096]{0}', space=vmem, size = 0x1000, scoped, tag = 'input window, operand 0']
    #allocation4 [shape = 's32[2]{0}', space=sflag, size = 0x8, scoped, tag = 'scoped memory for tpu_custom_call.1']
    #allocation5 [shape = 's32[2]{0}', space=sflag, size = 0x8, scoped, tag = 'scoped memory for tpu_custom_call.1']
    #allocation6 [shape = 'u8[4096]{0}', space=vmem, size = 0x1000, scoped, tag = 'input window, operand 1']
    #allocation7 [shape = 's32[2]{0}', space=sflag, size = 0x8, scoped, tag = 'scoped memory for tpu_custom_call.1']
    #allocation8 [shape = 'u8[4096]{0}', space=vmem, size = 0x1000, scoped, tag = 'input window, operand 2']
    #allocation9 [shape = 'u8[1024]{0}', space=vmem, size = 0x400, scoped, tag = 'input window, operand 4']
    #allocation10 [shape = 's32[2]{0}', space=sflag, size = 0x8, scoped, tag = 'scoped memory for tpu_custom_call.1']
    #allocation11 [shape = 'u8[512]{0}', space=vmem, size = 0x400, scoped, tag = 'input window, operand 6, single buffered']
    #allocation12 [shape = 'u8[8192]{0}', space=vmem, size = 0x2000, scoped, tag = 'input window, operand 7, single buffered']
    #allocation13 [shape = 's32[1]{0}', space=sflag, size = 0x4, scoped, tag = 'scoped memory for tpu_custom_call.1']
    #allocation14 [shape = 'u8[512]{0}', space=vmem, size = 0x400, scoped, tag = 'input window, operand 8, single buffered']
    #allocation15 [shape = 'u8[8192]{0}', space=vmem, size = 0x2000, scoped, tag = 'input window, operand 11, single buffered']
    #allocation16 [shape = 's32[1]{0}', space=sflag, size = 0x4, scoped, tag = 'scoped memory for tpu_custom_call.1']
    #allocation17 [shape = 'u8[4096]{0}', space=vmem, size = 0x1000, scoped, tag = 'output window, operand 0']
    #allocation18 [shape = 'u8[4096]{0}', space=vmem, size = 0x1000, scoped, tag = 'output window, operand 1']
    #allocation19 [shape = 's32[2]{0}', space=sflag, size = 0x8, scoped, tag = 'scoped memory for tpu_custom_call.1']
    #allocation20 [shape = 'u8[4096]{0}', space=vmem, size = 0x1000, scoped, tag = 'output window, operand 2']
    %21 = vsyncpa [#allocation4], 0
    %s22 = scalar_lea.sflag [#allocation4], 1
    %23 = vsyncpa %s22, 0
    %24 = vsyncpa [#allocation7], 0
    %s25 = scalar_lea.sflag [#allocation7], 1
    %26 = vsyncpa %s25, 0
    %27 = vsyncpa [#allocation10], 0
    %s28 = scalar_lea.sflag [#allocation10], 1
    %29 = vsyncpa %s28, 0
    %30 = vsyncpa [#allocation13], 0
    %31 = vsyncpa [#allocation16], 0
    %32 = vsyncpa [#allocation5], 0
    %s33 = scalar_lea.sflag [#allocation5], 1
    %34 = vsyncpa %s33, 0
    %35 = vsyncpa [#allocation19], 0
    %s36 = scalar_lea.sflag [#allocation19], 1
    %37 = vsyncpa %s36, 0
    loop: start=0, step=1, limit=4
    $region2: #{tpu_custom_call.1} parent=1 // loop_pre_header
      _
    $region3: #{tpu_custom_call.1} parent=1 // loop_header
      %s39 = sphi 0, %s43
      %p40 = scmp.ge.s32.totalorder %s39, 4
      %s46 = sphi 0, %s58
      %s47 = sphi 0, %s54
      %s48 = sphi 0, %s46
      %s49 = sphi 0, %s47
      %s50 = sphi 0, %s48
      %s51 = sphi 0, %s49
      %s63 = sphi 0, %s65
      %s66 = sphi 0, %s63
      %s67 = sphi 0, %s66
      %s83 = sphi 0, %s67
      %s89 = sphi 0, %s91
      %s92 = sphi 0, %s89
      %s93 = sphi 0, %s92
      %s109 = sphi 0, %s93
      %s115 = sphi 0, %s117
      %s118 = sphi 0, %s115
      %s119 = sphi 0, %s118
      %s135 = sphi 0, %s119
      %s141 = sphi 0, %s143
      %s144 = sphi 0, %s141
      %s145 = sphi 0, %s144
      %s161 = sphi 0, %s145
      %s167 = sphi 0, %s169
      %s170 = sphi 0, %s167
      %s171 = sphi 0, %s170
      %s187 = sphi 0, %s171
      %s191 = sphi 0, %s191
      %s193 = sphi 0, %s191
      %s194 = sphi 0, %s193
      %s208 = sphi 0, %s194
      %s212 = sphi 0, %s212
      %s214 = sphi 0, %s212
      %s215 = sphi 0, %s214
      %s229 = sphi 0, %s215
      %s233 = sphi 0, %s233
      %s235 = sphi 0, %s233
      %s236 = sphi 0, %s235
      %s250 = sphi 0, %s236
      %s254 = sphi 0, %s254
      %s256 = sphi 0, %s254
      %s257 = sphi 0, %s256
      %s271 = sphi 0, %s257
      %s275 = sphi 0, %s275
      %s277 = sphi 0, %s275
      %s278 = sphi 0, %s277
      %s292 = sphi 0, %s278
      %s296 = sphi 0, %s296
      %s298 = sphi 0, %s296
      %s299 = sphi 0, %s298
      %s313 = sphi 0, %s299
      %s317 = sphi 0, %s317
      %s319 = sphi 0, %s317
      %s320 = sphi 0, %s319
      %s334 = sphi 0, %s320
      %s338 = sphi 0, %s338
      %s340 = sphi 0, %s338
      %s341 = sphi 0, %s340
      %s355 = sphi 0, %s341
      %s363 = sphi 0, %s365
      %s366 = sphi 0, %s363
      %s367 = sphi 0, %s366
      %s383 = sphi 0, %s367
      %s389 = sphi 0, %s391
      %s392 = sphi 0, %s389
      %s393 = sphi 0, %s392
      %s409 = sphi 0, %s393
      %s415 = sphi 0, %s417
      %s418 = sphi 0, %s415
      %s419 = sphi 0, %s418
      %s435 = sphi 0, %s419
    $region4: #{tpu_custom_call.1} parent=1 // loop_header_branch
      %42 = sbr.rel (%p40) target = $region8
    $region5: #{tpu_custom_call.1} parent=1 // loop_body
      %s44 = ssub.s32 %s39, 1
      %s45 = ssub.s32 %s39, 2
      %s52 = sadd.s32 1, %s47
      %p53 = scmp.ge.s32.totalorder %s52, 1
      %s54 = scalar_select %p53, 0, %s52
      %s55 = sadd.s32 1, %s46
      %s56 = scalar_select %p53, %s55, %s46
      %p57 = scmp.ge.s32.totalorder %s56, 2
      %s58 = scalar_select %p57, 0, %s56
      %s59 = ssub.s32 %s46, %s58
      %s60 = ssub.s32 %s47, %s54
      %s61 = sor.u32 %s59, %s60
      %p62 = scmp.eq.s32.totalorder %s61, 0
      %s64 = sadd.s32 %s63, 1
      %s65 = scalar_select %p62, %s63, %s64
      %p68 = pneg %p62
      %p69 = scmp.eq.s32.totalorder %s39, 1
      %p70 = por %p68, %p69
      %p71 = scmp.ne.s32.totalorder %s63, %s66
      %p72 = scmp.eq.s32.totalorder %s39, 0
      %p73 = por %p71, %p72
      %p74 = scmp.ne.s32.totalorder %s63, %s66
      %p75 = scmp.eq.s32.totalorder %s44, 1
      %p76 = por %p74, %p75
      %p77 = scmp.ne.s32.totalorder %s66, %s67
      %p78 = scmp.eq.s32.totalorder %s44, 0
      %p79 = por %p77, %p78
      %p80 = scmp.ne.s32.totalorder %s66, %s67
      %p81 = scmp.eq.s32.totalorder %s45, 1
      %p82 = por %p80, %p81
      %p84 = scmp.ne.s32.totalorder %s67, %s83
      %p85 = scmp.eq.s32.totalorder %s45, 0
      %p86 = por %p84, %p85
      %s87 = ssub.s32 %s46, %s58
      %p88 = scmp.eq.s32.totalorder %s87, 0
      %s90 = sadd.s32 %s89, 1
      %s91 = scalar_select %p88, %s89, %s90
      %p94 = pneg %p88
      %p95 = scmp.eq.s32.totalorder %s39, 1
      %p96 = por %p94, %p95
      %p97 = scmp.ne.s32.totalorder %s89, %s92
      %p98 = scmp.eq.s32.totalorder %s39, 0
      %p99 = por %p97, %p98
      %p100 = scmp.ne.s32.totalorder %s89, %s92
      %p101 = scmp.eq.s32.totalorder %s44, 1
      %p102 = por %p100, %p101
      %p103 = scmp.ne.s32.totalorder %s92, %s93
      %p104 = scmp.eq.s32.totalorder %s44, 0
      %p105 = por %p103, %p104
      %p106 = scmp.ne.s32.totalorder %s92, %s93
      %p107 = scmp.eq.s32.totalorder %s45, 1
      %p108 = por %p106, %p107
      %p110 = scmp.ne.s32.totalorder %s93, %s109
      %p111 = scmp.eq.s32.totalorder %s45, 0
      %p112 = por %p110, %p111
      %s113 = ssub.s32 %s46, %s58
      %p114 = scmp.eq.s32.totalorder %s113, 0
      %s116 = sadd.s32 %s115, 1
      %s117 = scalar_select %p114, %s115, %s116
      %p120 = pneg %p114
      %p121 = scmp.eq.s32.totalorder %s39, 1
      %p122 = por %p120, %p121
      %p123 = scmp.ne.s32.totalorder %s115, %s118
      %p124 = scmp.eq.s32.totalorder %s39, 0
      %p125 = por %p123, %p124
      %p126 = scmp.ne.s32.totalorder %s115, %s118
      %p127 = scmp.eq.s32.totalorder %s44, 1
      %p128 = por %p126, %p127
      %p129 = scmp.ne.s32.totalorder %s118, %s119
      %p130 = scmp.eq.s32.totalorder %s44, 0
      %p131 = por %p129, %p130
      %p132 = scmp.ne.s32.totalorder %s118, %s119
      %p133 = scmp.eq.s32.totalorder %s45, 1
      %p134 = por %p132, %p133
      %p136 = scmp.ne.s32.totalorder %s119, %s135
      %p137 = scmp.eq.s32.totalorder %s45, 0
      %p138 = por %p136, %p137
      %s139 = ssub.s32 %s46, %s58
      %p140 = scmp.eq.s32.totalorder %s139, 0
      %s142 = sadd.s32 %s141, 1
      %s143 = scalar_select %p140, %s141, %s142
      %p146 = pneg %p140
      %p147 = scmp.eq.s32.totalorder %s39, 1
      %p148 = por %p146, %p147
      %p149 = scmp.ne.s32.totalorder %s141, %s144
      %p150 = scmp.eq.s32.totalorder %s39, 0
      %p151 = por %p149, %p150
      %p152 = scmp.ne.s32.totalorder %s141, %s144
      %p153 = scmp.eq.s32.totalorder %s44, 1
      %p154 = por %p152, %p153
      %p155 = scmp.ne.s32.totalorder %s144, %s145
      %p156 = scmp.eq.s32.totalorder %s44, 0
      %p157 = por %p155, %p156
      %p158 = scmp.ne.s32.totalorder %s144, %s145
      %p159 = scmp.eq.s32.totalorder %s45, 1
      %p160 = por %p158, %p159
      %p162 = scmp.ne.s32.totalorder %s145, %s161
      %p163 = scmp.eq.s32.totalorder %s45, 0
      %p164 = por %p162, %p163
      %s165 = ssub.s32 %s46, %s58
      %p166 = scmp.eq.s32.totalorder %s165, 0
      %s168 = sadd.s32 %s167, 1
      %s169 = scalar_select %p166, %s167, %s168
      %p172 = pneg %p166
      %p173 = scmp.eq.s32.totalorder %s39, 1
      %p174 = por %p172, %p173
      %p175 = scmp.ne.s32.totalorder %s167, %s170
      %p176 = scmp.eq.s32.totalorder %s39, 0
      %p177 = por %p175, %p176
      %p178 = scmp.ne.s32.totalorder %s167, %s170
      %p179 = scmp.eq.s32.totalorder %s44, 1
      %p180 = por %p178, %p179
      %p181 = scmp.ne.s32.totalorder %s170, %s171
      %p182 = scmp.eq.s32.totalorder %s44, 0
      %p183 = por %p181, %p182
      %p184 = scmp.ne.s32.totalorder %s170, %s171
      %p185 = scmp.eq.s32.totalorder %s45, 1
      %p186 = por %p184, %p185
      %p188 = scmp.ne.s32.totalorder %s171, %s187
      %p189 = scmp.eq.s32.totalorder %s45, 0
      %p190 = por %p188, %p189
      %s192 = sadd.s32 %s191, 1
      %p195 = scmp.eq.s32.totalorder %s39, 1
      %p196 = scmp.ne.s32.totalorder %s191, %s193
      %p197 = scmp.eq.s32.totalorder %s39, 0
      %p198 = por %p196, %p197
      %p199 = scmp.ne.s32.totalorder %s191, %s193
      %p200 = scmp.eq.s32.totalorder %s44, 1
      %p201 = por %p199, %p200
      %p202 = scmp.ne.s32.totalorder %s193, %s194
      %p203 = scmp.eq.s32.totalorder %s44, 0
      %p204 = por %p202, %p203
      %p205 = scmp.ne.s32.totalorder %s193, %s194
      %p206 = scmp.eq.s32.totalorder %s45, 1
      %p207 = por %p205, %p206
      %p209 = scmp.ne.s32.totalorder %s194, %s208
      %p210 = scmp.eq.s32.totalorder %s45, 0
      %p211 = por %p209, %p210
      %s213 = sadd.s32 %s212, 1
      %p216 = scmp.eq.s32.totalorder %s39, 1
      %p217 = scmp.ne.s32.totalorder %s212, %s214
      %p218 = scmp.eq.s32.totalorder %s39, 0
      %p219 = por %p217, %p218
      %p220 = scmp.ne.s32.totalorder %s212, %s214
      %p221 = scmp.eq.s32.totalorder %s44, 1
      %p222 = por %p220, %p221
      %p223 = scmp.ne.s32.totalorder %s214, %s215
      %p224 = scmp.eq.s32.totalorder %s44, 0
      %p225 = por %p223, %p224
      %p226 = scmp.ne.s32.totalorder %s214, %s215
      %p227 = scmp.eq.s32.totalorder %s45, 1
      %p228 = por %p226, %p227
      %p230 = scmp.ne.s32.totalorder %s215, %s229
      %p231 = scmp.eq.s32.totalorder %s45, 0
      %p232 = por %p230, %p231
      %s234 = sadd.s32 %s233, 1
      %p237 = scmp.eq.s32.totalorder %s39, 1
      %p238 = scmp.ne.s32.totalorder %s233, %s235
      %p239 = scmp.eq.s32.totalorder %s39, 0
      %p240 = por %p238, %p239
      %p241 = scmp.ne.s32.totalorder %s233, %s235
      %p242 = scmp.eq.s32.totalorder %s44, 1
      %p243 = por %p241, %p242
      %p244 = scmp.ne.s32.totalorder %s235, %s236
      %p245 = scmp.eq.s32.totalorder %s44, 0
      %p246 = por %p244, %p245
      %p247 = scmp.ne.s32.totalorder %s235, %s236
      %p248 = scmp.eq.s32.totalorder %s45, 1
      %p249 = por %p247, %p248
      %p251 = scmp.ne.s32.totalorder %s236, %s250
      %p252 = scmp.eq.s32.totalorder %s45, 0
      %p253 = por %p251, %p252
      %s255 = sadd.s32 %s254, 1
      %p258 = scmp.eq.s32.totalorder %s39, 1
      %p259 = scmp.ne.s32.totalorder %s254, %s256
      %p260 = scmp.eq.s32.totalorder %s39, 0
      %p261 = por %p259, %p260
      %p262 = scmp.ne.s32.totalorder %s254, %s256
      %p263 = scmp.eq.s32.totalorder %s44, 1
      %p264 = por %p262, %p263
      %p265 = scmp.ne.s32.totalorder %s256, %s257
      %p266 = scmp.eq.s32.totalorder %s44, 0
      %p267 = por %p265, %p266
      %p268 = scmp.ne.s32.totalorder %s256, %s257
      %p269 = scmp.eq.s32.totalorder %s45, 1
      %p270 = por %p268, %p269
      %p272 = scmp.ne.s32.totalorder %s257, %s271
      %p273 = scmp.eq.s32.totalorder %s45, 0
      %p274 = por %p272, %p273
      %s276 = sadd.s32 %s275, 1
      %p279 = scmp.eq.s32.totalorder %s39, 1
      %p280 = scmp.ne.s32.totalorder %s275, %s277
      %p281 = scmp.eq.s32.totalorder %s39, 0
      %p282 = por %p280, %p281
      %p283 = scmp.ne.s32.totalorder %s275, %s277
      %p284 = scmp.eq.s32.totalorder %s44, 1
      %p285 = por %p283, %p284
      %p286 = scmp.ne.s32.totalorder %s277, %s278
      %p287 = scmp.eq.s32.totalorder %s44, 0
      %p288 = por %p286, %p287
      %p289 = scmp.ne.s32.totalorder %s277, %s278
      %p290 = scmp.eq.s32.totalorder %s45, 1
      %p291 = por %p289, %p290
      %p293 = scmp.ne.s32.totalorder %s278, %s292
      %p294 = scmp.eq.s32.totalorder %s45, 0
      %p295 = por %p293, %p294
      %s297 = sadd.s32 %s296, 1
      %p300 = scmp.eq.s32.totalorder %s39, 1
      %p301 = scmp.ne.s32.totalorder %s296, %s298
      %p302 = scmp.eq.s32.totalorder %s39, 0
      %p303 = por %p301, %p302
      %p304 = scmp.ne.s32.totalorder %s296, %s298
      %p305 = scmp.eq.s32.totalorder %s44, 1
      %p306 = por %p304, %p305
      %p307 = scmp.ne.s32.totalorder %s298, %s299
      %p308 = scmp.eq.s32.totalorder %s44, 0
      %p309 = por %p307, %p308
      %p310 = scmp.ne.s32.totalorder %s298, %s299
      %p311 = scmp.eq.s32.totalorder %s45, 1
      %p312 = por %p310, %p311
      %p314 = scmp.ne.s32.totalorder %s299, %s313
      %p315 = scmp.eq.s32.totalorder %s45, 0
      %p316 = por %p314, %p315
      %s318 = sadd.s32 %s317, 1
      %p321 = scmp.eq.s32.totalorder %s39, 1
      %p322 = scmp.ne.s32.totalorder %s317, %s319
      %p323 = scmp.eq.s32.totalorder %s39, 0
      %p324 = por %p322, %p323
      %p325 = scmp.ne.s32.totalorder %s317, %s319
      %p326 = scmp.eq.s32.totalorder %s44, 1
      %p327 = por %p325, %p326
      %p328 = scmp.ne.s32.totalorder %s319, %s320
      %p329 = scmp.eq.s32.totalorder %s44, 0
      %p330 = por %p328, %p329
      %p331 = scmp.ne.s32.totalorder %s319, %s320
      %p332 = scmp.eq.s32.totalorder %s45, 1
      %p333 = por %p331, %p332
      %p335 = scmp.ne.s32.totalorder %s320, %s334
      %p336 = scmp.eq.s32.totalorder %s45, 0
      %p337 = por %p335, %p336
      %s339 = sadd.s32 %s338, 1
      %p342 = scmp.eq.s32.totalorder %s39, 1
      %p343 = scmp.ne.s32.totalorder %s338, %s340
      %p344 = scmp.eq.s32.totalorder %s39, 0
      %p345 = por %p343, %p344
      %p346 = scmp.ne.s32.totalorder %s338, %s340
      %p347 = scmp.eq.s32.totalorder %s44, 1
      %p348 = por %p346, %p347
      %p349 = scmp.ne.s32.totalorder %s340, %s341
      %p350 = scmp.eq.s32.totalorder %s44, 0
      %p351 = por %p349, %p350
      %p352 = scmp.ne.s32.totalorder %s340, %s341
      %p353 = scmp.eq.s32.totalorder %s45, 1
      %p354 = por %p352, %p353
      %p356 = scmp.ne.s32.totalorder %s341, %s355
      %p357 = scmp.eq.s32.totalorder %s45, 0
      %p358 = por %p356, %p357
      %s359 = ssub.s32 %s46, %s58
      %s360 = ssub.s32 %s47, %s54
      %s361 = sor.u32 %s359, %s360
      %p362 = scmp.eq.s32.totalorder %s361, 0
      %s364 = sadd.s32 %s363, 1
      %s365 = scalar_select %p362, %s363, %s364
      %p368 = pneg %p362
      %p369 = scmp.eq.s32.totalorder %s39, 1
      %p370 = por %p368, %p369
      %p371 = scmp.ne.s32.totalorder %s363, %s366
      %p372 = scmp.eq.s32.totalorder %s39, 0
      %p373 = por %p371, %p372
      %p374 = scmp.ne.s32.totalorder %s363, %s366
      %p375 = scmp.eq.s32.totalorder %s44, 1
      %p376 = por %p374, %p375
      %p377 = scmp.ne.s32.totalorder %s366, %s367
      %p378 = scmp.eq.s32.totalorder %s44, 0
      %p379 = por %p377, %p378
      %p380 = scmp.ne.s32.totalorder %s366, %s367
      %p381 = scmp.eq.s32.totalorder %s45, 1
      %p382 = por %p380, %p381
      %p384 = scmp.ne.s32.totalorder %s367, %s383
      %p385 = scmp.eq.s32.totalorder %s45, 0
      %p386 = por %p384, %p385
      %s387 = ssub.s32 %s46, %s58
      %p388 = scmp.eq.s32.totalorder %s387, 0
      %s390 = sadd.s32 %s389, 1
      %s391 = scalar_select %p388, %s389, %s390
      %p394 = pneg %p388
      %p395 = scmp.eq.s32.totalorder %s39, 1
      %p396 = por %p394, %p395
      %p397 = scmp.ne.s32.totalorder %s389, %s392
      %p398 = scmp.eq.s32.totalorder %s39, 0
      %p399 = por %p397, %p398
      %p400 = scmp.ne.s32.totalorder %s389, %s392
      %p401 = scmp.eq.s32.totalorder %s44, 1
      %p402 = por %p400, %p401
      %p403 = scmp.ne.s32.totalorder %s392, %s393
      %p404 = scmp.eq.s32.totalorder %s44, 0
      %p405 = por %p403, %p404
      %p406 = scmp.ne.s32.totalorder %s392, %s393
      %p407 = scmp.eq.s32.totalorder %s45, 1
      %p408 = por %p406, %p407
      %p410 = scmp.ne.s32.totalorder %s393, %s409
      %p411 = scmp.eq.s32.totalorder %s45, 0
      %p412 = por %p410, %p411
      %s413 = ssub.s32 %s46, %s58
      %p414 = scmp.eq.s32.totalorder %s413, 0
      %s416 = sadd.s32 %s415, 1
      %s417 = scalar_select %p414, %s415, %s416
      %p420 = pneg %p414
      %p421 = scmp.eq.s32.totalorder %s39, 1
      %p422 = por %p420, %p421
      %p423 = scmp.ne.s32.totalorder %s415, %s418
      %p424 = scmp.eq.s32.totalorder %s39, 0
      %p425 = por %p423, %p424
      %p426 = scmp.ne.s32.totalorder %s415, %s418
      %p427 = scmp.eq.s32.totalorder %s44, 1
      %p428 = por %p426, %p427
      %p429 = scmp.ne.s32.totalorder %s418, %s419
      %p430 = scmp.eq.s32.totalorder %s44, 0
      %p431 = por %p429, %p430
      %p432 = scmp.ne.s32.totalorder %s418, %s419
      %p433 = scmp.eq.s32.totalorder %s45, 1
      %p434 = por %p432, %p433
      %p436 = scmp.ne.s32.totalorder %s419, %s435
      %p437 = scmp.eq.s32.totalorder %s45, 0
      %p438 = por %p436, %p437
      %p439 = scmp.le.s32.totalorder 1, %s39
      %p440 = scmp.lt.s32.totalorder %s39, 3
      %p441 = pnand %p439, %p440
      %p442 = pneg %p441
      // Predicated region
      $region9: #{tpu_custom_call.1} parent=5 // pred_check
        _
      $region10: #{tpu_custom_call.1} parent=5 // pred_check_branch
        %444 = sbr.rel (%p441) target = $region12
      $region11: #{tpu_custom_call.1} parent=5 // pred_region
        %s445 = ssub.s32 %s39, 1
        // Predicated region
        $region13: #{tpu_custom_call.1} parent=11 // pred_check
          %p446 = pneg %p204
        $region14: #{tpu_custom_call.1} parent=11 // pred_check_branch
          %448 = sbr.rel (%p446) target = $region16
        $region15: #{tpu_custom_call.1} parent=11 // pred_region
          _
        $region16: #{tpu_custom_call.1} parent=11 // pred_fallthru
          _
        // Predicated region
        $region17: #{tpu_custom_call.1} parent=11 // pred_check
          %p449 = pneg %p225
        $region18: #{tpu_custom_call.1} parent=11 // pred_check_branch
          %451 = sbr.rel (%p449) target = $region20
        $region19: #{tpu_custom_call.1} parent=11 // pred_region
          %s453 = ssub.s32 16, 16
          %454 = vsyncadd [#allocation10], %s453
          %s456 = sshll.u32 [#allocation11], 4
          %s457 = int_to_ptr.vmem [resolvable:$true] %s456
          %459 = dma.hbm_to_vmem [thread:$0]  %s6, 16, %s457, [#allocation10]
        $region20: #{tpu_custom_call.1} parent=11 // pred_fallthru
          _
        // Predicated region
        $region21: #{tpu_custom_call.1} parent=11 // pred_check
          %p460 = pneg %p246
        $region22: #{tpu_custom_call.1} parent=11 // pred_check_branch
          %462 = sbr.rel (%p460) target = $region24
        $region23: #{tpu_custom_call.1} parent=11 // pred_region
          %s464 = ssub.s32 256, 256
          %465 = vsyncadd [#allocation13], %s464
          %s466 = sshll.u32 [#allocation12], 4
          %s467 = int_to_ptr.vmem [resolvable:$true] %s466
          %472 = dma.hbm_to_vmem [thread:$0]  %s7, 256, %s467, [#allocation13], 64, 64, 4
        $region24: #{tpu_custom_call.1} parent=11 // pred_fallthru
          _
        // Predicated region
        $region25: #{tpu_custom_call.1} parent=11 // pred_check
          %p473 = pneg %p267
        $region26: #{tpu_custom_call.1} parent=11 // pred_check_branch
          %475 = sbr.rel (%p473) target = $region28
        $region27: #{tpu_custom_call.1} parent=11 // pred_region
          %s477 = ssub.s32 16, 16
          %478 = vsyncadd [#allocation13], %s477
          %s480 = sshll.u32 [#allocation14], 4
          %s481 = int_to_ptr.vmem [resolvable:$true] %s480
          %483 = dma.hbm_to_vmem [thread:$0]  %s8, 16, %s481, [#allocation13]
        $region28: #{tpu_custom_call.1} parent=11 // pred_fallthru
          _
        // Predicated region
        $region29: #{tpu_custom_call.1} parent=11 // pred_check
          %p484 = pneg %p288
        $region30: #{tpu_custom_call.1} parent=11 // pred_check_branch
          %486 = sbr.rel (%p484) target = $region32
        $region31: #{tpu_custom_call.1} parent=11 // pred_region
          _
        $region32: #{tpu_custom_call.1} parent=11 // pred_fallthru
          _
        // Predicated region
        $region33: #{tpu_custom_call.1} parent=11 // pred_check
          %p487 = pneg %p309
        $region34: #{tpu_custom_call.1} parent=11 // pred_check_branch
          %489 = sbr.rel (%p487) target = $region36
        $region35: #{tpu_custom_call.1} parent=11 // pred_region
          _
        $region36: #{tpu_custom_call.1} parent=11 // pred_fallthru
          _
        // Predicated region
        $region37: #{tpu_custom_call.1} parent=11 // pred_check
          %p490 = pneg %p330
        $region38: #{tpu_custom_call.1} parent=11 // pred_check_branch
          %492 = sbr.rel (%p490) target = $region40
        $region39: #{tpu_custom_call.1} parent=11 // pred_region
          %s494 = ssub.s32 256, 256
          %495 = vsyncadd [#allocation16], %s494
          %s496 = sshll.u32 [#allocation15], 4
          %s497 = int_to_ptr.vmem [resolvable:$true] %s496
          %502 = dma.hbm_to_vmem [thread:$0]  %s11, 256, %s497, [#allocation16], 64, 64, 4
        $region40: #{tpu_custom_call.1} parent=11 // pred_fallthru
          _
        // Predicated region
        $region41: #{tpu_custom_call.1} parent=11 // pred_check
          %p503 = pneg %p351
        $region42: #{tpu_custom_call.1} parent=11 // pred_check_branch
          %505 = sbr.rel (%p503) target = $region44
        $region43: #{tpu_custom_call.1} parent=11 // pred_region
          _
        $region44: #{tpu_custom_call.1} parent=11 // pred_fallthru
          _
      $region12: #{tpu_custom_call.1} parent=5 // pred_fallthru
        _
      %p506 = scmp.lt.s32.totalorder %s39, 2
      // Predicated region
      $region45: #{tpu_custom_call.1} parent=5 // pred_check
        %p507 = pneg %p506
      $region46: #{tpu_custom_call.1} parent=5 // pred_check_branch
        %509 = sbr.rel (%p507) target = $region48
      $region47: #{tpu_custom_call.1} parent=5 // pred_region
        // Predicated region
        $region49: #{tpu_custom_call.1} parent=47 // pred_check
          %p510 = pneg %p73
        $region50: #{tpu_custom_call.1} parent=47 // pred_check_branch
          %512 = sbr.rel (%p510) target = $region52
        $region51: #{tpu_custom_call.1} parent=47 // pred_region
          %s513 = sand.u32 %s63, 1
          %s514 = scalar_lea.sflag [#allocation4], %s513
          %s515 = sand.u32 %s63, 1
          %s516 = smul.addr %s515, 4
          %s517 = scalar_lea.vmem [#allocation3], %s516
          %s519 = ssub.s32 64, 64
          %520 = vsyncadd %s514, %s519
          %s521 = sadd.s32 %s47, %s46
          %s522 = smul.addr %s521, 64
          %s523 = scalar_lea.hbm %s0, %s522
          %s525 = sshll.u32 %s517, 4
          %s526 = int_to_ptr.vmem [resolvable:$true] %s525
          %528 = dma.hbm_to_vmem [thread:$0]  %s523, 64, %s526, %s514
        $region52: #{tpu_custom_call.1} parent=47 // pred_fallthru
          _
        // Predicated region
        $region53: #{tpu_custom_call.1} parent=47 // pred_check
          %p529 = pneg %p99
        $region54: #{tpu_custom_call.1} parent=47 // pred_check_branch
          %531 = sbr.rel (%p529) target = $region56
        $region55: #{tpu_custom_call.1} parent=47 // pred_region
          %s532 = sand.u32 %s39, 1
          %s533 = scalar_lea.sflag [#allocation7], %s532
          %s534 = sand.u32 %s89, 1
          %s535 = smul.addr %s534, 4
          %s536 = scalar_lea.vmem [#allocation6], %s535
          %s538 = ssub.s32 64, 64
          %539 = vsyncadd %s533, %s538
          %s540 = smul.addr %s46, 64
          %s541 = scalar_lea.hbm %s1, %s540
          %s543 = sshll.u32 %s536, 4
          %s544 = int_to_ptr.vmem [resolvable:$true] %s543
          %546 = dma.hbm_to_vmem [thread:$0]  %s541, 64, %s544, %s533
        $region56: #{tpu_custom_call.1} parent=47 // pred_fallthru
          _
        // Predicated region
        $region57: #{tpu_custom_call.1} parent=47 // pred_check
          %p547 = pneg %p125
        $region58: #{tpu_custom_call.1} parent=47 // pred_check_branch
          %549 = sbr.rel (%p547) target = $region60
        $region59: #{tpu_custom_call.1} parent=47 // pred_region
          %s550 = sand.u32 %s39, 1
          %s551 = scalar_lea.sflag [#allocation7], %s550
          %s552 = sand.u32 %s115, 1
          %s553 = smul.addr %s552, 4
          %s554 = scalar_lea.vmem [#allocation8], %s553
          %s556 = ssub.s32 64, 64
          %557 = vsyncadd %s551, %s556
          %s558 = smul.addr %s46, 64
          %s559 = scalar_lea.hbm %s2, %s558
          %s561 = sshll.u32 %s554, 4
          %s562 = int_to_ptr.vmem [resolvable:$true] %s561
          %564 = dma.hbm_to_vmem [thread:$0]  %s559, 64, %s562, %s551
        $region60: #{tpu_custom_call.1} parent=47 // pred_fallthru
          _
        // Predicated region
        $region61: #{tpu_custom_call.1} parent=47 // pred_check
          %p565 = pneg %p151
        $region62: #{tpu_custom_call.1} parent=47 // pred_check_branch
          %567 = sbr.rel (%p565) target = $region64
        $region63: #{tpu_custom_call.1} parent=47 // pred_region
          %p568 = scmp.lt.s32.totalorder %s46, 1
          %s569 = scalar_select %p568, %s46, 1
          %s570 = scalar_lea.vmem %s3, %s569
        $region64: #{tpu_custom_call.1} parent=47 // pred_fallthru
          _
        // Predicated region
        $region65: #{tpu_custom_call.1} parent=47 // pred_check
          %p571 = pneg %p177
        $region66: #{tpu_custom_call.1} parent=47 // pred_check_branch
          %573 = sbr.rel (%p571) target = $region68
        $region67: #{tpu_custom_call.1} parent=47 // pred_region
          %s574 = sand.u32 %s39, 1
          %s575 = scalar_lea.sflag [#allocation10], %s574
          %s576 = sand.u32 %s167, 1
          %s577 = scalar_lea.vmem [#allocation9], %s576
          %s579 = ssub.s32 16, 16
          %580 = vsyncadd %s575, %s579
          %s581 = smul.addr %s46, 16
          %s582 = scalar_lea.hbm %s4, %s581
          %s584 = sshll.u32 %s577, 4
          %s585 = int_to_ptr.vmem [resolvable:$true] %s584
          %587 = dma.hbm_to_vmem [thread:$0]  %s582, 16, %s585, %s575
        $region68: #{tpu_custom_call.1} parent=47 // pred_fallthru
          _
      $region48: #{tpu_custom_call.1} parent=5 // pred_fallthru
        _
      %p588 = scmp.le.s32.totalorder 1, %s39
      %p589 = scmp.lt.s32.totalorder %s39, 3
      %p590 = pnand %p588, %p589
      %p591 = pneg %p590
      // Predicated region
      $region69: #{tpu_custom_call.1} parent=5 // pred_check
        _
      $region70: #{tpu_custom_call.1} parent=5 // pred_check_branch
        %593 = sbr.rel (%p590) target = $region72
      $region71: #{tpu_custom_call.1} parent=5 // pred_region
        %s594 = ssub.s32 %s39, 1
        %s595 = sand.u32 %s66, 1
        %s596 = scalar_lea.sflag [#allocation4], %s595
        %s597 = sand.u32 %s66, 1
        %s598 = smul.addr %s597, 4
        %s599 = scalar_lea.vmem [#allocation3], %s598
        // Predicated region
        $region73: #{tpu_custom_call.1} parent=71 // pred_check
          %p600 = pneg %p79
        $region74: #{tpu_custom_call.1} parent=71 // pred_check_branch
          %602 = sbr.rel (%p600) target = $region76
        $region75: #{tpu_custom_call.1} parent=71 // pred_region
          %603 = dma.done %s596, 64
        $region76: #{tpu_custom_call.1} parent=71 // pred_fallthru
          _
        %s604 = sand.u32 %s44, 1
        %s605 = scalar_lea.sflag [#allocation7], %s604
        %s606 = sand.u32 %s92, 1
        %s607 = smul.addr %s606, 4
        %s608 = scalar_lea.vmem [#allocation6], %s607
        // Predicated region
        $region77: #{tpu_custom_call.1} parent=71 // pred_check
          %p609 = pneg %p105
        $region78: #{tpu_custom_call.1} parent=71 // pred_check_branch
          %611 = sbr.rel (%p609) target = $region80
        $region79: #{tpu_custom_call.1} parent=71 // pred_region
          %612 = dma.done %s605, 64
        $region80: #{tpu_custom_call.1} parent=71 // pred_fallthru
          _
        %s613 = sand.u32 %s44, 1
        %s614 = scalar_lea.sflag [#allocation7], %s613
        %s615 = sand.u32 %s118, 1
        %s616 = smul.addr %s615, 4
        %s617 = scalar_lea.vmem [#allocation8], %s616
        // Predicated region
        $region81: #{tpu_custom_call.1} parent=71 // pred_check
          %p618 = pneg %p131
        $region82: #{tpu_custom_call.1} parent=71 // pred_check_branch
          %620 = sbr.rel (%p618) target = $region84
        $region83: #{tpu_custom_call.1} parent=71 // pred_region
          %621 = dma.done %s614, 64
        $region84: #{tpu_custom_call.1} parent=71 // pred_fallthru
          _
        %s622 = sand.u32 %s44, 1
        %s623 = scalar_lea.sflag [#allocation10], %s622
        %s624 = sand.u32 %s170, 1
        %s625 = scalar_lea.vmem [#allocation9], %s624
        // Predicated region
        $region85: #{tpu_custom_call.1} parent=71 // pred_check
          %p626 = pneg %p183
        $region86: #{tpu_custom_call.1} parent=71 // pred_check_branch
          %628 = sbr.rel (%p626) target = $region88
        $region87: #{tpu_custom_call.1} parent=71 // pred_region
          %629 = dma.done %s623, 16
        $region88: #{tpu_custom_call.1} parent=71 // pred_fallthru
          _
        // Predicated region
        $region89: #{tpu_custom_call.1} parent=71 // pred_check
          %p630 = pneg %p225
        $region90: #{tpu_custom_call.1} parent=71 // pred_check_branch
          %632 = sbr.rel (%p630) target = $region92
        $region91: #{tpu_custom_call.1} parent=71 // pred_region
          %633 = dma.done [#allocation10], 16
        $region92: #{tpu_custom_call.1} parent=71 // pred_fallthru
          _
        // Predicated region
        $region93: #{tpu_custom_call.1} parent=71 // pred_check
          %p634 = pneg %p246
        $region94: #{tpu_custom_call.1} parent=71 // pred_check_branch
          %636 = sbr.rel (%p634) target = $region96
        $region95: #{tpu_custom_call.1} parent=71 // pred_region
          %637 = dma.done [#allocation13], 256
        $region96: #{tpu_custom_call.1} parent=71 // pred_fallthru
          _
        // Predicated region
        $region97: #{tpu_custom_call.1} parent=71 // pred_check
          %p638 = pneg %p267
        $region98: #{tpu_custom_call.1} parent=71 // pred_check_branch
          %640 = sbr.rel (%p638) target = $region100
        $region99: #{tpu_custom_call.1} parent=71 // pred_region
          %641 = dma.done [#allocation13], 16
        $region100: #{tpu_custom_call.1} parent=71 // pred_fallthru
          _
        // Predicated region
        $region101: #{tpu_custom_call.1} parent=71 // pred_check
          %p642 = pneg %p330
        $region102: #{tpu_custom_call.1} parent=71 // pred_check_branch
          %644 = sbr.rel (%p642) target = $region104
        $region103: #{tpu_custom_call.1} parent=71 // pred_region
          %645 = dma.done [#allocation16], 256
        $region104: #{tpu_custom_call.1} parent=71 // pred_fallthru
          _
        %s646 = sand.u32 %s66, 1
        %s647 = scalar_lea.sflag [#allocation4], %s646
        %s648 = sand.u32 %s66, 1
        %s649 = smul.addr %s648, 4
        %s650 = scalar_lea.vmem [#allocation3], %s649
        %p651 = pneg %p79
        %p652 = pneg %p76
        %s653 = sand.u32 %s44, 1
        %s654 = scalar_lea.sflag [#allocation7], %s653
        %s655 = sand.u32 %s92, 1
        %s656 = smul.addr %s655, 4
        %s657 = scalar_lea.vmem [#allocation6], %s656
        %p658 = pneg %p105
        %p659 = pneg %p102
        %s660 = sand.u32 %s44, 1
        %s661 = scalar_lea.sflag [#allocation7], %s660
        %s662 = sand.u32 %s118, 1
        %s663 = smul.addr %s662, 4
        %s664 = scalar_lea.vmem [#allocation8], %s663
        %p665 = pneg %p131
        %p666 = pneg %p128
        %p667 = scmp.lt.s32.totalorder %s48, 1
        %s668 = scalar_select %p667, %s48, 1
        %s669 = scalar_lea.vmem %s3, %s668
        %p670 = pneg %p157
        %p671 = pneg %p154
        %s672 = sand.u32 %s44, 1
        %s673 = scalar_lea.sflag [#allocation10], %s672
        %s674 = sand.u32 %s170, 1
        %s675 = scalar_lea.vmem [#allocation9], %s674
        %p676 = pneg %p183
        %p677 = pneg %p180
        %p678 = pneg %p204
        %p679 = pneg %p201
        %p680 = pneg %p225
        %p681 = pneg %p222
        %p682 = pneg %p246
        %p683 = pneg %p243
        %p684 = pneg %p267
        %p685 = pneg %p264
        %p686 = pneg %p288
        %p687 = pneg %p285
        %p688 = pneg %p309
        %p689 = pneg %p306
        %p690 = pneg %p330
        %p691 = pneg %p327
        %p692 = pneg %p351
        %p693 = pneg %p348
        %p694 = pneg %p379
        %p695 = pneg %p376
        %s696 = sand.u32 %s366, 1
        %s697 = scalar_lea.sflag [#allocation5], %s696
        %s698 = sand.u32 %s366, 1
        %s699 = smul.addr %s698, 4
        %s700 = scalar_lea.vmem [#allocation17], %s699
        %p701 = pneg %p405
        %p702 = pneg %p402
        %s703 = sand.u32 %s44, 1
        %s704 = scalar_lea.sflag [#allocation19], %s703
        %s705 = sand.u32 %s392, 1
        %s706 = smul.addr %s705, 4
        %s707 = scalar_lea.vmem [#allocation18], %s706
        %p708 = pneg %p431
        %p709 = pneg %p428
        %s710 = sand.u32 %s44, 1
        %s711 = scalar_lea.sflag [#allocation19], %s710
        %s712 = sand.u32 %s418, 1
        %s713 = smul.addr %s712, 4
        %s714 = scalar_lea.vmem [#allocation20], %s713
        %p715 = scmp.lt.s32.totalorder %s48, 1
        %s716 = scalar_select %p715, %s48, 1
        %s717 = scalar_lea.vmem %s3, %s716
        %p719 = scmp.eq.s32.totalorder %s49, 0
        // Predicated region
        $region105: #{tpu_custom_call.1} parent=71 // pred_check
          %p720 = pneg %p719
        $region106: #{tpu_custom_call.1} parent=71 // pred_check_branch
          %722 = sbr.rel (%p720) target = $region108
        $region107: #{tpu_custom_call.1} parent=71 // pred_region
          %v723 = vld [vmem:[%s608] sm:$0xf]
          %v724 = vld [vmem:[#allocation12] sm:$0xf]
          %v725 = vld [vmem:[#allocation12 + $0x4] sm:$0xf]
          %v726 = vld [vmem:[#allocation12 + $0x8] sm:$0xf]
          %v727 = vld [vmem:[#allocation12 + $0xc] sm:$0xf]
          %v728 = vld [vmem:[#allocation14] sm:$0x1]
          %v730 = vlaneseq
          %v731 = vshrl.u32 %v730, 7
          %v732 = vsub.s32 0, %v731
          %v733 = vrot.slane %v728, %v732
          %v739 = vunpack.c.l.b16 %v724
          %v740 = vunpack.c.l.b16 %v725
          %v741 = vunpack.c.l.b16 %v726
          %v742 = vunpack.c.l.b16 %v727
          %v743 = vpack.c.b16 %v740, %v739
          %v744 = vpack.c.b16 %v742, %v741
          %vm747 = vcmask 261120
          %v749 = vsel %vm747, %v723, 0
          %751 = vmatprep.subr.bf16.mxu0 0
          %752 = vmatpush1.bf16.msra.mxu0 %v743
          %753 = vmatprep.subr.bf16.mxu0 0
          %754 = vmatpush1.bf16.msra.mxu0 %v744
          %755 = vmatprep.subr.bf16.mxu0 0
          %756 = vmatpush1.bf16.msra.mxu0 0
          %757 = vmatprep.subr.bf16.mxu0 0
          %758 = vmatpush1.bf16.msra.mxu0 0
          %759 = vmatprep.subr.bf16.mxu0 0
          %760 = vmatpush1.bf16.msra.mxu0 0
          %761 = vmatprep.subr.bf16.mxu0 0
          %762 = vmatpush1.bf16.msra.mxu0 0
          %763 = vmatprep.subr.bf16.mxu0 0
          %764 = vmatpush1.bf16.msra.mxu0 0
          %765 = vmatprep.subr.bf16.mxu0 0
          %766 = vmatpush1.bf16.msra.mxu0 0
          %767 = vmatprep.subr.bf16.mxu0 0
          %768 = vmatpush1.bf16.msra.mxu0 0
          %769 = vmatprep.subr.bf16.mxu0 0
          %770 = vmatpush1.bf16.msra.mxu0 0
          %771 = vmatprep.subr.bf16.mxu0 0
          %772 = vmatpush1.bf16.msra.mxu0 0
          %773 = vmatprep.subr.bf16.mxu0 0
          %774 = vmatpush1.bf16.msra.mxu0 0
          %775 = vmatprep.subr.bf16.mxu0 0
          %776 = vmatpush1.bf16.msra.mxu0 0
          %777 = vmatprep.subr.bf16.mxu0 0
          %778 = vmatpush1.bf16.msra.mxu0 0
          %779 = vmatprep.subr.bf16.mxu0 0
          %780 = vmatpush1.bf16.msra.mxu0 0
          %781 = vmatprep.subr.bf16.mxu0 0
          %782 = vmatpush1.bf16.msra.mxu0 0
          %783 = vmatprep.mubr.bf16.mxu0 0
          %784 = vmatmul.mubr.bf16.gmra.mrb[0].mxu0 %v749
          %v785 = vpop.f32.mrb[0].mxu0
          %v786 = vadd.f32 %v733, %v785
          %v787 = vpop.f32.mrb[0].mxu0
          %v788 = vpop.f32.mrb[0].mxu0
          %v789 = vpop.f32.mrb[0].mxu0
          %790 = vdwg.mxu0
          %v791 = vld [vmem:[%s617] sm:$0xf]
          %v792 = vld [vmem:[%s9] sm:$0xf]
          %v793 = vld [vmem:[%s9 + $0x4] sm:$0xf]
          %v794 = vld [vmem:[%s9 + $0x8] sm:$0xf]
          %v795 = vld [vmem:[%s9 + $0xc] sm:$0xf]
          %v796 = vld [vmem:[%s10] sm:$0x1]
          %v798 = vlaneseq
          %v799 = vshrl.u32 %v798, 7
          %v800 = vsub.s32 0, %v799
          %v801 = vrot.slane %v796, %v800
          %v807 = vunpack.c.l.b16 %v792
          %v808 = vunpack.c.l.b16 %v793
          %v809 = vunpack.c.l.b16 %v794
          %v810 = vunpack.c.l.b16 %v795
          %v811 = vpack.c.b16 %v808, %v807
          %v812 = vpack.c.b16 %v810, %v809
          %v816 = vsel %vm747, %v791, 0
          %818 = vmatprep.subr.bf16.mxu0 0
          %819 = vmatpush1.bf16.msra.mxu0 %v811
          %820 = vmatprep.subr.bf16.mxu0 0
          %821 = vmatpush1.bf16.msra.mxu0 %v812
          %822 = vmatprep.subr.bf16.mxu0 0
          %823 = vmatpush1.bf16.msra.mxu0 0
          %824 = vmatprep.subr.bf16.mxu0 0
          %825 = vmatpush1.bf16.msra.mxu0 0
          %826 = vmatprep.subr.bf16.mxu0 0
          %827 = vmatpush1.bf16.msra.mxu0 0
          %828 = vmatprep.subr.bf16.mxu0 0
          %829 = vmatpush1.bf16.msra.mxu0 0
          %830 = vmatprep.subr.bf16.mxu0 0
          %831 = vmatpush1.bf16.msra.mxu0 0
          %832 = vmatprep.subr.bf16.mxu0 0
          %833 = vmatpush1.bf16.msra.mxu0 0
          %834 = vmatprep.subr.bf16.mxu0 0
          %835 = vmatpush1.bf16.msra.mxu0 0
          %836 = vmatprep.subr.bf16.mxu0 0
          %837 = vmatpush1.bf16.msra.mxu0 0
          %838 = vmatprep.subr.bf16.mxu0 0
          %839 = vmatpush1.bf16.msra.mxu0 0
          %840 = vmatprep.subr.bf16.mxu0 0
          %841 = vmatpush1.bf16.msra.mxu0 0
          %842 = vmatprep.subr.bf16.mxu0 0
          %843 = vmatpush1.bf16.msra.mxu0 0
          %844 = vmatprep.subr.bf16.mxu0 0
          %845 = vmatpush1.bf16.msra.mxu0 0
          %846 = vmatprep.subr.bf16.mxu0 0
          %847 = vmatpush1.bf16.msra.mxu0 0
          %848 = vmatprep.subr.bf16.mxu0 0
          %849 = vmatpush1.bf16.msra.mxu0 0
          %850 = vmatprep.mubr.bf16.mxu0 0
          %851 = vmatmul.mubr.bf16.gmra.mrb[0].mxu0 %v816
          %v852 = vpop.f32.mrb[0].mxu0
          %v853 = vadd.f32 %v801, %v852
          %v854 = vpop.f32.mrb[0].mxu0
          %v855 = vpop.f32.mrb[0].mxu0
          %v856 = vpop.f32.mrb[0].mxu0
          %857 = vdwg.mxu0
          %v858 = vpack.c.bf16 %v786, %v786
          %vm859 = vcmask 257024
          %860 = vst.msk [vmem:[%s707] sm:$0xf] %vm859, %v858
          %v861 = vpack.c.bf16 %v853, %v853
          %862 = vst.msk [vmem:[%s714] sm:$0xf] %vm859, %v861
        $region108: #{tpu_custom_call.1} parent=71 // pred_fallthru
          _
        %v863 = vld [vmem:[%s599] sm:$0xf]
        %v864 = vld [vmem:[%s5] sm:$0xf]
        %v865 = vld [vmem:[%s5 + $0x4] sm:$0xf]
        %v866 = vld [vmem:[%s5 + $0x8] sm:$0xf]
        %v867 = vld [vmem:[%s5 + $0xc] sm:$0xf]
        %v868 = vld [vmem:[#allocation11] sm:$0x1]
        %v870 = vlaneseq
        %v871 = vshrl.u32 %v870, 7
        %v872 = vsub.s32 0, %v871
        %v873 = vrot.slane %v868, %v872
        %v879 = vunpack.c.l.b16 %v864
        %v880 = vunpack.c.l.b16 %v865
        %v881 = vunpack.c.l.b16 %v866
        %v882 = vunpack.c.l.b16 %v867
        %v883 = vpack.c.b16 %v880, %v879
        %v884 = vpack.c.b16 %v882, %v881
        %vm887 = vcmask 261120
        %v889 = vsel %vm887, %v863, 0
        %891 = vmatprep.subr.bf16.mxu0 0
        %892 = vmatpush1.bf16.msra.mxu0 %v883
        %893 = vmatprep.subr.bf16.mxu0 0
        %894 = vmatpush1.bf16.msra.mxu0 %v884
        %895 = vmatprep.subr.bf16.mxu0 0
        %896 = vmatpush1.bf16.msra.mxu0 0
        %897 = vmatprep.subr.bf16.mxu0 0
        %898 = vmatpush1.bf16.msra.mxu0 0
        %899 = vmatprep.subr.bf16.mxu0 0
        %900 = vmatpush1.bf16.msra.mxu0 0
        %901 = vmatprep.subr.bf16.mxu0 0
        %902 = vmatpush1.bf16.msra.mxu0 0
        %903 = vmatprep.subr.bf16.mxu0 0
        %904 = vmatpush1.bf16.msra.mxu0 0
        %905 = vmatprep.subr.bf16.mxu0 0
        %906 = vmatpush1.bf16.msra.mxu0 0
        %907 = vmatprep.subr.bf16.mxu0 0
        %908 = vmatpush1.bf16.msra.mxu0 0
        %909 = vmatprep.subr.bf16.mxu0 0
        %910 = vmatpush1.bf16.msra.mxu0 0
        %911 = vmatprep.subr.bf16.mxu0 0
        %912 = vmatpush1.bf16.msra.mxu0 0
        %913 = vmatprep.subr.bf16.mxu0 0
        %914 = vmatpush1.bf16.msra.mxu0 0
        %915 = vmatprep.subr.bf16.mxu0 0
        %916 = vmatpush1.bf16.msra.mxu0 0
        %917 = vmatprep.subr.bf16.mxu0 0
        %918 = vmatpush1.bf16.msra.mxu0 0
        %919 = vmatprep.subr.bf16.mxu0 0
        %920 = vmatpush1.bf16.msra.mxu0 0
        %921 = vmatprep.subr.bf16.mxu0 0
        %922 = vmatpush1.bf16.msra.mxu0 0
        %923 = vmatprep.mubr.bf16.mxu0 0
        %924 = vmatmul.mubr.bf16.gmra.mrb[0].mxu0 %v889
        %v925 = vpop.f32.mrb[0].mxu0
        %v926 = vadd.f32 %v873, %v925
        %v927 = vpop.f32.mrb[0].mxu0
        %v928 = vpop.f32.mrb[0].mxu0
        %v929 = vpop.f32.mrb[0].mxu0
        %930 = vdwg.mxu0
        %v931 = vmul.f32 %v926, 0.35355338
        %v932 = vpack.c.bf16 %v931, %v931
        %v933 = vld [vmem:[%s717] sm:$0x1]
        %v934 = vld [vmem:[%s625] sm:$0x1]
        %v935 = vld [vmem:[%s707] sm:$0xf]
        %v936 = vld [vmem:[%s714] sm:$0xf]
        %v938 = vlaneseq
        %v939 = vshrl.u32 %v938, 7
        %v940 = vsub.s32 0, %v939
        %v941 = vrot.slane %v933, %v940
        %vm943 = vcmask 64512
        %v945 = vsel %vm943, %v932, 0
        %v948 = vsel %vm943, %v935, 0
        %950 = vmatprep.subr.bf16.mxu0 0
        %951 = vmatpush1.bf16.xpose.msra.mxu0 %v948
        %952 = vmatprep.subr.bf16.mxu0 0
        %953 = vmatpush1.bf16.xpose.msra.mxu0 0
        %954 = vmatprep.subr.bf16.mxu0 0
        %955 = vmatpush1.bf16.xpose.msra.mxu0 0
        %956 = vmatprep.subr.bf16.mxu0 0
        %957 = vmatpush1.bf16.xpose.msra.mxu0 0
        %958 = vmatprep.subr.bf16.mxu0 0
        %959 = vmatpush1.bf16.xpose.msra.mxu0 0
        %960 = vmatprep.subr.bf16.mxu0 0
        %961 = vmatpush1.bf16.xpose.msra.mxu0 0
        %962 = vmatprep.subr.bf16.mxu0 0
        %963 = vmatpush1.bf16.xpose.msra.mxu0 0
        %964 = vmatprep.subr.bf16.mxu0 0
        %965 = vmatpush1.bf16.xpose.msra.mxu0 0
        %966 = vmatprep.subr.bf16.mxu0 0
        %967 = vmatpush1.bf16.xpose.msra.mxu0 0
        %968 = vmatprep.subr.bf16.mxu0 0
        %969 = vmatpush1.bf16.xpose.msra.mxu0 0
        %970 = vmatprep.subr.bf16.mxu0 0
        %971 = vmatpush1.bf16.xpose.msra.mxu0 0
        %972 = vmatprep.subr.bf16.mxu0 0
        %973 = vmatpush1.bf16.xpose.msra.mxu0 0
        %974 = vmatprep.subr.bf16.mxu0 0
        %975 = vmatpush1.bf16.xpose.msra.mxu0 0
        %976 = vmatprep.subr.bf16.mxu0 0
        %977 = vmatpush1.bf16.xpose.msra.mxu0 0
        %978 = vmatprep.subr.bf16.mxu0 0
        %979 = vmatpush1.bf16.xpose.msra.mxu0 0
        %980 = vmatprep.subr.bf16.mxu0 0
        %981 = vmatpush1.bf16.xpose.msra.mxu0 0
        %982 = vmatprep.mubr.bf16.mxu0 0
        %983 = vmatmul.mubr.bf16.gmra.mrb[0].mxu0 %v945
        %v984 = vpop.f32.mrb[0].mxu0
        %v985 = vadd.f32 %v941, %v984
        %v986 = vpop.f32.mrb[0].mxu0
        %v987 = vpop.f32.mrb[0].mxu0
        %v988 = vpop.f32.mrb[0].mxu0
        %989 = vdwg.mxu0
        %v990 = vsel %vm943, %v985, -inf
        %991 = vmax.xlane.f32.xlu0 %v990
        %v992 = vpop.xlane.xlu0 %991
        %v993 = vsub.f32 %v985, %v992
        %v994 = vmul.f32 %v993, 1.442695
        %v995 = vpow.pop %v994
        %v996 = vsel %vm943, %v995, 0.0
        %997 = vadd.xlane.f32.xlu0 %v996
        %v998 = vpop.xlane.xlu0 %997
        %v999 = vrcp.pop %v998
        %v1000 = vmul.f32 %v995, %v999
        %v1002 = vlaneseq
        %v1003 = vshrl.u32 %v1002, 7
        %v1004 = vsub.s32 0, %v1003
        %v1005 = vrot.slane %v934, %v1004
        %v1007 = vmul.f32 %v1000, %v1005
        %v1008 = vpack.c.bf16 %v1007, %v1007
        %v1010 = vsel %vm943, %v1008, 0
        %vm1012 = vcmask 1043456
        %v1014 = vsel %vm1012, %v936, 0
        %1016 = vmatprep.subr.bf16.mxu0 0
        %1017 = vmatpush1.bf16.msra.mxu0 %v1014
        %1018 = vmatprep.subr.bf16.mxu0 0
        %1019 = vmatpush1.bf16.msra.mxu0 0
        %1020 = vmatprep.subr.bf16.mxu0 0
        %1021 = vmatpush1.bf16.msra.mxu0 0
        %1022 = vmatprep.subr.bf16.mxu0 0
        %1023 = vmatpush1.bf16.msra.mxu0 0
        %1024 = vmatprep.subr.bf16.mxu0 0
        %1025 = vmatpush1.bf16.msra.mxu0 0
        %1026 = vmatprep.subr.bf16.mxu0 0
        %1027 = vmatpush1.bf16.msra.mxu0 0
        %1028 = vmatprep.subr.bf16.mxu0 0
        %1029 = vmatpush1.bf16.msra.mxu0 0
        %1030 = vmatprep.subr.bf16.mxu0 0
        %1031 = vmatpush1.bf16.msra.mxu0 0
        %1032 = vmatprep.subr.bf16.mxu0 0
        %1033 = vmatpush1.bf16.msra.mxu0 0
        %1034 = vmatprep.subr.bf16.mxu0 0
        %1035 = vmatpush1.bf16.msra.mxu0 0
        %1036 = vmatprep.subr.bf16.mxu0 0
        %1037 = vmatpush1.bf16.msra.mxu0 0
        %1038 = vmatprep.subr.bf16.mxu0 0
        %1039 = vmatpush1.bf16.msra.mxu0 0
        %1040 = vmatprep.subr.bf16.mxu0 0
        %1041 = vmatpush1.bf16.msra.mxu0 0
        %1042 = vmatprep.subr.bf16.mxu0 0
        %1043 = vmatpush1.bf16.msra.mxu0 0
        %1044 = vmatprep.subr.bf16.mxu0 0
        %1045 = vmatpush1.bf16.msra.mxu0 0
        %1046 = vmatprep.subr.bf16.mxu0 0
        %1047 = vmatpush1.bf16.msra.mxu0 0
        %1048 = vmatprep.mubr.bf16.mxu0 0
        %1049 = vmatmul.mubr.bf16.gmra.mrb[0].mxu0 %v1010
        %v1050 = vpop.f32.mrb[0].mxu0
        %v1051 = vadd.f32 0.0, %v1050
        %v1052 = vpop.f32.mrb[0].mxu0
        %v1053 = vpop.f32.mrb[0].mxu0
        %v1054 = vpop.f32.mrb[0].mxu0
        %1055 = vdwg.mxu0
        %v1056 = vpack.c.bf16 %v1051, %v1051
        %vm1057 = vcmask 60416
        %1058 = vst.msk [vmem:[#allocation2] sm:$0xf] %vm1057, %v1056
        %v1059 = vld [vmem:[%s707] sm:$0xf]
        %v1060 = vld [vmem:[%s714] sm:$0xf]
        %1062 = vrot.lane.b32.xlu0 %v932, 120
        %v1063 = vpop.permute.xlu0 %1062
        %v1065 = vunpack.c.l.b16 %v1059
        %v1066 = vpack.c.b16 %v1065, %v1065
        %1067 = vrot.lane.b32.xlu0 %v1066, 120
        %v1068 = vpop.permute.xlu0 %1067
        %v1070 = vsel %vm943, %v1063, 0
        %v1073 = vsel %vm943, %v1068, 0
        %1075 = vmatprep.subr.bf16.mxu0 0
        %1076 = vmatpush1.bf16.xpose.msra.mxu0 %v1073
        %1077 = vmatprep.subr.bf16.mxu0 0
        %1078 = vmatpush1.bf16.xpose.msra.mxu0 0
        %1079 = vmatprep.subr.bf16.mxu0 0
        %1080 = vmatpush1.bf16.xpose.msra.mxu0 0
        %1081 = vmatprep.subr.bf16.mxu0 0
        %1082 = vmatpush1.bf16.xpose.msra.mxu0 0
        %1083 = vmatprep.subr.bf16.mxu0 0
        %1084 = vmatpush1.bf16.xpose.msra.mxu0 0
        %1085 = vmatprep.subr.bf16.mxu0 0
        %1086 = vmatpush1.bf16.xpose.msra.mxu0 0
        %1087 = vmatprep.subr.bf16.mxu0 0
        %1088 = vmatpush1.bf16.xpose.msra.mxu0 0
        %1089 = vmatprep.subr.bf16.mxu0 0
        %1090 = vmatpush1.bf16.xpose.msra.mxu0 0
        %1091 = vmatprep.subr.bf16.mxu0 0
        %1092 = vmatpush1.bf16.xpose.msra.mxu0 0
        %1093 = vmatprep.subr.bf16.mxu0 0
        %1094 = vmatpush1.bf16.xpose.msra.mxu0 0
        %1095 = vmatprep.subr.bf16.mxu0 0
        %1096 = vmatpush1.bf16.xpose.msra.mxu0 0
        %1097 = vmatprep.subr.bf16.mxu0 0
        %1098 = vmatpush1.bf16.xpose.msra.mxu0 0
        %1099 = vmatprep.subr.bf16.mxu0 0
        %1100 = vmatpush1.bf16.xpose.msra.mxu0 0
        %1101 = vmatprep.subr.bf16.mxu0 0
        %1102 = vmatpush1.bf16.xpose.msra.mxu0 0
        %1103 = vmatprep.subr.bf16.mxu0 0
        %1104 = vmatpush1.bf16.xpose.msra.mxu0 0
        %1105 = vmatprep.subr.bf16.mxu0 0
        %1106 = vmatpush1.bf16.xpose.msra.mxu0 0
        %1107 = vmatprep.mubr.bf16.mxu0 0
        %1108 = vmatmul.mubr.bf16.gmra.mrb[0].mxu0 %v1070
        %v1109 = vpop.f32.mrb[0].mxu0
        %v1110 = vadd.f32 %v941, %v1109
        %v1111 = vpop.f32.mrb[0].mxu0
        %v1112 = vpop.f32.mrb[0].mxu0
        %v1113 = vpop.f32.mrb[0].mxu0
        %1114 = vdwg.mxu0
        %v1115 = vsel %vm943, %v1110, -inf
        %1116 = vmax.xlane.f32.xlu0 %v1115
        %v1117 = vpop.xlane.xlu0 %1116
        %v1118 = vsub.f32 %v1110, %v1117
        %v1119 = vmul.f32 %v1118, 1.442695
        %v1120 = vpow.pop %v1119
        %v1121 = vsel %vm943, %v1120, 0.0
        %1122 = vadd.xlane.f32.xlu0 %v1121
        %v1123 = vpop.xlane.xlu0 %1122
        %v1124 = vrcp.pop %v1123
        %v1125 = vmul.f32 %v1120, %v1124
        %v1126 = vmul.f32 %v1125, %v1005
        %v1127 = vpack.c.bf16 %v1126, %v1126
        %v1129 = vunpack.c.l.b16 %v1060
        %v1130 = vpack.c.b16 %v1129, %v1129
        %1131 = vrot.lane.b32.xlu0 %v1130, 120
        %v1132 = vpop.permute.xlu0 %1131
        %v1134 = vsel %vm943, %v1127, 0
        %v1137 = vsel %vm1012, %v1132, 0
        %1139 = vmatprep.subr.bf16.mxu0 0
        %1140 = vmatpush1.bf16.msra.mxu0 %v1137
        %1141 = vmatprep.subr.bf16.mxu0 0
        %1142 = vmatpush1.bf16.msra.mxu0 0
        %1143 = vmatprep.subr.bf16.mxu0 0
        %1144 = vmatpush1.bf16.msra.mxu0 0
        %1145 = vmatprep.subr.bf16.mxu0 0
        %1146 = vmatpush1.bf16.msra.mxu0 0
        %1147 = vmatprep.subr.bf16.mxu0 0
        %1148 = vmatpush1.bf16.msra.mxu0 0
        %1149 = vmatprep.subr.bf16.mxu0 0
        %1150 = vmatpush1.bf16.msra.mxu0 0
        %1151 = vmatprep.subr.bf16.mxu0 0
        %1152 = vmatpush1.bf16.msra.mxu0 0
        %1153 = vmatprep.subr.bf16.mxu0 0
        %1154 = vmatpush1.bf16.msra.mxu0 0
        %1155 = vmatprep.subr.bf16.mxu0 0
        %1156 = vmatpush1.bf16.msra.mxu0 0
        %1157 = vmatprep.subr.bf16.mxu0 0
        %1158 = vmatpush1.bf16.msra.mxu0 0
        %1159 = vmatprep.subr.bf16.mxu0 0
        %1160 = vmatpush1.bf16.msra.mxu0 0
        %1161 = vmatprep.subr.bf16.mxu0 0
        %1162 = vmatpush1.bf16.msra.mxu0 0
        %1163 = vmatprep.subr.bf16.mxu0 0
        %1164 = vmatpush1.bf16.msra.mxu0 0
        %1165 = vmatprep.subr.bf16.mxu0 0
        %1166 = vmatpush1.bf16.msra.mxu0 0
        %1167 = vmatprep.subr.bf16.mxu0 0
        %1168 = vmatpush1.bf16.msra.mxu0 0
        %1169 = vmatprep.subr.bf16.mxu0 0
        %1170 = vmatpush1.bf16.msra.mxu0 0
        %1171 = vmatprep.mubr.bf16.mxu0 0
        %1172 = vmatmul.mubr.bf16.gmra.mrb[0].mxu0 %v1134
        %v1173 = vpop.f32.mrb[0].mxu0
        %v1174 = vadd.f32 0.0, %v1173
        %v1175 = vpop.f32.mrb[0].mxu0
        %v1176 = vpop.f32.mrb[0].mxu0
        %v1177 = vpop.f32.mrb[0].mxu0
        %1178 = vdwg.mxu0
        %v1179 = vpack.c.bf16 %v1174, %v1174
        %v1181 = vunpack.c.l.b16 %v1179
        %v1182 = vpack.c.b16 %v1181, %v1181
        %1183 = vrot.lane.b32.xlu0 %v1182, 8
        %v1184 = vpop.permute.xlu0 %1183
        %vm1186 = vcmask 126016
        %1187 = vst.msk [vmem:[#allocation2] sm:$0xf] %vm1186, %v1184
        %v1188 = vld [vmem:[%s707] sm:$0xf]
        %v1189 = vld [vmem:[%s714] sm:$0xf]
        %1190 = vrot.lane.b32.xlu0 %v932, 112
        %v1191 = vpop.permute.xlu0 %1190
        %v1193 = vunpack.c.l.b16 %v1188
        %v1194 = vpack.c.b16 %v1193, %v1193
        %1195 = vrot.lane.b32.xlu0 %v1194, 112
        %v1196 = vpop.permute.xlu0 %1195
        %v1198 = vsel %vm943, %v1191, 0
        %v1201 = vsel %vm943, %v1196, 0
        %1203 = vmatprep.subr.bf16.mxu0 0
        %1204 = vmatpush1.bf16.xpose.msra.mxu0 %v1201
        %1205 = vmatprep.subr.bf16.mxu0 0
        %1206 = vmatpush1.bf16.xpose.msra.mxu0 0
        %1207 = vmatprep.subr.bf16.mxu0 0
        %1208 = vmatpush1.bf16.xpose.msra.mxu0 0
        %1209 = vmatprep.subr.bf16.mxu0 0
        %1210 = vmatpush1.bf16.xpose.msra.mxu0 0
        %1211 = vmatprep.subr.bf16.mxu0 0
        %1212 = vmatpush1.bf16.xpose.msra.mxu0 0
        %1213 = vmatprep.subr.bf16.mxu0 0
        %1214 = vmatpush1.bf16.xpose.msra.mxu0 0
        %1215 = vmatprep.subr.bf16.mxu0 0
        %1216 = vmatpush1.bf16.xpose.msra.mxu0 0
        %1217 = vmatprep.subr.bf16.mxu0 0
        %1218 = vmatpush1.bf16.xpose.msra.mxu0 0
        %1219 = vmatprep.subr.bf16.mxu0 0
        %1220 = vmatpush1.bf16.xpose.msra.mxu0 0
        %1221 = vmatprep.subr.bf16.mxu0 0
        %1222 = vmatpush1.bf16.xpose.msra.mxu0 0
        %1223 = vmatprep.subr.bf16.mxu0 0
        %1224 = vmatpush1.bf16.xpose.msra.mxu0 0
        %1225 = vmatprep.subr.bf16.mxu0 0
        %1226 = vmatpush1.bf16.xpose.msra.mxu0 0
        %1227 = vmatprep.subr.bf16.mxu0 0
        %1228 = vmatpush1.bf16.xpose.msra.mxu0 0
        %1229 = vmatprep.subr.bf16.mxu0 0
        %1230 = vmatpush1.bf16.xpose.msra.mxu0 0
        %1231 = vmatprep.subr.bf16.mxu0 0
        %1232 = vmatpush1.bf16.xpose.msra.mxu0 0
        %1233 = vmatprep.subr.bf16.mxu0 0
        %1234 = vmatpush1.bf16.xpose.msra.mxu0 0
        %1235 = vmatprep.mubr.bf16.mxu0 0
        %1236 = vmatmul.mubr.bf16.gmra.mrb[0].mxu0 %v1198
        %v1237 = vpop.f32.mrb[0].mxu0
        %v1238 = vadd.f32 %v941, %v1237
        %v1239 = vpop.f32.mrb[0].mxu0
        %v1240 = vpop.f32.mrb[0].mxu0
        %v1241 = vpop.f32.mrb[0].mxu0
        %1242 = vdwg.mxu0
        %v1243 = vsel %vm943, %v1238, -inf
        %1244 = vmax.xlane.f32.xlu0 %v1243
        %v1245 = vpop.xlane.xlu0 %1244
        %v1246 = vsub.f32 %v1238, %v1245
        %v1247 = vmul.f32 %v1246, 1.442695
        %v1248 = vpow.pop %v1247
        %v1249 = vsel %vm943, %v1248, 0.0
        %1250 = vadd.xlane.f32.xlu0 %v1249
        %v1251 = vpop.xlane.xlu0 %1250
        %v1252 = vrcp.pop %v1251
        %v1253 = vmul.f32 %v1248, %v1252
        %v1254 = vmul.f32 %v1253, %v1005
        %v1255 = vpack.c.bf16 %v1254, %v1254
        %v1257 = vunpack.c.l.b16 %v1189
        %v1258 = vpack.c.b16 %v1257, %v1257
        %1259 = vrot.lane.b32.xlu0 %v1258, 112
        %v1260 = vpop.permute.xlu0 %1259
        %v1262 = vsel %vm943, %v1255, 0
        %v1265 = vsel %vm1012, %v1260, 0
        %1267 = vmatprep.subr.bf16.mxu0 0
        %1268 = vmatpush1.bf16.msra.mxu0 %v1265
        %1269 = vmatprep.subr.bf16.mxu0 0
        %1270 = vmatpush1.bf16.msra.mxu0 0
        %1271 = vmatprep.subr.bf16.mxu0 0
        %1272 = vmatpush1.bf16.msra.mxu0 0
        %1273 = vmatprep.subr.bf16.mxu0 0
        %1274 = vmatpush1.bf16.msra.mxu0 0
        %1275 = vmatprep.subr.bf16.mxu0 0
        %1276 = vmatpush1.bf16.msra.mxu0 0
        %1277 = vmatprep.subr.bf16.mxu0 0
        %1278 = vmatpush1.bf16.msra.mxu0 0
        %1279 = vmatprep.subr.bf16.mxu0 0
        %1280 = vmatpush1.bf16.msra.mxu0 0
        %1281 = vmatprep.subr.bf16.mxu0 0
        %1282 = vmatpush1.bf16.msra.mxu0 0
        %1283 = vmatprep.subr.bf16.mxu0 0
        %1284 = vmatpush1.bf16.msra.mxu0 0
        %1285 = vmatprep.subr.bf16.mxu0 0
        %1286 = vmatpush1.bf16.msra.mxu0 0
        %1287 = vmatprep.subr.bf16.mxu0 0
        %1288 = vmatpush1.bf16.msra.mxu0 0
        %1289 = vmatprep.subr.bf16.mxu0 0
        %1290 = vmatpush1.bf16.msra.mxu0 0
        %1291 = vmatprep.subr.bf16.mxu0 0
        %1292 = vmatpush1.bf16.msra.mxu0 0
        %1293 = vmatprep.subr.bf16.mxu0 0
        %1294 = vmatpush1.bf16.msra.mxu0 0
        %1295 = vmatprep.subr.bf16.mxu0 0
        %1296 = vmatpush1.bf16.msra.mxu0 0
        %1297 = vmatprep.subr.bf16.mxu0 0
        %1298 = vmatpush1.bf16.msra.mxu0 0
        %1299 = vmatprep.mubr.bf16.mxu0 0
        %1300 = vmatmul.mubr.bf16.gmra.mrb[0].mxu0 %v1262
        %v1301 = vpop.f32.mrb[0].mxu0
        %v1302 = vadd.f32 0.0, %v1301
        %v1303 = vpop.f32.mrb[0].mxu0
        %v1304 = vpop.f32.mrb[0].mxu0
        %v1305 = vpop.f32.mrb[0].mxu0
        %1306 = vdwg.mxu0
        %v1307 = vpack.c.bf16 %v1302, %v1302
        %v1309 = vunpack.c.l.b16 %v1307
        %v1310 = vpack.c.b16 %v1309, %v1309
        %1311 = vrot.lane.b32.xlu0 %v1310, 16
        %v1312 = vpop.permute.xlu0 %1311
        %vm1314 = vcmask 191616
        %1315 = vst.msk [vmem:[#allocation2] sm:$0xf] %vm1314, %v1312
        %v1316 = vld [vmem:[%s707] sm:$0xf]
        %v1317 = vld [vmem:[%s714] sm:$0xf]
        %1318 = vrot.lane.b32.xlu0 %v932, 104
        %v1319 = vpop.permute.xlu0 %1318
        %v1321 = vunpack.c.l.b16 %v1316
        %v1322 = vpack.c.b16 %v1321, %v1321
        %1323 = vrot.lane.b32.xlu0 %v1322, 104
        %v1324 = vpop.permute.xlu0 %1323
        %v1326 = vsel %vm943, %v1319, 0
        %v1329 = vsel %vm943, %v1324, 0
        %1331 = vmatprep.subr.bf16.mxu0 0
        %1332 = vmatpush1.bf16.xpose.msra.mxu0 %v1329
        %1333 = vmatprep.subr.bf16.mxu0 0
        %1334 = vmatpush1.bf16.xpose.msra.mxu0 0
        %1335 = vmatprep.subr.bf16.mxu0 0
        %1336 = vmatpush1.bf16.xpose.msra.mxu0 0
        %1337 = vmatprep.subr.bf16.mxu0 0
        %1338 = vmatpush1.bf16.xpose.msra.mxu0 0
        %1339 = vmatprep.subr.bf16.mxu0 0
        %1340 = vmatpush1.bf16.xpose.msra.mxu0 0
        %1341 = vmatprep.subr.bf16.mxu0 0
        %1342 = vmatpush1.bf16.xpose.msra.mxu0 0
        %1343 = vmatprep.subr.bf16.mxu0 0
        %1344 = vmatpush1.bf16.xpose.msra.mxu0 0
        %1345 = vmatprep.subr.bf16.mxu0 0
        %1346 = vmatpush1.bf16.xpose.msra.mxu0 0
        %1347 = vmatprep.subr.bf16.mxu0 0
        %1348 = vmatpush1.bf16.xpose.msra.mxu0 0
        %1349 = vmatprep.subr.bf16.mxu0 0
        %1350 = vmatpush1.bf16.xpose.msra.mxu0 0
        %1351 = vmatprep.subr.bf16.mxu0 0
        %1352 = vmatpush1.bf16.xpose.msra.mxu0 0
        %1353 = vmatprep.subr.bf16.mxu0 0
        %1354 = vmatpush1.bf16.xpose.msra.mxu0 0
        %1355 = vmatprep.subr.bf16.mxu0 0
        %1356 = vmatpush1.bf16.xpose.msra.mxu0 0
        %1357 = vmatprep.subr.bf16.mxu0 0
        %1358 = vmatpush1.bf16.xpose.msra.mxu0 0
        %1359 = vmatprep.subr.bf16.mxu0 0
        %1360 = vmatpush1.bf16.xpose.msra.mxu0 0
        %1361 = vmatprep.subr.bf16.mxu0 0
        %1362 = vmatpush1.bf16.xpose.msra.mxu0 0
        %1363 = vmatprep.mubr.bf16.mxu0 0
        %1364 = vmatmul.mubr.bf16.gmra.mrb[0].mxu0 %v1326
        %v1365 = vpop.f32.mrb[0].mxu0
        %v1366 = vadd.f32 %v941, %v1365
        %v1367 = vpop.f32.mrb[0].mxu0
        %v1368 = vpop.f32.mrb[0].mxu0
        %v1369 = vpop.f32.mrb[0].mxu0
        %1370 = vdwg.mxu0
        %v1371 = vsel %vm943, %v1366, -inf
        %1372 = vmax.xlane.f32.xlu0 %v1371
        %v1373 = vpop.xlane.xlu0 %1372
        %v1374 = vsub.f32 %v1366, %v1373
        %v1375 = vmul.f32 %v1374, 1.442695
        %v1376 = vpow.pop %v1375
        %v1377 = vsel %vm943, %v1376, 0.0
        %1378 = vadd.xlane.f32.xlu0 %v1377
        %v1379 = vpop.xlane.xlu0 %1378
        %v1380 = vrcp.pop %v1379
        %v1381 = vmul.f32 %v1376, %v1380
        %v1382 = vmul.f32 %v1381, %v1005
        %v1383 = vpack.c.bf16 %v1382, %v1382
        %v1385 = vunpack.c.l.b16 %v1317
        %v1386 = vpack.c.b16 %v1385, %v1385
        %1387 = vrot.lane.b32.xlu0 %v1386, 104
        %v1388 = vpop.permute.xlu0 %1387
        %v1390 = vsel %vm943, %v1383, 0
        %v1393 = vsel %vm1012, %v1388, 0
        %1395 = vmatprep.subr.bf16.mxu0 0
        %1396 = vmatpush1.bf16.msra.mxu0 %v1393
        %1397 = vmatprep.subr.bf16.mxu0 0
        %1398 = vmatpush1.bf16.msra.mxu0 0
        %1399 = vmatprep.subr.bf16.mxu0 0
        %1400 = vmatpush1.bf16.msra.mxu0 0
        %1401 = vmatprep.subr.bf16.mxu0 0
        %1402 = vmatpush1.bf16.msra.mxu0 0
        %1403 = vmatprep.subr.bf16.mxu0 0
        %1404 = vmatpush1.bf16.msra.mxu0 0
        %1405 = vmatprep.subr.bf16.mxu0 0
        %1406 = vmatpush1.bf16.msra.mxu0 0
        %1407 = vmatprep.subr.bf16.mxu0 0
        %1408 = vmatpush1.bf16.msra.mxu0 0
        %1409 = vmatprep.subr.bf16.mxu0 0
        %1410 = vmatpush1.bf16.msra.mxu0 0
        %1411 = vmatprep.subr.bf16.mxu0 0
        %1412 = vmatpush1.bf16.msra.mxu0 0
        %1413 = vmatprep.subr.bf16.mxu0 0
        %1414 = vmatpush1.bf16.msra.mxu0 0
        %1415 = vmatprep.subr.bf16.mxu0 0
        %1416 = vmatpush1.bf16.msra.mxu0 0
        %1417 = vmatprep.subr.bf16.mxu0 0
        %1418 = vmatpush1.bf16.msra.mxu0 0
        %1419 = vmatprep.subr.bf16.mxu0 0
        %1420 = vmatpush1.bf16.msra.mxu0 0
        %1421 = vmatprep.subr.bf16.mxu0 0
        %1422 = vmatpush1.bf16.msra.mxu0 0
        %1423 = vmatprep.subr.bf16.mxu0 0
        %1424 = vmatpush1.bf16.msra.mxu0 0
        %1425 = vmatprep.subr.bf16.mxu0 0
        %1426 = vmatpush1.bf16.msra.mxu0 0
        %1427 = vmatprep.mubr.bf16.mxu0 0
        %1428 = vmatmul.mubr.bf16.gmra.mrb[0].mxu0 %v1390
        %v1429 = vpop.f32.mrb[0].mxu0
        %v1430 = vadd.f32 0.0, %v1429
        %v1431 = vpop.f32.mrb[0].mxu0
        %v1432 = vpop.f32.mrb[0].mxu0
        %v1433 = vpop.f32.mrb[0].mxu0
        %1434 = vdwg.mxu0
        %v1435 = vpack.c.bf16 %v1430, %v1430
        %v1437 = vunpack.c.l.b16 %v1435
        %v1438 = vpack.c.b16 %v1437, %v1437
        %1439 = vrot.lane.b32.xlu0 %v1438, 24
        %v1440 = vpop.permute.xlu0 %1439
        %vm1442 = vcmask 257216
        %1443 = vst.msk [vmem:[#allocation2] sm:$0xf] %vm1442, %v1440
        %v1444 = vld [vmem:[#allocation2] sm:$0xf]
        %v1445 = vld [vmem:[#allocation15] sm:$0xf]
        %v1446 = vld [vmem:[#allocation15 + $0x4] sm:$0xf]
        %v1447 = vld [vmem:[#allocation15 + $0x8] sm:$0xf]
        %v1448 = vld [vmem:[#allocation15 + $0xc] sm:$0xf]
        %v1449 = vld [vmem:[%s12] sm:$0x1]
        %v1451 = vlaneseq
        %v1452 = vshrl.u32 %v1451, 7
        %v1453 = vsub.s32 0, %v1452
        %v1454 = vrot.slane %v1449, %v1453
        %v1460 = vunpack.c.l.b16 %v1445
        %v1461 = vunpack.c.l.b16 %v1446
        %v1462 = vunpack.c.l.b16 %v1447
        %v1463 = vunpack.c.l.b16 %v1448
        %v1464 = vpack.c.b16 %v1461, %v1460
        %v1465 = vpack.c.b16 %v1463, %v1462
        %v1469 = vsel %vm887, %v1444, 0
        %1471 = vmatprep.subr.bf16.mxu0 0
        %1472 = vmatpush1.bf16.msra.mxu0 %v1464
        %1473 = vmatprep.subr.bf16.mxu0 0
        %1474 = vmatpush1.bf16.msra.mxu0 %v1465
        %1475 = vmatprep.subr.bf16.mxu0 0
        %1476 = vmatpush1.bf16.msra.mxu0 0
        %1477 = vmatprep.subr.bf16.mxu0 0
        %1478 = vmatpush1.bf16.msra.mxu0 0
        %1479 = vmatprep.subr.bf16.mxu0 0
        %1480 = vmatpush1.bf16.msra.mxu0 0
        %1481 = vmatprep.subr.bf16.mxu0 0
        %1482 = vmatpush1.bf16.msra.mxu0 0
        %1483 = vmatprep.subr.bf16.mxu0 0
        %1484 = vmatpush1.bf16.msra.mxu0 0
        %1485 = vmatprep.subr.bf16.mxu0 0
        %1486 = vmatpush1.bf16.msra.mxu0 0
        %1487 = vmatprep.subr.bf16.mxu0 0
        %1488 = vmatpush1.bf16.msra.mxu0 0
        %1489 = vmatprep.subr.bf16.mxu0 0
        %1490 = vmatpush1.bf16.msra.mxu0 0
        %1491 = vmatprep.subr.bf16.mxu0 0
        %1492 = vmatpush1.bf16.msra.mxu0 0
        %1493 = vmatprep.subr.bf16.mxu0 0
        %1494 = vmatpush1.bf16.msra.mxu0 0
        %1495 = vmatprep.subr.bf16.mxu0 0
        %1496 = vmatpush1.bf16.msra.mxu0 0
        %1497 = vmatprep.subr.bf16.mxu0 0
        %1498 = vmatpush1.bf16.msra.mxu0 0
        %1499 = vmatprep.subr.bf16.mxu0 0
        %1500 = vmatpush1.bf16.msra.mxu0 0
        %1501 = vmatprep.subr.bf16.mxu0 0
        %1502 = vmatpush1.bf16.msra.mxu0 0
        %1503 = vmatprep.mubr.bf16.mxu0 0
        %1504 = vmatmul.mubr.bf16.gmra.mrb[0].mxu0 %v1469
        %v1505 = vpop.f32.mrb[0].mxu0
        %v1506 = vadd.f32 %v1454, %v1505
        %v1507 = vpop.f32.mrb[0].mxu0
        %v1508 = vpop.f32.mrb[0].mxu0
        %v1509 = vpop.f32.mrb[0].mxu0
        %1510 = vdwg.mxu0
        %v1511 = vpack.c.bf16 %v1506, %v1506
        %vm1512 = vcmask 257024
        %1513 = vst.msk [vmem:[%s700] sm:$0xf] %vm1512, %v1511
        %s1514 = sand.u32 %s366, 1
        %s1515 = scalar_lea.sflag [#allocation5], %s1514
        %s1516 = sand.u32 %s366, 1
        %s1517 = smul.addr %s1516, 4
        %s1518 = scalar_lea.vmem [#allocation17], %s1517
        %s1519 = sand.u32 %s44, 1
        %s1520 = scalar_lea.sflag [#allocation19], %s1519
        %s1521 = sand.u32 %s392, 1
        %s1522 = smul.addr %s1521, 4
        %s1523 = scalar_lea.vmem [#allocation18], %s1522
        %s1524 = sand.u32 %s44, 1
        %s1525 = scalar_lea.sflag [#allocation19], %s1524
        %s1526 = sand.u32 %s418, 1
        %s1527 = smul.addr %s1526, 4
        %s1528 = scalar_lea.vmem [#allocation20], %s1527
        // Predicated region
        $region109: #{tpu_custom_call.1} parent=71 // pred_check
          %p1529 = pneg %p376
        $region110: #{tpu_custom_call.1} parent=71 // pred_check_branch
          %1531 = sbr.rel (%p1529) target = $region112
        $region111: #{tpu_custom_call.1} parent=71 // pred_region
          %s1533 = ssub.s32 64, 64
          %1534 = vsyncadd %s1515, %s1533
          %s1535 = sadd.s32 %s49, %s48
          %s1536 = smul.addr %s1535, 64
          %s1537 = scalar_lea.hbm %s13, %s1536
          %s1539 = sshll.u32 %s1518, 4
          %s1540 = int_to_ptr.vmem [resolvable:$true] %s1539
          %1542 = dma.vmem_to_hbm [thread:$0]  %s1540, 64, %s1537, %s1515
        $region112: #{tpu_custom_call.1} parent=71 // pred_fallthru
          _
        // Predicated region
        $region113: #{tpu_custom_call.1} parent=71 // pred_check
          %p1543 = pneg %p402
        $region114: #{tpu_custom_call.1} parent=71 // pred_check_branch
          %1545 = sbr.rel (%p1543) target = $region116
        $region115: #{tpu_custom_call.1} parent=71 // pred_region
          %s1547 = ssub.s32 64, 64
          %1548 = vsyncadd %s1520, %s1547
          %s1549 = smul.addr %s48, 64
          %s1550 = scalar_lea.hbm %s14, %s1549
          %s1552 = sshll.u32 %s1523, 4
          %s1553 = int_to_ptr.vmem [resolvable:$true] %s1552
          %1555 = dma.vmem_to_hbm [thread:$0]  %s1553, 64, %s1550, %s1520
        $region116: #{tpu_custom_call.1} parent=71 // pred_fallthru
          _
        // Predicated region
        $region117: #{tpu_custom_call.1} parent=71 // pred_check
          %p1556 = pneg %p428
        $region118: #{tpu_custom_call.1} parent=71 // pred_check_branch
          %1558 = sbr.rel (%p1556) target = $region120
        $region119: #{tpu_custom_call.1} parent=71 // pred_region
          %s1560 = ssub.s32 64, 64
          %1561 = vsyncadd %s1525, %s1560
          %s1562 = smul.addr %s48, 64
          %s1563 = scalar_lea.hbm %s15, %s1562
          %s1565 = sshll.u32 %s1528, 4
          %s1566 = int_to_ptr.vmem [resolvable:$true] %s1565
          %1568 = dma.vmem_to_hbm [thread:$0]  %s1566, 64, %s1563, %s1525
        $region120: #{tpu_custom_call.1} parent=71 // pred_fallthru
          _
      $region72: #{tpu_custom_call.1} parent=5 // pred_fallthru
        _
      %p1569 = scmp.le.s32.totalorder 2, %s39
      // Predicated region
      $region121: #{tpu_custom_call.1} parent=5 // pred_check
        %p1570 = pneg %p1569
      $region122: #{tpu_custom_call.1} parent=5 // pred_check_branch
        %1572 = sbr.rel (%p1570) target = $region124
      $region123: #{tpu_custom_call.1} parent=5 // pred_region
        %s1573 = ssub.s32 %s39, 2
        // Predicated region
        $region125: #{tpu_custom_call.1} parent=123 // pred_check
          %p1574 = pneg %p382
        $region126: #{tpu_custom_call.1} parent=123 // pred_check_branch
          %1576 = sbr.rel (%p1574) target = $region128
        $region127: #{tpu_custom_call.1} parent=123 // pred_region
          %s1577 = sand.u32 %s367, 1
          %s1578 = scalar_lea.sflag [#allocation5], %s1577
          %s1579 = sand.u32 %s367, 1
          %s1580 = smul.addr %s1579, 4
          %s1581 = scalar_lea.vmem [#allocation17], %s1580
          %1582 = dma.done %s1578, 64
        $region128: #{tpu_custom_call.1} parent=123 // pred_fallthru
          _
        // Predicated region
        $region129: #{tpu_custom_call.1} parent=123 // pred_check
          %p1583 = pneg %p408
        $region130: #{tpu_custom_call.1} parent=123 // pred_check_branch
          %1585 = sbr.rel (%p1583) target = $region132
        $region131: #{tpu_custom_call.1} parent=123 // pred_region
          %s1586 = sand.u32 %s45, 1
          %s1587 = scalar_lea.sflag [#allocation19], %s1586
          %s1588 = sand.u32 %s393, 1
          %s1589 = smul.addr %s1588, 4
          %s1590 = scalar_lea.vmem [#allocation18], %s1589
          %1591 = dma.done %s1587, 64
        $region132: #{tpu_custom_call.1} parent=123 // pred_fallthru
          _
        // Predicated region
        $region133: #{tpu_custom_call.1} parent=123 // pred_check
          %p1592 = pneg %p434
        $region134: #{tpu_custom_call.1} parent=123 // pred_check_branch
          %1594 = sbr.rel (%p1592) target = $region136
        $region135: #{tpu_custom_call.1} parent=123 // pred_region
          %s1595 = sand.u32 %s45, 1
          %s1596 = scalar_lea.sflag [#allocation19], %s1595
          %s1597 = sand.u32 %s419, 1
          %s1598 = smul.addr %s1597, 4
          %s1599 = scalar_lea.vmem [#allocation20], %s1598
          %1600 = dma.done %s1596, 64
        $region136: #{tpu_custom_call.1} parent=123 // pred_fallthru
          _
      $region124: #{tpu_custom_call.1} parent=5 // pred_fallthru
        _
    $region6: #{tpu_custom_call.1} parent=1 // loop_footer
      %s43 = sadd.s32 1, %s39
    $region7: #{tpu_custom_call.1} parent=1 // loop_footer_branch
      %38 = sbr.rel target = $region3
    $region8: #{tpu_custom_call.1} parent=1 // loop_exit
      _
    %1601 = vsyncpa [#allocation4], 1
    %s1602 = scalar_lea.sflag [#allocation4], 1
    %1603 = vsyncpa %s1602, 1
    %1604 = vsyncpa [#allocation7], 1
    %s1605 = scalar_lea.sflag [#allocation7], 1
    %1606 = vsyncpa %s1605, 1
    %1607 = vsyncpa [#allocation10], 1
    %s1608 = scalar_lea.sflag [#allocation10], 1
    %1609 = vsyncpa %s1608, 1
    %1610 = vsyncpa [#allocation13], 1
    %1611 = vsyncpa [#allocation16], 1
    %1612 = vsyncpa [#allocation5], 1
    %s1613 = scalar_lea.sflag [#allocation5], 1
    %1614 = vsyncpa %s1613, 1
    %1615 = vsyncpa [#allocation19], 1
    %s1616 = scalar_lea.sflag [#allocation19], 1
    %1617 = vsyncpa %s1616, 1

</llo_original>
